<compile_context>
chip_gen: v7x
topology: tpu7x:2x2x1
jax: 0.10.0
libtpu: 0.0.40
codegen_flags: <defaults>
</compile_context>

<pallas_src>
import functools
import math

import jax
import jax.numpy as jnp
from jax import lax
from jax.experimental import pallas as pl
from jax.experimental.pallas import tpu as pltpu


def _decoder_layer_kernel(num_heads,
                          xq_ref, xkv_ref, enc_ref,
                          wq1, bq1, wkv1, bkv1, wo1, bo1,
                          wq2, bq2, wkv2, bkv2, wo2, bo2,
                          w1, b1, w2, b2,
                          g1, be1, g2, be2, g3, be3,
                          out_ref, sa_w_ref, ca_w_ref,
                          kv1_sc, kv2_sc):
    H = num_heads
    D = xq_ref.shape[-1]
    dk = D // H

    # --- K/V projections over the full self / encoder sequences depend only on the batch
    # block: compute them once per batch (query-tile axis is "arbitrary") and cache the
    # biased bf16 result in VMEM scratch; every query tile reuses it.
    @pl.when(pl.program_id(1) == 0)
    def _():
        kv1 = jnp.dot(xkv_ref[0], wkv1[...],
                      preferred_element_type=jnp.float32) + bkv1[...]   # (S, 2D) f32
        kv1_sc[...] = kv1.astype(jnp.bfloat16)
        kv2 = jnp.dot(enc_ref[0], wkv2[...],
                      preferred_element_type=jnp.float32) + bkv2[...]   # (Se, 2D) f32
        kv2_sc[...] = kv2.astype(jnp.bfloat16)

    xq = xq_ref[0]                                # (TQ, D) f32 residual / query path

    def layer_norm(v, g_r, b_r, eps=1e-5):
        mean = jnp.mean(v, axis=-1, keepdims=True)
        c = v - mean
        var = jnp.mean(c * c, axis=-1, keepdims=True)
        return c * lax.rsqrt(var + eps) * g_r[...] + b_r[...]

    def mha(q_rows, wq, bq, kv_sc, wo, bo, w_ref):
        # Dense Q projection: one full-width matmul; wq/bq pre-scaled by 1/sqrt(d_k).
        q = (jnp.dot(q_rows.astype(jnp.bfloat16), wq[...],
                     preferred_element_type=jnp.float32) + bq[...]).astype(jnp.bfloat16)
        kv = kv_sc[...]                           # (Skv, 2D) bf16 cached [K | V]

        # Per-head QK^T (the MXU has no batch dim, so this is the same MXU work as a
        # batched einsum, but with no broadcast of activations). Head h lives in lanes
        # [h*dk, (h+1)*dk) of the dense projections.
        scores = jnp.stack(
            [jnp.einsum("qd,kd->qk",
                        q[:, h * dk:(h + 1) * dk],
                        kv[:, h * dk:(h + 1) * dk],
                        preferred_element_type=jnp.float32)
             for h in range(H)], axis=0)          # (H, TQ, Skv) f32

        # Softmax in f32; reciprocal on the EUP.
        m = jnp.max(scores, axis=-1, keepdims=True)
        p = jnp.exp(scores - m)
        attn = p * pl.reciprocal(jnp.sum(p, axis=-1, keepdims=True), approx=True)
        w_ref[0] = attn.astype(w_ref.dtype)       # all heads, one bf16 store
        attn_b = attn.astype(jnp.bfloat16)

        # attn @ V and combine_heads + Wo:  concat_h(ctx_h) @ Wo == sum_h ctx_h @ Wo[h]
        # (each Wo matmul has N = D, so the MXU lanes stay full).
        out = bo[...]
        for h in range(H):
            ctx_h = jnp.dot(attn_b[h], kv[:, D + h * dk: D + (h + 1) * dk],
                            preferred_element_type=jnp.float32)        # (TQ, dk)
            out = out + jnp.dot(ctx_h.astype(jnp.bfloat16), wo[h],
                                preferred_element_type=jnp.float32)    # (TQ, D)
        return out

    # self-attention + residual + norm1  (dropout = identity)
    sa = mha(xq, wq1, bq1, kv1_sc, wo1, bo1, sa_w_ref)
    x1 = layer_norm(xq + sa, g1, be1)

    # cross-attention + residual + norm2
    ca = mha(x1, wq2, bq2, kv2_sc, wo2, bo2, ca_w_ref)
    x2 = layer_norm(x1 + ca, g2, be2)

    # position-wise feed-forward + residual + norm3 (bf16 MXU operands, f32 accumulation)
    hidden = jnp.maximum(
        jnp.dot(x2.astype(jnp.bfloat16), w1[...],
                preferred_element_type=jnp.float32) + b1[...], 0.0)
    ff = jnp.dot(hidden.astype(jnp.bfloat16), w2[...],
                 preferred_element_type=jnp.float32) + b2[...]
    x3 = layer_norm(x2 + ff, g3, be3)

    out_ref[0] = x3.astype(out_ref.dtype)


_WEIGHT_KEYS = ["wq1", "bq1", "wkv1", "bkv1", "wo1", "bo1",
                "wq2", "bq2", "wkv2", "bkv2", "wo2", "bo2",
                "w1", "b1", "w2", "b2",
                "g1", "be1", "g2", "be2", "g3", "be3"]


def prepare_params(p, num_heads):
    """One-time re-layout of the PyTorch-style params for the kernel.

    Wq -> dense (D, D) bf16 pre-scaled by 1/sqrt(d_k) (bias scaled too, f32);
    Wk|Wv -> single fused (D, 2D) bf16 weight; Wo -> (H, d_k, D) bf16;
    FFN weights bf16; all biases and LayerNorm params stay f32.
    """
    D = p["wq1"].shape[0]
    dk = D // num_heads
    scale = 1.0 / math.sqrt(dk)

    out = {}
    for tag in ("1", "2"):
        out["wq" + tag] = (p["wq" + tag] * scale).astype(jnp.bfloat16)
        out["bq" + tag] = p["bq" + tag] * scale
        out["wkv" + tag] = jnp.concatenate(
            [p["wk" + tag], p["wv" + tag]], axis=1).astype(jnp.bfloat16)   # (D, 2D)
        out["bkv" + tag] = jnp.concatenate(
            [p["bk" + tag], p["bv" + tag]], axis=1)                        # (1, 2D)
        out["wo" + tag] = p["wo" + tag].reshape(num_heads, dk, D).astype(jnp.bfloat16)
        out["bo" + tag] = p["bo" + tag]
    out["w1"] = p["w1"].astype(jnp.bfloat16)
    out["b1"] = p["b1"]
    out["w2"] = p["w2"].astype(jnp.bfloat16)
    out["b2"] = p["b2"]
    for n in (1, 2, 3):
        out[f"g{n}"] = p[f"g{n}"]
        out[f"be{n}"] = p[f"be{n}"]
    return out


def decoder_layer(x, enc_output, prepared, num_heads, q_tile=256):
    B, S, D = x.shape
    Se = enc_output.shape[1]
    H = num_heads
    tq = min(q_tile, S)
    assert S % tq == 0, "seq length must be divisible by the query tile"
    nq = S // tq

    # K/V source activations go in as bf16 (the kernel only feeds them to the MXU);
    # the residual/query stream stays f32.
    x_kv = x.astype(jnp.bfloat16)
    enc_kv = enc_output.astype(jnp.bfloat16)
    weight_args = [prepared[k] for k in _WEIGHT_KEYS]

    def full_spec(a):  # grid-invariant weight block (whole array)
        return pl.BlockSpec(a.shape, lambda b, i, n=a.ndim: (0,) * n)

    in_specs = ([pl.BlockSpec((1, tq, D), lambda b, i: (b, i, 0)),   # query-tile of x (f32)
                 pl.BlockSpec((1, S, D), lambda b, i: (b, 0, 0)),    # full x, bf16 (self K/V)
                 pl.BlockSpec((1, Se, D), lambda b, i: (b, 0, 0))]   # full enc, bf16 (cross K/V)
                + [full_spec(a) for a in weight_args])

    out_shape = (
        jax.ShapeDtypeStruct((B, S, D), x.dtype),
        jax.ShapeDtypeStruct((B, H, S, S), jnp.bfloat16),
        jax.ShapeDtypeStruct((B, H, S, Se), jnp.bfloat16),
    )
    out_specs = (
        pl.BlockSpec((1, tq, D), lambda b, i: (b, i, 0)),
        pl.BlockSpec((1, H, tq, S), lambda b, i: (b, 0, i, 0)),
        pl.BlockSpec((1, H, tq, Se), lambda b, i: (b, 0, i, 0)),
    )

    kernel = functools.partial(_decoder_layer_kernel, num_heads)
    return pl.pallas_call(
        kernel,
        out_shape=out_shape,
        grid_spec=pltpu.PrefetchScalarGridSpec(
            num_scalar_prefetch=0,
            grid=(B, nq),
            in_specs=in_specs,
            out_specs=out_specs,
            scratch_shapes=[pltpu.VMEM((S, 2 * D), jnp.bfloat16),    # cached self K|V
                            pltpu.VMEM((Se, 2 * D), jnp.bfloat16)],  # cached cross K|V
        ),
        compiler_params=pltpu.CompilerParams(
            # batch axis parallel (v7x megacore); query-tile axis must be arbitrary so the
            # per-batch K/V cache is written (i == 0) before it is read.
            dimension_semantics=("parallel", "arbitrary"),
            vmem_limit_bytes=48 * 1024 * 1024,
        ),
    )(x, x_kv, enc_kv, *weight_args)


def make_params(key, d_model, d_ff):
    """Deterministic synthetic parameters, PyTorch layout: Linear weights stored as (in, out)."""
    ks = jax.random.split(key, 20)
    i = 0

    def w(shape):
        nonlocal i
        out = 0.05 * jax.random.normal(ks[i], shape, dtype=jnp.float32)
        i += 1
        return out

    p = {}
    for tag in ("1", "2"):  # self-attn, cross-attn
        for name in ("wq", "wk", "wv", "wo"):
            p[name + tag] = w((d_model, d_model))
            p["b" + name[1] + tag] = w((1, d_model))
    p["w1"], p["b1"] = w((d_model, d_ff)), w((1, d_ff))
    p["w2"], p["b2"] = w((d_ff, d_model)), w((1, d_model))
    for n in range(1, 4):  # LayerNorm: default init weight=1, bias=0
        p[f"g{n}"] = jnp.ones((1, d_model), jnp.float32)
        p[f"be{n}"] = jnp.zeros((1, d_model), jnp.float32)
    return p


def decoder_layer_ref(x, enc, p, H):
    """Pure-JAX f32 reference mirroring the PyTorch module (dropout = identity)."""
    def ln(v, g, b, eps=1e-5):
        m = jnp.mean(v, -1, keepdims=True)
        var = jnp.mean((v - m) ** 2, -1, keepdims=True)
        return (v - m) / jnp.sqrt(var + eps) * g + b

    def mha(qi, kv, wq, bq, wk, bk, wv, bv, wo, bo):
        B, S, D = qi.shape
        Sk = kv.shape[1]
        dk = D // H
        q = (qi @ wq + bq).reshape(B, S, H, dk).transpose(0, 2, 1, 3)
        k = (kv @ wk + bk).reshape(B, Sk, H, dk).transpose(0, 2, 1, 3)
        v = (kv @ wv + bv).reshape(B, Sk, H, dk).transpose(0, 2, 1, 3)
        scores = jnp.einsum("bhqd,bhkd->bhqk", q, k) / math.sqrt(dk)
        attn = jax.nn.softmax(scores, axis=-1)
        o = jnp.einsum("bhqk,bhkd->bhqd", attn, v)
        o = o.transpose(0, 2, 1, 3).reshape(B, S, D)
        return o @ wo + bo, attn

    sa, saw = mha(x, x, p["wq1"], p["bq1"], p["wk1"], p["bk1"],
                  p["wv1"], p["bv1"], p["wo1"], p["bo1"])
    x1 = ln(x + sa, p["g1"], p["be1"])
    ca, caw = mha(x1, enc, p["wq2"], p["bq2"], p["wk2"], p["bk2"],
                  p["wv2"], p["bv2"], p["wo2"], p["bo2"])
    x2 = ln(x1 + ca, p["g2"], p["be2"])
    ff = jnp.maximum(x2 @ p["w1"] + p["b1"], 0.0) @ p["w2"] + p["b2"]
    x3 = ln(x2 + ff, p["g3"], p["be3"])
    return x3, saw, caw


if __name__ == "__main__":
    B, S_dec, S_enc, D, H, DFF = 2, 8, 8, 32, 4, 64

    key = jax.random.PRNGKey(0)
    kx, kenc, kp = jax.random.split(key, 3)
    x = jax.random.normal(kx, (B, S_dec, D), dtype=jnp.float32)
    enc_out = jax.random.normal(kenc, (B, S_enc, D), dtype=jnp.float32)
    params = make_params(kp, D, DFF)
    prepared = prepare_params(params, H)    # one-time weight re-layout (bf16, fused KV, per-head Wo)

    out, self_w, cross_w = decoder_layer(x, enc_out, prepared, H)
    jax.block_until_ready((out, self_w, cross_w))

    ref_out, ref_sw, ref_cw = decoder_layer_ref(x, enc_out, params, H)
    assert out.shape == (B, S_dec, D)
    assert self_w.shape == (B, H, S_dec, S_dec)
    assert cross_w.shape == (B, H, S_dec, S_enc)
    # bf16 MXU operands / bf16 K-V source / bf16 prob outputs / approx reciprocal => looser tol.
    assert jnp.allclose(out, ref_out, rtol=3e-2, atol=3e-2), \
        float(jnp.max(jnp.abs(out - ref_out)))
    assert jnp.allclose(self_w.astype(jnp.float32), ref_sw, rtol=2e-2, atol=1e-2), \
        float(jnp.max(jnp.abs(self_w.astype(jnp.float32) - ref_sw)))
    assert jnp.allclose(cross_w.astype(jnp.float32), ref_cw, rtol=2e-2, atol=1e-2), \
        float(jnp.max(jnp.abs(cross_w.astype(jnp.float32) - ref_cw)))

    print("KERNEL_OK")
</pallas_src>

<mosaic_0001>
module attributes {stable_mosaic.version = 11 : i64} {
  func.func @_decoder_layer_kernel(%arg0: i32, %arg1: i32, %arg2: memref<1x8x32xf32, #tpu.memory_space<vmem>>, %arg3: memref<1x8x32xbf16, #tpu.memory_space<vmem>>, %arg4: memref<1x8x32xbf16, #tpu.memory_space<vmem>>, %arg5: memref<32x32xbf16, #tpu.memory_space<vmem>>, %arg6: memref<1x32xf32, #tpu.memory_space<vmem>>, %arg7: memref<32x64xbf16, #tpu.memory_space<vmem>>, %arg8: memref<1x64xf32, #tpu.memory_space<vmem>>, %arg9: memref<4x8x32xbf16, #tpu.memory_space<vmem>>, %arg10: memref<1x32xf32, #tpu.memory_space<vmem>>, %arg11: memref<32x32xbf16, #tpu.memory_space<vmem>>, %arg12: memref<1x32xf32, #tpu.memory_space<vmem>>, %arg13: memref<32x64xbf16, #tpu.memory_space<vmem>>, %arg14: memref<1x64xf32, #tpu.memory_space<vmem>>, %arg15: memref<4x8x32xbf16, #tpu.memory_space<vmem>>, %arg16: memref<1x32xf32, #tpu.memory_space<vmem>>, %arg17: memref<32x64xbf16, #tpu.memory_space<vmem>>, %arg18: memref<1x64xf32, #tpu.memory_space<vmem>>, %arg19: memref<64x32xbf16, #tpu.memory_space<vmem>>, %arg20: memref<1x32xf32, #tpu.memory_space<vmem>>, %arg21: memref<1x32xf32, #tpu.memory_space<vmem>>, %arg22: memref<1x32xf32, #tpu.memory_space<vmem>>, %arg23: memref<1x32xf32, #tpu.memory_space<vmem>>, %arg24: memref<1x32xf32, #tpu.memory_space<vmem>>, %arg25: memref<1x32xf32, #tpu.memory_space<vmem>>, %arg26: memref<1x32xf32, #tpu.memory_space<vmem>>, %arg27: memref<1x8x32xf32, #tpu.memory_space<vmem>>, %arg28: memref<1x4x8x8xbf16, #tpu.memory_space<vmem>>, %arg29: memref<1x4x8x8xbf16, #tpu.memory_space<vmem>>, %arg30: memref<8x64xbf16, #tpu.memory_space<vmem>>, %arg31: memref<8x64xbf16, #tpu.memory_space<vmem>>) attributes {dimension_semantics = [#tpu.dimension_semantics<parallel>, #tpu.dimension_semantics<arbitrary>], iteration_bounds = array<i64: 2, 1>, scalar_prefetch = 0 : i64, scratch_operands = 2 : i64, tpu.core_type = #tpu.core_type<tc>, window_params = [{transform_indices = @transform_0, window_bounds = array<i64: 1, 8, 32>}, {transform_indices = @transform_1, window_bounds = array<i64: 1, 8, 32>}, {transform_indices = @transform_2, window_bounds = array<i64: 1, 8, 32>}, {pipeline_mode = #tpu.pipeline_mode<synchronous>, transform_indices = @transform_3, window_bounds = array<i64: 32, 32>}, {pipeline_mode = #tpu.pipeline_mode<synchronous>, transform_indices = @transform_4, window_bounds = array<i64: 1, 32>}, {pipeline_mode = #tpu.pipeline_mode<synchronous>, transform_indices = @transform_5, window_bounds = array<i64: 32, 64>}, {pipeline_mode = #tpu.pipeline_mode<synchronous>, transform_indices = @transform_6, window_bounds = array<i64: 1, 64>}, {pipeline_mode = #tpu.pipeline_mode<synchronous>, transform_indices = @transform_7, window_bounds = array<i64: 4, 8, 32>}, {pipeline_mode = #tpu.pipeline_mode<synchronous>, transform_indices = @transform_8, window_bounds = array<i64: 1, 32>}, {pipeline_mode = #tpu.pipeline_mode<synchronous>, transform_indices = @transform_9, window_bounds = array<i64: 32, 32>}, {pipeline_mode = #tpu.pipeline_mode<synchronous>, transform_indices = @transform_10, window_bounds = array<i64: 1, 32>}, {pipeline_mode = #tpu.pipeline_mode<synchronous>, transform_indices = @transform_11, window_bounds = array<i64: 32, 64>}, {pipeline_mode = #tpu.pipeline_mode<synchronous>, transform_indices = @transform_12, window_bounds = array<i64: 1, 64>}, {pipeline_mode = #tpu.pipeline_mode<synchronous>, transform_indices = @transform_13, window_bounds = array<i64: 4, 8, 32>}, {pipeline_mode = #tpu.pipeline_mode<synchronous>, transform_indices = @transform_14, window_bounds = array<i64: 1, 32>}, {pipeline_mode = #tpu.pipeline_mode<synchronous>, transform_indices = @transform_15, window_bounds = array<i64: 32, 64>}, {pipeline_mode = #tpu.pipeline_mode<synchronous>, transform_indices = @transform_16, window_bounds = array<i64: 1, 64>}, {pipeline_mode = #tpu.pipeline_mode<synchronous>, transform_indices = @transform_17, window_bounds = array<i64: 64, 32>}, {pipeline_mode = #tpu.pipeline_mode<synchronous>, transform_indices = @transform_18, window_bounds = array<i64: 1, 32>}, {pipeline_mode = #tpu.pipeline_mode<synchronous>, transform_indices = @transform_19, window_bounds = array<i64: 1, 32>}, {pipeline_mode = #tpu.pipeline_mode<synchronous>, transform_indices = @transform_20, window_bounds = array<i64: 1, 32>}, {pipeline_mode = #tpu.pipeline_mode<synchronous>, transform_indices = @transform_21, window_bounds = array<i64: 1, 32>}, {pipeline_mode = #tpu.pipeline_mode<synchronous>, transform_indices = @transform_22, window_bounds = array<i64: 1, 32>}, {pipeline_mode = #tpu.pipeline_mode<synchronous>, transform_indices = @transform_23, window_bounds = array<i64: 1, 32>}, {pipeline_mode = #tpu.pipeline_mode<synchronous>, transform_indices = @transform_24, window_bounds = array<i64: 1, 32>}, {transform_indices = @transform_25, window_bounds = array<i64: 1, 8, 32>}, {transform_indices = @transform_26, window_bounds = array<i64: 1, 4, 8, 8>}, {transform_indices = @transform_27, window_bounds = array<i64: 1, 4, 8, 8>}]} {
    %c0_i32 = arith.constant 0 : i32
    %0 = arith.cmpi eq, %arg1, %c0_i32 : i32
    %1 = arith.extui %0 : i1 to i32
    %c0_i32_0 = arith.constant 0 : i32
    %2 = arith.cmpi ne, %1, %c0_i32_0 : i32
    scf.if %2 {
      %c0_118 = arith.constant 0 : index
      %c0_119 = arith.constant 0 : index
      %c0_120 = arith.constant 0 : index
      %247 = vector.load %arg3[%c0_118, %c0_119, %c0_120] : memref<1x8x32xbf16, #tpu.memory_space<vmem>>, vector<1x8x32xbf16>
      %248 = vector.shape_cast %247 : vector<1x8x32xbf16> to vector<8x32xbf16>
      %c0_121 = arith.constant 0 : index
      %c0_122 = arith.constant 0 : index
      %249 = vector.load %arg7[%c0_121, %c0_122] : memref<32x64xbf16, #tpu.memory_space<vmem>>, vector<32x64xbf16>
      %cst_123 = arith.constant dense<0.000000e+00> : vector<8x64xf32>
      %250 = tpu.matmul %248, %249, %cst_123 {dimension_numbers = #tpu.dot_dimension_numbers<[1], [0], [0], [1], [0, 0, 1, 1], [], []>} : vector<8x32xbf16>, vector<32x64xbf16>, vector<8x64xf32> -> vector<8x64xf32>
      %c0_124 = arith.constant 0 : index
      %c0_125 = arith.constant 0 : index
      %251 = vector.load %arg8[%c0_124, %c0_125] : memref<1x64xf32, #tpu.memory_space<vmem>>, vector<1x64xf32>
      %252 = vector.broadcast %251 : vector<1x64xf32> to vector<8x64xf32>
      %253 = arith.addf %250, %252 : vector<8x64xf32>
      %254 = arith.truncf %253 : vector<8x64xf32> to vector<8x64xbf16>
      %c0_126 = arith.constant 0 : index
      %c0_127 = arith.constant 0 : index
      %255 = vector.load %arg30[%c0_126, %c0_127] : memref<8x64xbf16, #tpu.memory_space<vmem>>, vector<8x64xbf16>
      tpu.vector_store %arg30[%c0_126, %c0_127], %254 {strides = array<i32>} : memref<8x64xbf16, #tpu.memory_space<vmem>>, vector<8x64xbf16>,
      %c0_128 = arith.constant 0 : index
      %c0_129 = arith.constant 0 : index
      %c0_130 = arith.constant 0 : index
      %256 = vector.load %arg4[%c0_128, %c0_129, %c0_130] : memref<1x8x32xbf16, #tpu.memory_space<vmem>>, vector<1x8x32xbf16>
      %257 = vector.shape_cast %256 : vector<1x8x32xbf16> to vector<8x32xbf16>
      %c0_131 = arith.constant 0 : index
      %c0_132 = arith.constant 0 : index
      %258 = vector.load %arg13[%c0_131, %c0_132] : memref<32x64xbf16, #tpu.memory_space<vmem>>, vector<32x64xbf16>
      %cst_133 = arith.constant dense<0.000000e+00> : vector<8x64xf32>
      %259 = tpu.matmul %257, %258, %cst_133 {dimension_numbers = #tpu.dot_dimension_numbers<[1], [0], [0], [1], [0, 0, 1, 1], [], []>} : vector<8x32xbf16>, vector<32x64xbf16>, vector<8x64xf32> -> vector<8x64xf32>
      %c0_134 = arith.constant 0 : index
      %c0_135 = arith.constant 0 : index
      %260 = vector.load %arg14[%c0_134, %c0_135] : memref<1x64xf32, #tpu.memory_space<vmem>>, vector<1x64xf32>
      %261 = vector.broadcast %260 : vector<1x64xf32> to vector<8x64xf32>
      %262 = arith.addf %259, %261 : vector<8x64xf32>
      %263 = arith.truncf %262 : vector<8x64xf32> to vector<8x64xbf16>
      %c0_136 = arith.constant 0 : index
      %c0_137 = arith.constant 0 : index
      %264 = vector.load %arg31[%c0_136, %c0_137] : memref<8x64xbf16, #tpu.memory_space<vmem>>, vector<8x64xbf16>
      tpu.vector_store %arg31[%c0_136, %c0_137], %263 {strides = array<i32>} : memref<8x64xbf16, #tpu.memory_space<vmem>>, vector<8x64xbf16>,
    } else {
    }
    %c0 = arith.constant 0 : index
    %c0_1 = arith.constant 0 : index
    %c0_2 = arith.constant 0 : index
    %3 = vector.load %arg2[%c0, %c0_1, %c0_2] : memref<1x8x32xf32, #tpu.memory_space<vmem>>, vector<1x8x32xf32>
    %4 = vector.shape_cast %3 : vector<1x8x32xf32> to vector<8x32xf32>
    %5 = arith.truncf %4 : vector<8x32xf32> to vector<8x32xbf16>
    %c0_3 = arith.constant 0 : index
    %c0_4 = arith.constant 0 : index
    %6 = vector.load %arg5[%c0_3, %c0_4] : memref<32x32xbf16, #tpu.memory_space<vmem>>, vector<32x32xbf16>
    %cst = arith.constant dense<0.000000e+00> : vector<8x32xf32>
    %7 = tpu.matmul %5, %6, %cst {dimension_numbers = #tpu.dot_dimension_numbers<[1], [0], [0], [1], [0, 0, 1, 1], [], []>} : vector<8x32xbf16>, vector<32x32xbf16>, vector<8x32xf32> -> vector<8x32xf32>
    %c0_5 = arith.constant 0 : index
    %c0_6 = arith.constant 0 : index
    %8 = vector.load %arg6[%c0_5, %c0_6] : memref<1x32xf32, #tpu.memory_space<vmem>>, vector<1x32xf32>
    %9 = vector.broadcast %8 : vector<1x32xf32> to vector<8x32xf32>
    %10 = arith.addf %7, %9 : vector<8x32xf32>
    %11 = arith.truncf %10 : vector<8x32xf32> to vector<8x32xbf16>
    %c0_7 = arith.constant 0 : index
    %c0_8 = arith.constant 0 : index
    %12 = vector.load %arg30[%c0_7, %c0_8] : memref<8x64xbf16, #tpu.memory_space<vmem>>, vector<8x64xbf16>
    %13 = vector.extract_strided_slice %11 {offsets = [0, 0], sizes = [8, 8], strides = [1, 1]} : vector<8x32xbf16> to vector<8x8xbf16>
    %14 = vector.extract_strided_slice %12 {offsets = [0, 0], sizes = [8, 8], strides = [1, 1]} : vector<8x64xbf16> to vector<8x8xbf16>
    "tpu.trace_start"() <{level = 10 : i32, message = "qd,kd->qk"}> : () -> ()
    %cst_9 = arith.constant dense<0.000000e+00> : vector<8x8xf32>
    %15 = tpu.matmul %13, %14, %cst_9 {dimension_numbers = #tpu.dot_dimension_numbers<[1], [1], [0], [0], [0, 0, 1, 0], [], []>} : vector<8x8xbf16>, vector<8x8xbf16>, vector<8x8xf32> -> vector<8x8xf32>
    "tpu.trace_stop"() : () -> ()
    %16 = vector.extract_strided_slice %11 {offsets = [0, 8], sizes = [8, 8], strides = [1, 1]} : vector<8x32xbf16> to vector<8x8xbf16>
    %17 = vector.extract_strided_slice %12 {offsets = [0, 8], sizes = [8, 8], strides = [1, 1]} : vector<8x64xbf16> to vector<8x8xbf16>
    "tpu.trace_start"() <{level = 10 : i32, message = "qd,kd->qk"}> : () -> ()
    %cst_10 = arith.constant dense<0.000000e+00> : vector<8x8xf32>
    %18 = tpu.matmul %16, %17, %cst_10 {dimension_numbers = #tpu.dot_dimension_numbers<[1], [1], [0], [0], [0, 0, 1, 0], [], []>} : vector<8x8xbf16>, vector<8x8xbf16>, vector<8x8xf32> -> vector<8x8xf32>
    "tpu.trace_stop"() : () -> ()
    %19 = vector.extract_strided_slice %11 {offsets = [0, 16], sizes = [8, 8], strides = [1, 1]} : vector<8x32xbf16> to vector<8x8xbf16>
    %20 = vector.extract_strided_slice %12 {offsets = [0, 16], sizes = [8, 8], strides = [1, 1]} : vector<8x64xbf16> to vector<8x8xbf16>
    "tpu.trace_start"() <{level = 10 : i32, message = "qd,kd->qk"}> : () -> ()
    %cst_11 = arith.constant dense<0.000000e+00> : vector<8x8xf32>
    %21 = tpu.matmul %19, %20, %cst_11 {dimension_numbers = #tpu.dot_dimension_numbers<[1], [1], [0], [0], [0, 0, 1, 0], [], []>} : vector<8x8xbf16>, vector<8x8xbf16>, vector<8x8xf32> -> vector<8x8xf32>
    "tpu.trace_stop"() : () -> ()
    %22 = vector.extract_strided_slice %11 {offsets = [0, 24], sizes = [8, 8], strides = [1, 1]} : vector<8x32xbf16> to vector<8x8xbf16>
    %23 = vector.extract_strided_slice %12 {offsets = [0, 24], sizes = [8, 8], strides = [1, 1]} : vector<8x64xbf16> to vector<8x8xbf16>
    "tpu.trace_start"() <{level = 10 : i32, message = "qd,kd->qk"}> : () -> ()
    %cst_12 = arith.constant dense<0.000000e+00> : vector<8x8xf32>
    %24 = tpu.matmul %22, %23, %cst_12 {dimension_numbers = #tpu.dot_dimension_numbers<[1], [1], [0], [0], [0, 0, 1, 0], [], []>} : vector<8x8xbf16>, vector<8x8xbf16>, vector<8x8xf32> -> vector<8x8xf32>
    "tpu.trace_stop"() : () -> ()
    %25 = vector.shape_cast %15 : vector<8x8xf32> to vector<1x8x8xf32>
    %26 = vector.shape_cast %18 : vector<8x8xf32> to vector<1x8x8xf32>
    %27 = vector.shape_cast %21 : vector<8x8xf32> to vector<1x8x8xf32>
    %28 = vector.shape_cast %24 : vector<8x8xf32> to vector<1x8x8xf32>
    %29 = tpu.concatenate %25, %26, %27, %28 in 0 : vector<1x8x8xf32>, vector<1x8x8xf32>, vector<1x8x8xf32>, vector<1x8x8xf32> -> vector<4x8x8xf32>
    %cst_13 = arith.constant dense<0xFF800000> : vector<4x8xf32>
    %30 = vector.multi_reduction <maximumf>, %29, %cst_13 [2] : vector<4x8x8xf32> to vector<4x8xf32>
    %31 = vector.shape_cast %30 : vector<4x8xf32> to vector<4x8x1xf32>
    %32 = vector.broadcast %31 : vector<4x8x1xf32> to vector<4x8x8xf32>
    %33 = arith.subf %29, %32 : vector<4x8x8xf32>
    %34 = math.exp %33 : vector<4x8x8xf32>
    %cst_14 = arith.constant dense<0.000000e+00> : vector<4x8xf32>
    %35 = vector.multi_reduction <add>, %34, %cst_14 [2] : vector<4x8x8xf32> to vector<4x8xf32>
    %36 = vector.shape_cast %35 : vector<4x8xf32> to vector<4x8x1xf32>
    %37 = tpu.reciprocal %36 {approx = true} : vector<4x8x1xf32> -> vector<4x8x1xf32>
    %38 = vector.broadcast %37 : vector<4x8x1xf32> to vector<4x8x8xf32>
    %39 = arith.mulf %34, %38 : vector<4x8x8xf32>
    %40 = arith.truncf %39 : vector<4x8x8xf32> to vector<4x8x8xbf16>
    %c0_15 = arith.constant 0 : index
    %c0_16 = arith.constant 0 : index
    %c0_17 = arith.constant 0 : index
    %c0_18 = arith.constant 0 : index
    %41 = vector.load %arg28[%c0_15, %c0_16, %c0_17, %c0_18] : memref<1x4x8x8xbf16, #tpu.memory_space<vmem>>, vector<1x4x8x8xbf16>
    %42 = vector.shape_cast %41 : vector<1x4x8x8xbf16> to vector<4x8x8xbf16>
    %43 = vector.shape_cast %40 : vector<4x8x8xbf16> to vector<1x4x8x8xbf16>
    tpu.vector_store %arg28[%c0_15, %c0_16, %c0_17, %c0_18], %43 {strides = array<i32>} : memref<1x4x8x8xbf16, #tpu.memory_space<vmem>>, vector<1x4x8x8xbf16>,
    %44 = arith.truncf %39 : vector<4x8x8xf32> to vector<4x8x8xbf16>
    %c0_19 = arith.constant 0 : index
    %c0_20 = arith.constant 0 : index
    %45 = vector.load %arg10[%c0_19, %c0_20] : memref<1x32xf32, #tpu.memory_space<vmem>>, vector<1x32xf32>
    %46 = vector.extract_strided_slice %44 {offsets = [0, 0, 0], sizes = [1, 8, 8], strides = [1, 1, 1]} : vector<4x8x8xbf16> to vector<1x8x8xbf16>
    %47 = vector.shape_cast %46 : vector<1x8x8xbf16> to vector<8x8xbf16>
    %48 = vector.extract_strided_slice %12 {offsets = [0, 32], sizes = [8, 8], strides = [1, 1]} : vector<8x64xbf16> to vector<8x8xbf16>
    %cst_21 = arith.constant dense<0.000000e+00> : vector<8x8xf32>
    %49 = tpu.matmul %47, %48, %cst_21 {dimension_numbers = #tpu.dot_dimension_numbers<[1], [0], [0], [1], [0, 0, 1, 1], [], []>} : vector<8x8xbf16>, vector<8x8xbf16>, vector<8x8xf32> -> vector<8x8xf32>
    %50 = arith.truncf %49 : vector<8x8xf32> to vector<8x8xbf16>
    %c0_22 = arith.constant 0 : index
    %c0_23 = arith.constant 0 : index
    %c0_24 = arith.constant 0 : index
    %51 = vector.load %arg9[%c0_22, %c0_23, %c0_24] : memref<4x8x32xbf16, #tpu.memory_space<vmem>>, vector<1x8x32xbf16>
    %52 = vector.shape_cast %51 : vector<1x8x32xbf16> to vector<8x32xbf16>
    %cst_25 = arith.constant dense<0.000000e+00> : vector<8x32xf32>
    %53 = tpu.matmul %50, %52, %cst_25 {dimension_numbers = #tpu.dot_dimension_numbers<[1], [0], [0], [1], [0, 0, 1, 1], [], []>} : vector<8x8xbf16>, vector<8x32xbf16>, vector<8x32xf32> -> vector<8x32xf32>
    %54 = vector.broadcast %45 : vector<1x32xf32> to vector<8x32xf32>
    %55 = arith.addf %54, %53 : vector<8x32xf32>
    %56 = vector.extract_strided_slice %44 {offsets = [1, 0, 0], sizes = [1, 8, 8], strides = [1, 1, 1]} : vector<4x8x8xbf16> to vector<1x8x8xbf16>
    %57 = vector.shape_cast %56 : vector<1x8x8xbf16> to vector<8x8xbf16>
    %58 = vector.extract_strided_slice %12 {offsets = [0, 40], sizes = [8, 8], strides = [1, 1]} : vector<8x64xbf16> to vector<8x8xbf16>
    %cst_26 = arith.constant dense<0.000000e+00> : vector<8x8xf32>
    %59 = tpu.matmul %57, %58, %cst_26 {dimension_numbers = #tpu.dot_dimension_numbers<[1], [0], [0], [1], [0, 0, 1, 1], [], []>} : vector<8x8xbf16>, vector<8x8xbf16>, vector<8x8xf32> -> vector<8x8xf32>
    %60 = arith.truncf %59 : vector<8x8xf32> to vector<8x8xbf16>
    %c1 = arith.constant 1 : index
    %c0_27 = arith.constant 0 : index
    %c0_28 = arith.constant 0 : index
    %61 = vector.load %arg9[%c1, %c0_27, %c0_28] : memref<4x8x32xbf16, #tpu.memory_space<vmem>>, vector<1x8x32xbf16>
    %62 = vector.shape_cast %61 : vector<1x8x32xbf16> to vector<8x32xbf16>
    %cst_29 = arith.constant dense<0.000000e+00> : vector<8x32xf32>
    %63 = tpu.matmul %60, %62, %cst_29 {dimension_numbers = #tpu.dot_dimension_numbers<[1], [0], [0], [1], [0, 0, 1, 1], [], []>} : vector<8x8xbf16>, vector<8x32xbf16>, vector<8x32xf32> -> vector<8x32xf32>
    %64 = arith.addf %55, %63 : vector<8x32xf32>
    %65 = vector.extract_strided_slice %44 {offsets = [2, 0, 0], sizes = [1, 8, 8], strides = [1, 1, 1]} : vector<4x8x8xbf16> to vector<1x8x8xbf16>
    %66 = vector.shape_cast %65 : vector<1x8x8xbf16> to vector<8x8xbf16>
    %67 = vector.extract_strided_slice %12 {offsets = [0, 48], sizes = [8, 8], strides = [1, 1]} : vector<8x64xbf16> to vector<8x8xbf16>
    %cst_30 = arith.constant dense<0.000000e+00> : vector<8x8xf32>
    %68 = tpu.matmul %66, %67, %cst_30 {dimension_numbers = #tpu.dot_dimension_numbers<[1], [0], [0], [1], [0, 0, 1, 1], [], []>} : vector<8x8xbf16>, vector<8x8xbf16>, vector<8x8xf32> -> vector<8x8xf32>
    %69 = arith.truncf %68 : vector<8x8xf32> to vector<8x8xbf16>
    %c2 = arith.constant 2 : index
    %c0_31 = arith.constant 0 : index
    %c0_32 = arith.constant 0 : index
    %70 = vector.load %arg9[%c2, %c0_31, %c0_32] : memref<4x8x32xbf16, #tpu.memory_space<vmem>>, vector<1x8x32xbf16>
    %71 = vector.shape_cast %70 : vector<1x8x32xbf16> to vector<8x32xbf16>
    %cst_33 = arith.constant dense<0.000000e+00> : vector<8x32xf32>
    %72 = tpu.matmul %69, %71, %cst_33 {dimension_numbers = #tpu.dot_dimension_numbers<[1], [0], [0], [1], [0, 0, 1, 1], [], []>} : vector<8x8xbf16>, vector<8x32xbf16>, vector<8x32xf32> -> vector<8x32xf32>
    %73 = arith.addf %64, %72 : vector<8x32xf32>
    %74 = vector.extract_strided_slice %44 {offsets = [3, 0, 0], sizes = [1, 8, 8], strides = [1, 1, 1]} : vector<4x8x8xbf16> to vector<1x8x8xbf16>
    %75 = vector.shape_cast %74 : vector<1x8x8xbf16> to vector<8x8xbf16>
    %76 = vector.extract_strided_slice %12 {offsets = [0, 56], sizes = [8, 8], strides = [1, 1]} : vector<8x64xbf16> to vector<8x8xbf16>
    %cst_34 = arith.constant dense<0.000000e+00> : vector<8x8xf32>
    %77 = tpu.matmul %75, %76, %cst_34 {dimension_numbers = #tpu.dot_dimension_numbers<[1], [0], [0], [1], [0, 0, 1, 1], [], []>} : vector<8x8xbf16>, vector<8x8xbf16>, vector<8x8xf32> -> vector<8x8xf32>
    %78 = arith.truncf %77 : vector<8x8xf32> to vector<8x8xbf16>
    %c3 = arith.constant 3 : index
    %c0_35 = arith.constant 0 : index
    %c0_36 = arith.constant 0 : index
    %79 = vector.load %arg9[%c3, %c0_35, %c0_36] : memref<4x8x32xbf16, #tpu.memory_space<vmem>>, vector<1x8x32xbf16>
    %80 = vector.shape_cast %79 : vector<1x8x32xbf16> to vector<8x32xbf16>
    %cst_37 = arith.constant dense<0.000000e+00> : vector<8x32xf32>
    %81 = tpu.matmul %78, %80, %cst_37 {dimension_numbers = #tpu.dot_dimension_numbers<[1], [0], [0], [1], [0, 0, 1, 1], [], []>} : vector<8x8xbf16>, vector<8x32xbf16>, vector<8x32xf32> -> vector<8x32xf32>
    %82 = arith.addf %73, %81 : vector<8x32xf32>
    %83 = arith.addf %4, %82 : vector<8x32xf32>
    %cst_38 = arith.constant dense<0.000000e+00> : vector<8xf32>
    %84 = vector.multi_reduction <add>, %83, %cst_38 [1] : vector<8x32xf32> to vector<8xf32>
    %85 = vector.shape_cast %84 : vector<8xf32> to vector<8x1xf32>
    %cst_39 = arith.constant 3.200000e+01 : f32
    %86 = vector.broadcast %cst_39 : f32 to vector<8x1xf32>
    %87 = arith.divf %85, %86 : vector<8x1xf32>
    %88 = vector.broadcast %87 : vector<8x1xf32> to vector<8x32xf32>
    %89 = arith.subf %83, %88 : vector<8x32xf32>
    %90 = arith.mulf %89, %89 : vector<8x32xf32>
    %cst_40 = arith.constant dense<0.000000e+00> : vector<8xf32>
    %91 = vector.multi_reduction <add>, %90, %cst_40 [1] : vector<8x32xf32> to vector<8xf32>
    %92 = vector.shape_cast %91 : vector<8xf32> to vector<8x1xf32>
    %cst_41 = arith.constant 3.200000e+01 : f32
    %93 = vector.broadcast %cst_41 : f32 to vector<8x1xf32>
    %94 = arith.divf %92, %93 : vector<8x1xf32>
    %cst_42 = arith.constant 9.99999974E-6 : f32
    %95 = vector.broadcast %cst_42 : f32 to vector<8x1xf32>
    %96 = arith.addf %94, %95 : vector<8x1xf32>
    %97 = math.rsqrt %96 : vector<8x1xf32>
    %98 = vector.broadcast %97 : vector<8x1xf32> to vector<8x32xf32>
    %99 = arith.mulf %89, %98 : vector<8x32xf32>
    %c0_43 = arith.constant 0 : index
    %c0_44 = arith.constant 0 : index
    %100 = vector.load %arg21[%c0_43, %c0_44] : memref<1x32xf32, #tpu.memory_space<vmem>>, vector<1x32xf32>
    %101 = vector.broadcast %100 : vector<1x32xf32> to vector<8x32xf32>
    %102 = arith.mulf %99, %101 : vector<8x32xf32>
    %c0_45 = arith.constant 0 : index
    %c0_46 = arith.constant 0 : index
    %103 = vector.load %arg22[%c0_45, %c0_46] : memref<1x32xf32, #tpu.memory_space<vmem>>, vector<1x32xf32>
    %104 = vector.broadcast %103 : vector<1x32xf32> to vector<8x32xf32>
    %105 = arith.addf %102, %104 : vector<8x32xf32>
    %106 = arith.truncf %105 : vector<8x32xf32> to vector<8x32xbf16>
    %c0_47 = arith.constant 0 : index
    %c0_48 = arith.constant 0 : index
    %107 = vector.load %arg11[%c0_47, %c0_48] : memref<32x32xbf16, #tpu.memory_space<vmem>>, vector<32x32xbf16>
    %cst_49 = arith.constant dense<0.000000e+00> : vector<8x32xf32>
    %108 = tpu.matmul %106, %107, %cst_49 {dimension_numbers = #tpu.dot_dimension_numbers<[1], [0], [0], [1], [0, 0, 1, 1], [], []>} : vector<8x32xbf16>, vector<32x32xbf16>, vector<8x32xf32> -> vector<8x32xf32>
    %c0_50 = arith.constant 0 : index
    %c0_51 = arith.constant 0 : index
    %109 = vector.load %arg12[%c0_50, %c0_51] : memref<1x32xf32, #tpu.memory_space<vmem>>, vector<1x32xf32>
    %110 = vector.broadcast %109 : vector<1x32xf32> to vector<8x32xf32>
    %111 = arith.addf %108, %110 : vector<8x32xf32>
    %112 = arith.truncf %111 : vector<8x32xf32> to vector<8x32xbf16>
    %c0_52 = arith.constant 0 : index
    %c0_53 = arith.constant 0 : index
    %113 = vector.load %arg31[%c0_52, %c0_53] : memref<8x64xbf16, #tpu.memory_space<vmem>>, vector<8x64xbf16>
    %114 = vector.extract_strided_slice %112 {offsets = [0, 0], sizes = [8, 8], strides = [1, 1]} : vector<8x32xbf16> to vector<8x8xbf16>
    %115 = vector.extract_strided_slice %113 {offsets = [0, 0], sizes = [8, 8], strides = [1, 1]} : vector<8x64xbf16> to vector<8x8xbf16>
    "tpu.trace_start"() <{level = 10 : i32, message = "qd,kd->qk"}> : () -> ()
    %cst_54 = arith.constant dense<0.000000e+00> : vector<8x8xf32>
    %116 = tpu.matmul %114, %115, %cst_54 {dimension_numbers = #tpu.dot_dimension_numbers<[1], [1], [0], [0], [0, 0, 1, 0], [], []>} : vector<8x8xbf16>, vector<8x8xbf16>, vector<8x8xf32> -> vector<8x8xf32>
    "tpu.trace_stop"() : () -> ()
    %117 = vector.extract_strided_slice %112 {offsets = [0, 8], sizes = [8, 8], strides = [1, 1]} : vector<8x32xbf16> to vector<8x8xbf16>
    %118 = vector.extract_strided_slice %113 {offsets = [0, 8], sizes = [8, 8], strides = [1, 1]} : vector<8x64xbf16> to vector<8x8xbf16>
    "tpu.trace_start"() <{level = 10 : i32, message = "qd,kd->qk"}> : () -> ()
    %cst_55 = arith.constant dense<0.000000e+00> : vector<8x8xf32>
    %119 = tpu.matmul %117, %118, %cst_55 {dimension_numbers = #tpu.dot_dimension_numbers<[1], [1], [0], [0], [0, 0, 1, 0], [], []>} : vector<8x8xbf16>, vector<8x8xbf16>, vector<8x8xf32> -> vector<8x8xf32>
    "tpu.trace_stop"() : () -> ()
    %120 = vector.extract_strided_slice %112 {offsets = [0, 16], sizes = [8, 8], strides = [1, 1]} : vector<8x32xbf16> to vector<8x8xbf16>
    %121 = vector.extract_strided_slice %113 {offsets = [0, 16], sizes = [8, 8], strides = [1, 1]} : vector<8x64xbf16> to vector<8x8xbf16>
    "tpu.trace_start"() <{level = 10 : i32, message = "qd,kd->qk"}> : () -> ()
    %cst_56 = arith.constant dense<0.000000e+00> : vector<8x8xf32>
    %122 = tpu.matmul %120, %121, %cst_56 {dimension_numbers = #tpu.dot_dimension_numbers<[1], [1], [0], [0], [0, 0, 1, 0], [], []>} : vector<8x8xbf16>, vector<8x8xbf16>, vector<8x8xf32> -> vector<8x8xf32>
    "tpu.trace_stop"() : () -> ()
    %123 = vector.extract_strided_slice %112 {offsets = [0, 24], sizes = [8, 8], strides = [1, 1]} : vector<8x32xbf16> to vector<8x8xbf16>
    %124 = vector.extract_strided_slice %113 {offsets = [0, 24], sizes = [8, 8], strides = [1, 1]} : vector<8x64xbf16> to vector<8x8xbf16>
    "tpu.trace_start"() <{level = 10 : i32, message = "qd,kd->qk"}> : () -> ()
    %cst_57 = arith.constant dense<0.000000e+00> : vector<8x8xf32>
    %125 = tpu.matmul %123, %124, %cst_57 {dimension_numbers = #tpu.dot_dimension_numbers<[1], [1], [0], [0], [0, 0, 1, 0], [], []>} : vector<8x8xbf16>, vector<8x8xbf16>, vector<8x8xf32> -> vector<8x8xf32>
    "tpu.trace_stop"() : () -> ()
    %126 = vector.shape_cast %116 : vector<8x8xf32> to vector<1x8x8xf32>
    %127 = vector.shape_cast %119 : vector<8x8xf32> to vector<1x8x8xf32>
    %128 = vector.shape_cast %122 : vector<8x8xf32> to vector<1x8x8xf32>
    %129 = vector.shape_cast %125 : vector<8x8xf32> to vector<1x8x8xf32>
    %130 = tpu.concatenate %126, %127, %128, %129 in 0 : vector<1x8x8xf32>, vector<1x8x8xf32>, vector<1x8x8xf32>, vector<1x8x8xf32> -> vector<4x8x8xf32>
    %cst_58 = arith.constant dense<0xFF800000> : vector<4x8xf32>
    %131 = vector.multi_reduction <maximumf>, %130, %cst_58 [2] : vector<4x8x8xf32> to vector<4x8xf32>
    %132 = vector.shape_cast %131 : vector<4x8xf32> to vector<4x8x1xf32>
    %133 = vector.broadcast %132 : vector<4x8x1xf32> to vector<4x8x8xf32>
    %134 = arith.subf %130, %133 : vector<4x8x8xf32>
    %135 = math.exp %134 : vector<4x8x8xf32>
    %cst_59 = arith.constant dense<0.000000e+00> : vector<4x8xf32>
    %136 = vector.multi_reduction <add>, %135, %cst_59 [2] : vector<4x8x8xf32> to vector<4x8xf32>
    %137 = vector.shape_cast %136 : vector<4x8xf32> to vector<4x8x1xf32>
    %138 = tpu.reciprocal %137 {approx = true} : vector<4x8x1xf32> -> vector<4x8x1xf32>
    %139 = vector.broadcast %138 : vector<4x8x1xf32> to vector<4x8x8xf32>
    %140 = arith.mulf %135, %139 : vector<4x8x8xf32>
    %141 = arith.truncf %140 : vector<4x8x8xf32> to vector<4x8x8xbf16>
    %c0_60 = arith.constant 0 : index
    %c0_61 = arith.constant 0 : index
    %c0_62 = arith.constant 0 : index
    %c0_63 = arith.constant 0 : index
    %142 = vector.load %arg29[%c0_60, %c0_61, %c0_62, %c0_63] : memref<1x4x8x8xbf16, #tpu.memory_space<vmem>>, vector<1x4x8x8xbf16>
    %143 = vector.shape_cast %142 : vector<1x4x8x8xbf16> to vector<4x8x8xbf16>
    %144 = vector.shape_cast %141 : vector<4x8x8xbf16> to vector<1x4x8x8xbf16>
    tpu.vector_store %arg29[%c0_60, %c0_61, %c0_62, %c0_63], %144 {strides = array<i32>} : memref<1x4x8x8xbf16, #tpu.memory_space<vmem>>, vector<1x4x8x8xbf16>,
    %145 = arith.truncf %140 : vector<4x8x8xf32> to vector<4x8x8xbf16>
    %c0_64 = arith.constant 0 : index
    %c0_65 = arith.constant 0 : index
    %146 = vector.load %arg16[%c0_64, %c0_65] : memref<1x32xf32, #tpu.memory_space<vmem>>, vector<1x32xf32>
    %147 = vector.extract_strided_slice %145 {offsets = [0, 0, 0], sizes = [1, 8, 8], strides = [1, 1, 1]} : vector<4x8x8xbf16> to vector<1x8x8xbf16>
    %148 = vector.shape_cast %147 : vector<1x8x8xbf16> to vector<8x8xbf16>
    %149 = vector.extract_strided_slice %113 {offsets = [0, 32], sizes = [8, 8], strides = [1, 1]} : vector<8x64xbf16> to vector<8x8xbf16>
    %cst_66 = arith.constant dense<0.000000e+00> : vector<8x8xf32>
    %150 = tpu.matmul %148, %149, %cst_66 {dimension_numbers = #tpu.dot_dimension_numbers<[1], [0], [0], [1], [0, 0, 1, 1], [], []>} : vector<8x8xbf16>, vector<8x8xbf16>, vector<8x8xf32> -> vector<8x8xf32>
    %151 = arith.truncf %150 : vector<8x8xf32> to vector<8x8xbf16>
    %c0_67 = arith.constant 0 : index
    %c0_68 = arith.constant 0 : index
    %c0_69 = arith.constant 0 : index
    %152 = vector.load %arg15[%c0_67, %c0_68, %c0_69] : memref<4x8x32xbf16, #tpu.memory_space<vmem>>, vector<1x8x32xbf16>
    %153 = vector.shape_cast %152 : vector<1x8x32xbf16> to vector<8x32xbf16>
    %cst_70 = arith.constant dense<0.000000e+00> : vector<8x32xf32>
    %154 = tpu.matmul %151, %153, %cst_70 {dimension_numbers = #tpu.dot_dimension_numbers<[1], [0], [0], [1], [0, 0, 1, 1], [], []>} : vector<8x8xbf16>, vector<8x32xbf16>, vector<8x32xf32> -> vector<8x32xf32>
    %155 = vector.broadcast %146 : vector<1x32xf32> to vector<8x32xf32>
    %156 = arith.addf %155, %154 : vector<8x32xf32>
    %157 = vector.extract_strided_slice %145 {offsets = [1, 0, 0], sizes = [1, 8, 8], strides = [1, 1, 1]} : vector<4x8x8xbf16> to vector<1x8x8xbf16>
    %158 = vector.shape_cast %157 : vector<1x8x8xbf16> to vector<8x8xbf16>
    %159 = vector.extract_strided_slice %113 {offsets = [0, 40], sizes = [8, 8], strides = [1, 1]} : vector<8x64xbf16> to vector<8x8xbf16>
    %cst_71 = arith.constant dense<0.000000e+00> : vector<8x8xf32>
    %160 = tpu.matmul %158, %159, %cst_71 {dimension_numbers = #tpu.dot_dimension_numbers<[1], [0], [0], [1], [0, 0, 1, 1], [], []>} : vector<8x8xbf16>, vector<8x8xbf16>, vector<8x8xf32> -> vector<8x8xf32>
    %161 = arith.truncf %160 : vector<8x8xf32> to vector<8x8xbf16>
    %c1_72 = arith.constant 1 : index
    %c0_73 = arith.constant 0 : index
    %c0_74 = arith.constant 0 : index
    %162 = vector.load %arg15[%c1_72, %c0_73, %c0_74] : memref<4x8x32xbf16, #tpu.memory_space<vmem>>, vector<1x8x32xbf16>
    %163 = vector.shape_cast %162 : vector<1x8x32xbf16> to vector<8x32xbf16>
    %cst_75 = arith.constant dense<0.000000e+00> : vector<8x32xf32>
    %164 = tpu.matmul %161, %163, %cst_75 {dimension_numbers = #tpu.dot_dimension_numbers<[1], [0], [0], [1], [0, 0, 1, 1], [], []>} : vector<8x8xbf16>, vector<8x32xbf16>, vector<8x32xf32> -> vector<8x32xf32>
    %165 = arith.addf %156, %164 : vector<8x32xf32>
    %166 = vector.extract_strided_slice %145 {offsets = [2, 0, 0], sizes = [1, 8, 8], strides = [1, 1, 1]} : vector<4x8x8xbf16> to vector<1x8x8xbf16>
    %167 = vector.shape_cast %166 : vector<1x8x8xbf16> to vector<8x8xbf16>
    %168 = vector.extract_strided_slice %113 {offsets = [0, 48], sizes = [8, 8], strides = [1, 1]} : vector<8x64xbf16> to vector<8x8xbf16>
    %cst_76 = arith.constant dense<0.000000e+00> : vector<8x8xf32>
    %169 = tpu.matmul %167, %168, %cst_76 {dimension_numbers = #tpu.dot_dimension_numbers<[1], [0], [0], [1], [0, 0, 1, 1], [], []>} : vector<8x8xbf16>, vector<8x8xbf16>, vector<8x8xf32> -> vector<8x8xf32>
    %170 = arith.truncf %169 : vector<8x8xf32> to vector<8x8xbf16>
    %c2_77 = arith.constant 2 : index
    %c0_78 = arith.constant 0 : index
    %c0_79 = arith.constant 0 : index
    %171 = vector.load %arg15[%c2_77, %c0_78, %c0_79] : memref<4x8x32xbf16, #tpu.memory_space<vmem>>, vector<1x8x32xbf16>
    %172 = vector.shape_cast %171 : vector<1x8x32xbf16> to vector<8x32xbf16>
    %cst_80 = arith.constant dense<0.000000e+00> : vector<8x32xf32>
    %173 = tpu.matmul %170, %172, %cst_80 {dimension_numbers = #tpu.dot_dimension_numbers<[1], [0], [0], [1], [0, 0, 1, 1], [], []>} : vector<8x8xbf16>, vector<8x32xbf16>, vector<8x32xf32> -> vector<8x32xf32>
    %174 = arith.addf %165, %173 : vector<8x32xf32>
    %175 = vector.extract_strided_slice %145 {offsets = [3, 0, 0], sizes = [1, 8, 8], strides = [1, 1, 1]} : vector<4x8x8xbf16> to vector<1x8x8xbf16>
    %176 = vector.shape_cast %175 : vector<1x8x8xbf16> to vector<8x8xbf16>
    %177 = vector.extract_strided_slice %113 {offsets = [0, 56], sizes = [8, 8], strides = [1, 1]} : vector<8x64xbf16> to vector<8x8xbf16>
    %cst_81 = arith.constant dense<0.000000e+00> : vector<8x8xf32>
    %178 = tpu.matmul %176, %177, %cst_81 {dimension_numbers = #tpu.dot_dimension_numbers<[1], [0], [0], [1], [0, 0, 1, 1], [], []>} : vector<8x8xbf16>, vector<8x8xbf16>, vector<8x8xf32> -> vector<8x8xf32>
    %179 = arith.truncf %178 : vector<8x8xf32> to vector<8x8xbf16>
    %c3_82 = arith.constant 3 : index
    %c0_83 = arith.constant 0 : index
    %c0_84 = arith.constant 0 : index
    %180 = vector.load %arg15[%c3_82, %c0_83, %c0_84] : memref<4x8x32xbf16, #tpu.memory_space<vmem>>, vector<1x8x32xbf16>
    %181 = vector.shape_cast %180 : vector<1x8x32xbf16> to vector<8x32xbf16>
    %cst_85 = arith.constant dense<0.000000e+00> : vector<8x32xf32>
    %182 = tpu.matmul %179, %181, %cst_85 {dimension_numbers = #tpu.dot_dimension_numbers<[1], [0], [0], [1], [0, 0, 1, 1], [], []>} : vector<8x8xbf16>, vector<8x32xbf16>, vector<8x32xf32> -> vector<8x32xf32>
    %183 = arith.addf %174, %182 : vector<8x32xf32>
    %184 = arith.addf %105, %183 : vector<8x32xf32>
    %cst_86 = arith.constant dense<0.000000e+00> : vector<8xf32>
    %185 = vector.multi_reduction <add>, %184, %cst_86 [1] : vector<8x32xf32> to vector<8xf32>
    %186 = vector.shape_cast %185 : vector<8xf32> to vector<8x1xf32>
    %cst_87 = arith.constant 3.200000e+01 : f32
    %187 = vector.broadcast %cst_87 : f32 to vector<8x1xf32>
    %188 = arith.divf %186, %187 : vector<8x1xf32>
    %189 = vector.broadcast %188 : vector<8x1xf32> to vector<8x32xf32>
    %190 = arith.subf %184, %189 : vector<8x32xf32>
    %191 = arith.mulf %190, %190 : vector<8x32xf32>
    %cst_88 = arith.constant dense<0.000000e+00> : vector<8xf32>
    %192 = vector.multi_reduction <add>, %191, %cst_88 [1] : vector<8x32xf32> to vector<8xf32>
    %193 = vector.shape_cast %192 : vector<8xf32> to vector<8x1xf32>
    %cst_89 = arith.constant 3.200000e+01 : f32
    %194 = vector.broadcast %cst_89 : f32 to vector<8x1xf32>
    %195 = arith.divf %193, %194 : vector<8x1xf32>
    %cst_90 = arith.constant 9.99999974E-6 : f32
    %196 = vector.broadcast %cst_90 : f32 to vector<8x1xf32>
    %197 = arith.addf %195, %196 : vector<8x1xf32>
    %198 = math.rsqrt %197 : vector<8x1xf32>
    %199 = vector.broadcast %198 : vector<8x1xf32> to vector<8x32xf32>
    %200 = arith.mulf %190, %199 : vector<8x32xf32>
    %c0_91 = arith.constant 0 : index
    %c0_92 = arith.constant 0 : index
    %201 = vector.load %arg23[%c0_91, %c0_92] : memref<1x32xf32, #tpu.memory_space<vmem>>, vector<1x32xf32>
    %202 = vector.broadcast %201 : vector<1x32xf32> to vector<8x32xf32>
    %203 = arith.mulf %200, %202 : vector<8x32xf32>
    %c0_93 = arith.constant 0 : index
    %c0_94 = arith.constant 0 : index
    %204 = vector.load %arg24[%c0_93, %c0_94] : memref<1x32xf32, #tpu.memory_space<vmem>>, vector<1x32xf32>
    %205 = vector.broadcast %204 : vector<1x32xf32> to vector<8x32xf32>
    %206 = arith.addf %203, %205 : vector<8x32xf32>
    %207 = arith.truncf %206 : vector<8x32xf32> to vector<8x32xbf16>
    %c0_95 = arith.constant 0 : index
    %c0_96 = arith.constant 0 : index
    %208 = vector.load %arg17[%c0_95, %c0_96] : memref<32x64xbf16, #tpu.memory_space<vmem>>, vector<32x64xbf16>
    %cst_97 = arith.constant dense<0.000000e+00> : vector<8x64xf32>
    %209 = tpu.matmul %207, %208, %cst_97 {dimension_numbers = #tpu.dot_dimension_numbers<[1], [0], [0], [1], [0, 0, 1, 1], [], []>} : vector<8x32xbf16>, vector<32x64xbf16>, vector<8x64xf32> -> vector<8x64xf32>
    %c0_98 = arith.constant 0 : index
    %c0_99 = arith.constant 0 : index
    %210 = vector.load %arg18[%c0_98, %c0_99] : memref<1x64xf32, #tpu.memory_space<vmem>>, vector<1x64xf32>
    %211 = vector.broadcast %210 : vector<1x64xf32> to vector<8x64xf32>
    %212 = arith.addf %209, %211 : vector<8x64xf32>
    %cst_100 = arith.constant 0.000000e+00 : f32
    %213 = vector.broadcast %cst_100 : f32 to vector<8x64xf32>
    %214 = arith.maximumf %212, %213 : vector<8x64xf32>
    %215 = arith.truncf %214 : vector<8x64xf32> to vector<8x64xbf16>
    %c0_101 = arith.constant 0 : index
    %c0_102 = arith.constant 0 : index
    %216 = vector.load %arg19[%c0_101, %c0_102] : memref<64x32xbf16, #tpu.memory_space<vmem>>, vector<64x32xbf16>
    %cst_103 = arith.constant dense<0.000000e+00> : vector<8x32xf32>
    %217 = tpu.matmul %215, %216, %cst_103 {dimension_numbers = #tpu.dot_dimension_numbers<[1], [0], [0], [1], [0, 0, 1, 1], [], []>} : vector<8x64xbf16>, vector<64x32xbf16>, vector<8x32xf32> -> vector<8x32xf32>
    %c0_104 = arith.constant 0 : index
    %c0_105 = arith.constant 0 : index
    %218 = vector.load %arg20[%c0_104, %c0_105] : memref<1x32xf32, #tpu.memory_space<vmem>>, vector<1x32xf32>
    %219 = vector.broadcast %218 : vector<1x32xf32> to vector<8x32xf32>
    %220 = arith.addf %217, %219 : vector<8x32xf32>
    %221 = arith.addf %206, %220 : vector<8x32xf32>
    %cst_106 = arith.constant dense<0.000000e+00> : vector<8xf32>
    %222 = vector.multi_reduction <add>, %221, %cst_106 [1] : vector<8x32xf32> to vector<8xf32>
    %223 = vector.shape_cast %222 : vector<8xf32> to vector<8x1xf32>
    %cst_107 = arith.constant 3.200000e+01 : f32
    %224 = vector.broadcast %cst_107 : f32 to vector<8x1xf32>
    %225 = arith.divf %223, %224 : vector<8x1xf32>
    %226 = vector.broadcast %225 : vector<8x1xf32> to vector<8x32xf32>
    %227 = arith.subf %221, %226 : vector<8x32xf32>
    %228 = arith.mulf %227, %227 : vector<8x32xf32>
    %cst_108 = arith.constant dense<0.000000e+00> : vector<8xf32>
    %229 = vector.multi_reduction <add>, %228, %cst_108 [1] : vector<8x32xf32> to vector<8xf32>
    %230 = vector.shape_cast %229 : vector<8xf32> to vector<8x1xf32>
    %cst_109 = arith.constant 3.200000e+01 : f32
    %231 = vector.broadcast %cst_109 : f32 to vector<8x1xf32>
    %232 = arith.divf %230, %231 : vector<8x1xf32>
    %cst_110 = arith.constant 9.99999974E-6 : f32
    %233 = vector.broadcast %cst_110 : f32 to vector<8x1xf32>
    %234 = arith.addf %232, %233 : vector<8x1xf32>
    %235 = math.rsqrt %234 : vector<8x1xf32>
    %236 = vector.broadcast %235 : vector<8x1xf32> to vector<8x32xf32>
    %237 = arith.mulf %227, %236 : vector<8x32xf32>
    %c0_111 = arith.constant 0 : index
    %c0_112 = arith.constant 0 : index
    %238 = vector.load %arg25[%c0_111, %c0_112] : memref<1x32xf32, #tpu.memory_space<vmem>>, vector<1x32xf32>
    %239 = vector.broadcast %238 : vector<1x32xf32> to vector<8x32xf32>
    %240 = arith.mulf %237, %239 : vector<8x32xf32>
    %c0_113 = arith.constant 0 : index
    %c0_114 = arith.constant 0 : index
    %241 = vector.load %arg26[%c0_113, %c0_114] : memref<1x32xf32, #tpu.memory_space<vmem>>, vector<1x32xf32>
    %242 = vector.broadcast %241 : vector<1x32xf32> to vector<8x32xf32>
    %243 = arith.addf %240, %242 : vector<8x32xf32>
    %c0_115 = arith.constant 0 : index
    %c0_116 = arith.constant 0 : index
    %c0_117 = arith.constant 0 : index
    %244 = vector.load %arg27[%c0_115, %c0_116, %c0_117] : memref<1x8x32xf32, #tpu.memory_space<vmem>>, vector<1x8x32xf32>
    %245 = vector.shape_cast %244 : vector<1x8x32xf32> to vector<8x32xf32>
    %246 = vector.shape_cast %243 : vector<8x32xf32> to vector<1x8x32xf32>
    tpu.vector_store %arg27[%c0_115, %c0_116, %c0_117], %246 {strides = array<i32>} : memref<1x8x32xf32, #tpu.memory_space<vmem>>, vector<1x8x32xf32>,
    return
  }
  func.func @transform_0(%arg0: i32, %arg1: i32) -> (i32, i32, i32) {
    %c0_i32 = arith.constant 0 : i32
    %c0_i32_0 = arith.constant 0 : i32
    return %arg0, %arg1, %c0_i32 : i32, i32, i32
  }
  func.func @transform_1(%arg0: i32, %arg1: i32) -> (i32, i32, i32) {
    %c0_i32 = arith.constant 0 : i32
    %c0_i32_0 = arith.constant 0 : i32
    %c0_i32_1 = arith.constant 0 : i32
    return %arg0, %c0_i32, %c0_i32_0 : i32, i32, i32
  }
  func.func @transform_2(%arg0: i32, %arg1: i32) -> (i32, i32, i32) {
    %c0_i32 = arith.constant 0 : i32
    %c0_i32_0 = arith.constant 0 : i32
    %c0_i32_1 = arith.constant 0 : i32
    return %arg0, %c0_i32, %c0_i32_0 : i32, i32, i32
  }
  func.func @transform_3(%arg0: i32, %arg1: i32) -> (i32, i32) {
    %c0_i32 = arith.constant 0 : i32
    %c0_i32_0 = arith.constant 0 : i32
    %c0_i32_1 = arith.constant 0 : i32
    return %c0_i32, %c0_i32_0 : i32, i32
  }
  func.func @transform_4(%arg0: i32, %arg1: i32) -> (i32, i32) {
    %c0_i32 = arith.constant 0 : i32
    %c0_i32_0 = arith.constant 0 : i32
    %c0_i32_1 = arith.constant 0 : i32
    return %c0_i32, %c0_i32_0 : i32, i32
  }
  func.func @transform_5(%arg0: i32, %arg1: i32) -> (i32, i32) {
    %c0_i32 = arith.constant 0 : i32
    %c0_i32_0 = arith.constant 0 : i32
    %c0_i32_1 = arith.constant 0 : i32
    return %c0_i32, %c0_i32_0 : i32, i32
  }
  func.func @transform_6(%arg0: i32, %arg1: i32) -> (i32, i32) {
    %c0_i32 = arith.constant 0 : i32
    %c0_i32_0 = arith.constant 0 : i32
    %c0_i32_1 = arith.constant 0 : i32
    return %c0_i32, %c0_i32_0 : i32, i32
  }
  func.func @transform_7(%arg0: i32, %arg1: i32) -> (i32, i32, i32) {
    %c0_i32 = arith.constant 0 : i32
    %c0_i32_0 = arith.constant 0 : i32
    %c0_i32_1 = arith.constant 0 : i32
    %c0_i32_2 = arith.constant 0 : i32
    return %c0_i32, %c0_i32_0, %c0_i32_1 : i32, i32, i32
  }
  func.func @transform_8(%arg0: i32, %arg1: i32) -> (i32, i32) {
    %c0_i32 = arith.constant 0 : i32
    %c0_i32_0 = arith.constant 0 : i32
    %c0_i32_1 = arith.constant 0 : i32
    return %c0_i32, %c0_i32_0 : i32, i32
  }
  func.func @transform_9(%arg0: i32, %arg1: i32) -> (i32, i32) {
    %c0_i32 = arith.constant 0 : i32
    %c0_i32_0 = arith.constant 0 : i32
    %c0_i32_1 = arith.constant 0 : i32
    return %c0_i32, %c0_i32_0 : i32, i32
  }
  func.func @transform_10(%arg0: i32, %arg1: i32) -> (i32, i32) {
    %c0_i32 = arith.constant 0 : i32
    %c0_i32_0 = arith.constant 0 : i32
    %c0_i32_1 = arith.constant 0 : i32
    return %c0_i32, %c0_i32_0 : i32, i32
  }
  func.func @transform_11(%arg0: i32, %arg1: i32) -> (i32, i32) {
    %c0_i32 = arith.constant 0 : i32
    %c0_i32_0 = arith.constant 0 : i32
    %c0_i32_1 = arith.constant 0 : i32
    return %c0_i32, %c0_i32_0 : i32, i32
  }
  func.func @transform_12(%arg0: i32, %arg1: i32) -> (i32, i32) {
    %c0_i32 = arith.constant 0 : i32
    %c0_i32_0 = arith.constant 0 : i32
    %c0_i32_1 = arith.constant 0 : i32
    return %c0_i32, %c0_i32_0 : i32, i32
  }
  func.func @transform_13(%arg0: i32, %arg1: i32) -> (i32, i32, i32) {
    %c0_i32 = arith.constant 0 : i32
    %c0_i32_0 = arith.constant 0 : i32
    %c0_i32_1 = arith.constant 0 : i32
    %c0_i32_2 = arith.constant 0 : i32
    return %c0_i32, %c0_i32_0, %c0_i32_1 : i32, i32, i32
  }
  func.func @transform_14(%arg0: i32, %arg1: i32) -> (i32, i32) {
    %c0_i32 = arith.constant 0 : i32
    %c0_i32_0 = arith.constant 0 : i32
    %c0_i32_1 = arith.constant 0 : i32
    return %c0_i32, %c0_i32_0 : i32, i32
  }
  func.func @transform_15(%arg0: i32, %arg1: i32) -> (i32, i32) {
    %c0_i32 = arith.constant 0 : i32
    %c0_i32_0 = arith.constant 0 : i32
    %c0_i32_1 = arith.constant 0 : i32
    return %c0_i32, %c0_i32_0 : i32, i32
  }
  func.func @transform_16(%arg0: i32, %arg1: i32) -> (i32, i32) {
    %c0_i32 = arith.constant 0 : i32
    %c0_i32_0 = arith.constant 0 : i32
    %c0_i32_1 = arith.constant 0 : i32
    return %c0_i32, %c0_i32_0 : i32, i32
  }
  func.func @transform_17(%arg0: i32, %arg1: i32) -> (i32, i32) {
    %c0_i32 = arith.constant 0 : i32
    %c0_i32_0 = arith.constant 0 : i32
    %c0_i32_1 = arith.constant 0 : i32
    return %c0_i32, %c0_i32_0 : i32, i32
  }
  func.func @transform_18(%arg0: i32, %arg1: i32) -> (i32, i32) {
    %c0_i32 = arith.constant 0 : i32
    %c0_i32_0 = arith.constant 0 : i32
    %c0_i32_1 = arith.constant 0 : i32
    return %c0_i32, %c0_i32_0 : i32, i32
  }
  func.func @transform_19(%arg0: i32, %arg1: i32) -> (i32, i32) {
    %c0_i32 = arith.constant 0 : i32
    %c0_i32_0 = arith.constant 0 : i32
    %c0_i32_1 = arith.constant 0 : i32
    return %c0_i32, %c0_i32_0 : i32, i32
  }
  func.func @transform_20(%arg0: i32, %arg1: i32) -> (i32, i32) {
    %c0_i32 = arith.constant 0 : i32
    %c0_i32_0 = arith.constant 0 : i32
    %c0_i32_1 = arith.constant 0 : i32
    return %c0_i32, %c0_i32_0 : i32, i32
  }
  func.func @transform_21(%arg0: i32, %arg1: i32) -> (i32, i32) {
    %c0_i32 = arith.constant 0 : i32
    %c0_i32_0 = arith.constant 0 : i32
    %c0_i32_1 = arith.constant 0 : i32
    return %c0_i32, %c0_i32_0 : i32, i32
  }
  func.func @transform_22(%arg0: i32, %arg1: i32) -> (i32, i32) {
    %c0_i32 = arith.constant 0 : i32
    %c0_i32_0 = arith.constant 0 : i32
    %c0_i32_1 = arith.constant 0 : i32
    return %c0_i32, %c0_i32_0 : i32, i32
  }
  func.func @transform_23(%arg0: i32, %arg1: i32) -> (i32, i32) {
    %c0_i32 = arith.constant 0 : i32
    %c0_i32_0 = arith.constant 0 : i32
    %c0_i32_1 = arith.constant 0 : i32
    return %c0_i32, %c0_i32_0 : i32, i32
  }
  func.func @transform_24(%arg0: i32, %arg1: i32) -> (i32, i32) {
    %c0_i32 = arith.constant 0 : i32
    %c0_i32_0 = arith.constant 0 : i32
    %c0_i32_1 = arith.constant 0 : i32
    return %c0_i32, %c0_i32_0 : i32, i32
  }
  func.func @transform_25(%arg0: i32, %arg1: i32) -> (i32, i32, i32) {
    %c0_i32 = arith.constant 0 : i32
    %c0_i32_0 = arith.constant 0 : i32
    return %arg0, %arg1, %c0_i32 : i32, i32, i32
  }
  func.func @transform_26(%arg0: i32, %arg1: i32) -> (i32, i32, i32, i32) {
    %c0_i32 = arith.constant 0 : i32
    %c0_i32_0 = arith.constant 0 : i32
    %c0_i32_1 = arith.constant 0 : i32
    return %arg0, %c0_i32, %arg1, %c0_i32_0 : i32, i32, i32, i32
  }
  func.func @transform_27(%arg0: i32, %arg1: i32) -> (i32, i32, i32, i32) {
    %c0_i32 = arith.constant 0 : i32
    %c0_i32_0 = arith.constant 0 : i32
    %c0_i32_1 = arith.constant 0 : i32
    return %arg0, %c0_i32, %arg1, %c0_i32_0 : i32, i32, i32, i32
  }
}

</mosaic_0001>

<llo_original>
// kernel: tpu_custom_call.1
$region0: #{tpu_custom_call.1}
  #allocation0 [shape = 'u32[]', space=smem, size = 0x4, offset = 0x4, fixed_abs, tag = 'smem constant byte address 0x4 - core index']
  #allocation1 [shape = 'u32[144,128]{1,0:T(1,128)}', space=vmem, size = 0x12000, scoped, tag = 'internal scratch']
  #allocation2 [shape = 'bf16[8,64]{1,0:T(8,128)(2,1)}', space=vmem, size = 0x800, scoped, tag = 'scratch operand']
  #allocation3 [shape = 'bf16[8,64]{1,0:T(8,128)(2,1)}', space=vmem, size = 0x800, scoped, tag = 'scratch operand']
  %s0 = inlined_call_operand.vmem [shape: f32[2,8,32], index: 0, kind: input, shape index: {}]
  %s1 = inlined_call_operand.hbm [shape: bf16[2,8,32], index: 1, kind: input, shape index: {}]
  %s2 = inlined_call_operand.hbm [shape: bf16[2,8,32], index: 2, kind: input, shape index: {}]
  %s3 = inlined_call_operand.vmem [shape: bf16[32,32], index: 3, kind: input, shape index: {}]
  %s4 = inlined_call_operand.vmem [shape: f32[1,32], index: 4, kind: input, shape index: {}]
  %s5 = inlined_call_operand.vmem [shape: bf16[32,64], index: 5, kind: input, shape index: {}]
  %s6 = inlined_call_operand.hbm [shape: f32[1,64], index: 6, kind: input, shape index: {}]
  %s7 = inlined_call_operand.hbm [shape: bf16[4,8,32], index: 7, kind: input, shape index: {}]
  %s8 = inlined_call_operand.hbm [shape: f32[1,32], index: 8, kind: input, shape index: {}]
  %s9 = inlined_call_operand.vmem [shape: bf16[32,32], index: 9, kind: input, shape index: {}]
  %s10 = inlined_call_operand.hbm [shape: f32[1,32], index: 10, kind: input, shape index: {}]
  %s11 = inlined_call_operand.hbm [shape: bf16[32,64], index: 11, kind: input, shape index: {}]
  %s12 = inlined_call_operand.hbm [shape: f32[1,64], index: 12, kind: input, shape index: {}]
  %s13 = inlined_call_operand.vmem [shape: bf16[4,8,32], index: 13, kind: input, shape index: {}]
  %s14 = inlined_call_operand.vmem [shape: f32[1,32], index: 14, kind: input, shape index: {}]
  %s15 = inlined_call_operand.hbm [shape: bf16[32,64], index: 15, kind: input, shape index: {}]
  %s16 = inlined_call_operand.vmem [shape: f32[1,64], index: 16, kind: input, shape index: {}]
  %s17 = inlined_call_operand.vmem [shape: bf16[64,32], index: 17, kind: input, shape index: {}]
  %s18 = inlined_call_operand.vmem [shape: f32[1,32], index: 18, kind: input, shape index: {}]
  %s19 = inlined_call_operand.vmem [shape: f32[1,32], index: 19, kind: input, shape index: {}]
  %s20 = inlined_call_operand.vmem [shape: f32[1,32], index: 20, kind: input, shape index: {}]
  %s21 = inlined_call_operand.vmem [shape: f32[1,32], index: 21, kind: input, shape index: {}]
  %s22 = inlined_call_operand.vmem [shape: f32[1,32], index: 22, kind: input, shape index: {}]
  %s23 = inlined_call_operand.vmem [shape: f32[1,32], index: 23, kind: input, shape index: {}]
  %s24 = inlined_call_operand.vmem [shape: f32[1,32], index: 24, kind: input, shape index: {}]
  %s25 = inlined_call_operand.hbm [shape: f32[2,8,32], index: 25, kind: output, shape index: {0}]
  %s26 = inlined_call_operand.hbm [shape: bf16[2,4,8,8], index: 26, kind: output, shape index: {1}]
  %s27 = inlined_call_operand.hbm [shape: bf16[2,4,8,8], index: 27, kind: output, shape index: {2}]
  %28 = xla_tuple %s25, %s26, %s27
  %s29 = sld [smem:[#allocation0]]
  $region189: #{tpu_custom_call.1} parent=0
    _
  %s31 = ssub.s32 1, %s29
  %s32 = scalar_select 0, %s31, %s29
  $region1: #{tpu_custom_call.1} parent=0
    #allocation4 [shape = 'u8[4096]{0}', space=vmem, size = 0x1000, scoped, tag = 'input window, operand 1']
    #allocation5 [shape = 's32[2]{0}', space=sflag, size = 0x8, scoped, tag = 'scoped memory for tpu_custom_call.1']
    #allocation6 [shape = 's32[2]{0}', space=sflag, size = 0x8, scoped, tag = 'scoped memory for tpu_custom_call.1']
    #allocation7 [shape = 'u8[4096]{0}', space=vmem, size = 0x1000, scoped, tag = 'input window, operand 2']
    #allocation8 [shape = 's32[2]{0}', space=sflag, size = 0x8, scoped, tag = 'scoped memory for tpu_custom_call.1']
    #allocation9 [shape = 'u8[512]{0}', space=vmem, size = 0x400, scoped, tag = 'input window, operand 6, single buffered']
    #allocation10 [shape = 'u8[8192]{0}', space=vmem, size = 0x2000, scoped, tag = 'input window, operand 7, single buffered']
    #allocation11 [shape = 's32[1]{0}', space=sflag, size = 0x4, scoped, tag = 'scoped memory for tpu_custom_call.1']
    #allocation12 [shape = 'u8[512]{0}', space=vmem, size = 0x400, scoped, tag = 'input window, operand 8, single buffered']
    #allocation13 [shape = 'u8[512]{0}', space=vmem, size = 0x400, scoped, tag = 'input window, operand 10, single buffered']
    #allocation14 [shape = 's32[1]{0}', space=sflag, size = 0x4, scoped, tag = 'scoped memory for tpu_custom_call.1']
    #allocation15 [shape = 'u8[8192]{0}', space=vmem, size = 0x2000, scoped, tag = 'input window, operand 11, single buffered']
    #allocation16 [shape = 'u8[512]{0}', space=vmem, size = 0x400, scoped, tag = 'input window, operand 12, single buffered']
    #allocation17 [shape = 's32[1]{0}', space=sflag, size = 0x4, scoped, tag = 'scoped memory for tpu_custom_call.1']
    #allocation18 [shape = 'u8[8192]{0}', space=vmem, size = 0x2000, scoped, tag = 'input window, operand 15, single buffered']
    #allocation19 [shape = 'u8[8192]{0}', space=vmem, size = 0x2000, scoped, tag = 'output window, operand 0']
    #allocation20 [shape = 'u8[16384]{0}', space=vmem, size = 0x4000, scoped, tag = 'output window, operand 1']
    #allocation21 [shape = 's32[2]{0}', space=sflag, size = 0x8, scoped, tag = 'scoped memory for tpu_custom_call.1']
    #allocation22 [shape = 'u8[16384]{0}', space=vmem, size = 0x4000, scoped, tag = 'output window, operand 2']
    %33 = vsyncpa [#allocation5], 0
    %s34 = scalar_lea.sflag [#allocation5], 1
    %35 = vsyncpa %s34, 0
    %36 = vsyncpa [#allocation8], 0
    %s37 = scalar_lea.sflag [#allocation8], 1
    %38 = vsyncpa %s37, 0
    %39 = vsyncpa [#allocation11], 0
    %40 = vsyncpa [#allocation14], 0
    %41 = vsyncpa [#allocation17], 0
    %42 = vsyncpa [#allocation6], 0
    %s43 = scalar_lea.sflag [#allocation6], 1
    %44 = vsyncpa %s43, 0
    %45 = vsyncpa [#allocation21], 0
    %s46 = scalar_lea.sflag [#allocation21], 1
    %47 = vsyncpa %s46, 0
    loop: start=0, step=1, limit=4
    $region2: #{tpu_custom_call.1} parent=1 // loop_pre_header
      _
    $region3: #{tpu_custom_call.1} parent=1 // loop_header
      %s49 = sphi 0, %s53
      %p50 = scmp.ge.s32.totalorder %s49, 4
      %s56 = sphi 0, %s68
      %s57 = sphi 0, %s64
      %s58 = sphi 0, %s56
      %s59 = sphi 0, %s57
      %s60 = sphi 0, %s58
      %s61 = sphi 0, %s59
      %s73 = sphi 0, %s75
      %s76 = sphi 0, %s73
      %s77 = sphi 0, %s76
      %s93 = sphi 0, %s77
      %s99 = sphi 0, %s101
      %s102 = sphi 0, %s99
      %s103 = sphi 0, %s102
      %s119 = sphi 0, %s103
      %s125 = sphi 0, %s127
      %s128 = sphi 0, %s125
      %s129 = sphi 0, %s128
      %s145 = sphi 0, %s129
      %s149 = sphi 0, %s149
      %s151 = sphi 0, %s149
      %s152 = sphi 0, %s151
      %s166 = sphi 0, %s152
      %s170 = sphi 0, %s170
      %s172 = sphi 0, %s170
      %s173 = sphi 0, %s172
      %s187 = sphi 0, %s173
      %s191 = sphi 0, %s191
      %s193 = sphi 0, %s191
      %s194 = sphi 0, %s193
      %s208 = sphi 0, %s194
      %s212 = sphi 0, %s212
      %s214 = sphi 0, %s212
      %s215 = sphi 0, %s214
      %s229 = sphi 0, %s215
      %s233 = sphi 0, %s233
      %s235 = sphi 0, %s233
      %s236 = sphi 0, %s235
      %s250 = sphi 0, %s236
      %s254 = sphi 0, %s254
      %s256 = sphi 0, %s254
      %s257 = sphi 0, %s256
      %s271 = sphi 0, %s257
      %s275 = sphi 0, %s275
      %s277 = sphi 0, %s275
      %s278 = sphi 0, %s277
      %s292 = sphi 0, %s278
      %s296 = sphi 0, %s296
      %s298 = sphi 0, %s296
      %s299 = sphi 0, %s298
      %s313 = sphi 0, %s299
      %s317 = sphi 0, %s317
      %s319 = sphi 0, %s317
      %s320 = sphi 0, %s319
      %s334 = sphi 0, %s320
      %s338 = sphi 0, %s338
      %s340 = sphi 0, %s338
      %s341 = sphi 0, %s340
      %s355 = sphi 0, %s341
      %s359 = sphi 0, %s359
      %s361 = sphi 0, %s359
      %s362 = sphi 0, %s361
      %s376 = sphi 0, %s362
      %s380 = sphi 0, %s380
      %s382 = sphi 0, %s380
      %s383 = sphi 0, %s382
      %s397 = sphi 0, %s383
      %s401 = sphi 0, %s401
      %s403 = sphi 0, %s401
      %s404 = sphi 0, %s403
      %s418 = sphi 0, %s404
      %s422 = sphi 0, %s422
      %s424 = sphi 0, %s422
      %s425 = sphi 0, %s424
      %s439 = sphi 0, %s425
      %s443 = sphi 0, %s443
      %s445 = sphi 0, %s443
      %s446 = sphi 0, %s445
      %s460 = sphi 0, %s446
      %s464 = sphi 0, %s464
      %s466 = sphi 0, %s464
      %s467 = sphi 0, %s466
      %s481 = sphi 0, %s467
      %s485 = sphi 0, %s485
      %s487 = sphi 0, %s485
      %s488 = sphi 0, %s487
      %s502 = sphi 0, %s488
      %s506 = sphi 0, %s506
      %s508 = sphi 0, %s506
      %s509 = sphi 0, %s508
      %s523 = sphi 0, %s509
      %s527 = sphi 0, %s527
      %s529 = sphi 0, %s527
      %s530 = sphi 0, %s529
      %s544 = sphi 0, %s530
      %s548 = sphi 0, %s548
      %s550 = sphi 0, %s548
      %s551 = sphi 0, %s550
      %s565 = sphi 0, %s551
      %s569 = sphi 0, %s569
      %s571 = sphi 0, %s569
      %s572 = sphi 0, %s571
      %s586 = sphi 0, %s572
      %s590 = sphi 0, %s590
      %s592 = sphi 0, %s590
      %s593 = sphi 0, %s592
      %s607 = sphi 0, %s593
      %s615 = sphi 0, %s617
      %s618 = sphi 0, %s615
      %s619 = sphi 0, %s618
      %s635 = sphi 0, %s619
      %s643 = sphi 0, %s645
      %s646 = sphi 0, %s643
      %s647 = sphi 0, %s646
      %s663 = sphi 0, %s647
      %s671 = sphi 0, %s673
      %s674 = sphi 0, %s671
      %s675 = sphi 0, %s674
      %s691 = sphi 0, %s675
    $region4: #{tpu_custom_call.1} parent=1 // loop_header_branch
      %52 = sbr.rel (%p50) target = $region8
    $region5: #{tpu_custom_call.1} parent=1 // loop_body
      %s54 = ssub.s32 %s49, 1
      %s55 = ssub.s32 %s49, 2
      %s62 = sadd.s32 1, %s57
      %p63 = scmp.ge.s32.totalorder %s62, 1
      %s64 = scalar_select %p63, 0, %s62
      %s65 = sadd.s32 1, %s56
      %s66 = scalar_select %p63, %s65, %s56
      %p67 = scmp.ge.s32.totalorder %s66, 2
      %s68 = scalar_select %p67, 0, %s66
      %s69 = ssub.s32 %s56, %s68
      %s70 = ssub.s32 %s57, %s64
      %s71 = sor.u32 %s69, %s70
      %p72 = scmp.eq.s32.totalorder %s71, 0
      %s74 = sadd.s32 %s73, 1
      %s75 = scalar_select %p72, %s73, %s74
      %p78 = pneg %p72
      %p79 = scmp.eq.s32.totalorder %s49, 1
      %p80 = por %p78, %p79
      %p81 = scmp.ne.s32.totalorder %s73, %s76
      %p82 = scmp.eq.s32.totalorder %s49, 0
      %p83 = por %p81, %p82
      %p84 = scmp.ne.s32.totalorder %s73, %s76
      %p85 = scmp.eq.s32.totalorder %s54, 1
      %p86 = por %p84, %p85
      %p87 = scmp.ne.s32.totalorder %s76, %s77
      %p88 = scmp.eq.s32.totalorder %s54, 0
      %p89 = por %p87, %p88
      %p90 = scmp.ne.s32.totalorder %s76, %s77
      %p91 = scmp.eq.s32.totalorder %s55, 1
      %p92 = por %p90, %p91
      %p94 = scmp.ne.s32.totalorder %s77, %s93
      %p95 = scmp.eq.s32.totalorder %s55, 0
      %p96 = por %p94, %p95
      %s97 = ssub.s32 %s56, %s68
      %p98 = scmp.eq.s32.totalorder %s97, 0
      %s100 = sadd.s32 %s99, 1
      %s101 = scalar_select %p98, %s99, %s100
      %p104 = pneg %p98
      %p105 = scmp.eq.s32.totalorder %s49, 1
      %p106 = por %p104, %p105
      %p107 = scmp.ne.s32.totalorder %s99, %s102
      %p108 = scmp.eq.s32.totalorder %s49, 0
      %p109 = por %p107, %p108
      %p110 = scmp.ne.s32.totalorder %s99, %s102
      %p111 = scmp.eq.s32.totalorder %s54, 1
      %p112 = por %p110, %p111
      %p113 = scmp.ne.s32.totalorder %s102, %s103
      %p114 = scmp.eq.s32.totalorder %s54, 0
      %p115 = por %p113, %p114
      %p116 = scmp.ne.s32.totalorder %s102, %s103
      %p117 = scmp.eq.s32.totalorder %s55, 1
      %p118 = por %p116, %p117
      %p120 = scmp.ne.s32.totalorder %s103, %s119
      %p121 = scmp.eq.s32.totalorder %s55, 0
      %p122 = por %p120, %p121
      %s123 = ssub.s32 %s56, %s68
      %p124 = scmp.eq.s32.totalorder %s123, 0
      %s126 = sadd.s32 %s125, 1
      %s127 = scalar_select %p124, %s125, %s126
      %p130 = pneg %p124
      %p131 = scmp.eq.s32.totalorder %s49, 1
      %p132 = por %p130, %p131
      %p133 = scmp.ne.s32.totalorder %s125, %s128
      %p134 = scmp.eq.s32.totalorder %s49, 0
      %p135 = por %p133, %p134
      %p136 = scmp.ne.s32.totalorder %s125, %s128
      %p137 = scmp.eq.s32.totalorder %s54, 1
      %p138 = por %p136, %p137
      %p139 = scmp.ne.s32.totalorder %s128, %s129
      %p140 = scmp.eq.s32.totalorder %s54, 0
      %p141 = por %p139, %p140
      %p142 = scmp.ne.s32.totalorder %s128, %s129
      %p143 = scmp.eq.s32.totalorder %s55, 1
      %p144 = por %p142, %p143
      %p146 = scmp.ne.s32.totalorder %s129, %s145
      %p147 = scmp.eq.s32.totalorder %s55, 0
      %p148 = por %p146, %p147
      %s150 = sadd.s32 %s149, 1
      %p153 = scmp.eq.s32.totalorder %s49, 1
      %p154 = scmp.ne.s32.totalorder %s149, %s151
      %p155 = scmp.eq.s32.totalorder %s49, 0
      %p156 = por %p154, %p155
      %p157 = scmp.ne.s32.totalorder %s149, %s151
      %p158 = scmp.eq.s32.totalorder %s54, 1
      %p159 = por %p157, %p158
      %p160 = scmp.ne.s32.totalorder %s151, %s152
      %p161 = scmp.eq.s32.totalorder %s54, 0
      %p162 = por %p160, %p161
      %p163 = scmp.ne.s32.totalorder %s151, %s152
      %p164 = scmp.eq.s32.totalorder %s55, 1
      %p165 = por %p163, %p164
      %p167 = scmp.ne.s32.totalorder %s152, %s166
      %p168 = scmp.eq.s32.totalorder %s55, 0
      %p169 = por %p167, %p168
      %s171 = sadd.s32 %s170, 1
      %p174 = scmp.eq.s32.totalorder %s49, 1
      %p175 = scmp.ne.s32.totalorder %s170, %s172
      %p176 = scmp.eq.s32.totalorder %s49, 0
      %p177 = por %p175, %p176
      %p178 = scmp.ne.s32.totalorder %s170, %s172
      %p179 = scmp.eq.s32.totalorder %s54, 1
      %p180 = por %p178, %p179
      %p181 = scmp.ne.s32.totalorder %s172, %s173
      %p182 = scmp.eq.s32.totalorder %s54, 0
      %p183 = por %p181, %p182
      %p184 = scmp.ne.s32.totalorder %s172, %s173
      %p185 = scmp.eq.s32.totalorder %s55, 1
      %p186 = por %p184, %p185
      %p188 = scmp.ne.s32.totalorder %s173, %s187
      %p189 = scmp.eq.s32.totalorder %s55, 0
      %p190 = por %p188, %p189
      %s192 = sadd.s32 %s191, 1
      %p195 = scmp.eq.s32.totalorder %s49, 1
      %p196 = scmp.ne.s32.totalorder %s191, %s193
      %p197 = scmp.eq.s32.totalorder %s49, 0
      %p198 = por %p196, %p197
      %p199 = scmp.ne.s32.totalorder %s191, %s193
      %p200 = scmp.eq.s32.totalorder %s54, 1
      %p201 = por %p199, %p200
      %p202 = scmp.ne.s32.totalorder %s193, %s194
      %p203 = scmp.eq.s32.totalorder %s54, 0
      %p204 = por %p202, %p203
      %p205 = scmp.ne.s32.totalorder %s193, %s194
      %p206 = scmp.eq.s32.totalorder %s55, 1
      %p207 = por %p205, %p206
      %p209 = scmp.ne.s32.totalorder %s194, %s208
      %p210 = scmp.eq.s32.totalorder %s55, 0
      %p211 = por %p209, %p210
      %s213 = sadd.s32 %s212, 1
      %p216 = scmp.eq.s32.totalorder %s49, 1
      %p217 = scmp.ne.s32.totalorder %s212, %s214
      %p218 = scmp.eq.s32.totalorder %s49, 0
      %p219 = por %p217, %p218
      %p220 = scmp.ne.s32.totalorder %s212, %s214
      %p221 = scmp.eq.s32.totalorder %s54, 1
      %p222 = por %p220, %p221
      %p223 = scmp.ne.s32.totalorder %s214, %s215
      %p224 = scmp.eq.s32.totalorder %s54, 0
      %p225 = por %p223, %p224
      %p226 = scmp.ne.s32.totalorder %s214, %s215
      %p227 = scmp.eq.s32.totalorder %s55, 1
      %p228 = por %p226, %p227
      %p230 = scmp.ne.s32.totalorder %s215, %s229
      %p231 = scmp.eq.s32.totalorder %s55, 0
      %p232 = por %p230, %p231
      %s234 = sadd.s32 %s233, 1
      %p237 = scmp.eq.s32.totalorder %s49, 1
      %p238 = scmp.ne.s32.totalorder %s233, %s235
      %p239 = scmp.eq.s32.totalorder %s49, 0
      %p240 = por %p238, %p239
      %p241 = scmp.ne.s32.totalorder %s233, %s235
      %p242 = scmp.eq.s32.totalorder %s54, 1
      %p243 = por %p241, %p242
      %p244 = scmp.ne.s32.totalorder %s235, %s236
      %p245 = scmp.eq.s32.totalorder %s54, 0
      %p246 = por %p244, %p245
      %p247 = scmp.ne.s32.totalorder %s235, %s236
      %p248 = scmp.eq.s32.totalorder %s55, 1
      %p249 = por %p247, %p248
      %p251 = scmp.ne.s32.totalorder %s236, %s250
      %p252 = scmp.eq.s32.totalorder %s55, 0
      %p253 = por %p251, %p252
      %s255 = sadd.s32 %s254, 1
      %p258 = scmp.eq.s32.totalorder %s49, 1
      %p259 = scmp.ne.s32.totalorder %s254, %s256
      %p260 = scmp.eq.s32.totalorder %s49, 0
      %p261 = por %p259, %p260
      %p262 = scmp.ne.s32.totalorder %s254, %s256
      %p263 = scmp.eq.s32.totalorder %s54, 1
      %p264 = por %p262, %p263
      %p265 = scmp.ne.s32.totalorder %s256, %s257
      %p266 = scmp.eq.s32.totalorder %s54, 0
      %p267 = por %p265, %p266
      %p268 = scmp.ne.s32.totalorder %s256, %s257
      %p269 = scmp.eq.s32.totalorder %s55, 1
      %p270 = por %p268, %p269
      %p272 = scmp.ne.s32.totalorder %s257, %s271
      %p273 = scmp.eq.s32.totalorder %s55, 0
      %p274 = por %p272, %p273
      %s276 = sadd.s32 %s275, 1
      %p279 = scmp.eq.s32.totalorder %s49, 1
      %p280 = scmp.ne.s32.totalorder %s275, %s277
      %p281 = scmp.eq.s32.totalorder %s49, 0
      %p282 = por %p280, %p281
      %p283 = scmp.ne.s32.totalorder %s275, %s277
      %p284 = scmp.eq.s32.totalorder %s54, 1
      %p285 = por %p283, %p284
      %p286 = scmp.ne.s32.totalorder %s277, %s278
      %p287 = scmp.eq.s32.totalorder %s54, 0
      %p288 = por %p286, %p287
      %p289 = scmp.ne.s32.totalorder %s277, %s278
      %p290 = scmp.eq.s32.totalorder %s55, 1
      %p291 = por %p289, %p290
      %p293 = scmp.ne.s32.totalorder %s278, %s292
      %p294 = scmp.eq.s32.totalorder %s55, 0
      %p295 = por %p293, %p294
      %s297 = sadd.s32 %s296, 1
      %p300 = scmp.eq.s32.totalorder %s49, 1
      %p301 = scmp.ne.s32.totalorder %s296, %s298
      %p302 = scmp.eq.s32.totalorder %s49, 0
      %p303 = por %p301, %p302
      %p304 = scmp.ne.s32.totalorder %s296, %s298
      %p305 = scmp.eq.s32.totalorder %s54, 1
      %p306 = por %p304, %p305
      %p307 = scmp.ne.s32.totalorder %s298, %s299
      %p308 = scmp.eq.s32.totalorder %s54, 0
      %p309 = por %p307, %p308
      %p310 = scmp.ne.s32.totalorder %s298, %s299
      %p311 = scmp.eq.s32.totalorder %s55, 1
      %p312 = por %p310, %p311
      %p314 = scmp.ne.s32.totalorder %s299, %s313
      %p315 = scmp.eq.s32.totalorder %s55, 0
      %p316 = por %p314, %p315
      %s318 = sadd.s32 %s317, 1
      %p321 = scmp.eq.s32.totalorder %s49, 1
      %p322 = scmp.ne.s32.totalorder %s317, %s319
      %p323 = scmp.eq.s32.totalorder %s49, 0
      %p324 = por %p322, %p323
      %p325 = scmp.ne.s32.totalorder %s317, %s319
      %p326 = scmp.eq.s32.totalorder %s54, 1
      %p327 = por %p325, %p326
      %p328 = scmp.ne.s32.totalorder %s319, %s320
      %p329 = scmp.eq.s32.totalorder %s54, 0
      %p330 = por %p328, %p329
      %p331 = scmp.ne.s32.totalorder %s319, %s320
      %p332 = scmp.eq.s32.totalorder %s55, 1
      %p333 = por %p331, %p332
      %p335 = scmp.ne.s32.totalorder %s320, %s334
      %p336 = scmp.eq.s32.totalorder %s55, 0
      %p337 = por %p335, %p336
      %s339 = sadd.s32 %s338, 1
      %p342 = scmp.eq.s32.totalorder %s49, 1
      %p343 = scmp.ne.s32.totalorder %s338, %s340
      %p344 = scmp.eq.s32.totalorder %s49, 0
      %p345 = por %p343, %p344
      %p346 = scmp.ne.s32.totalorder %s338, %s340
      %p347 = scmp.eq.s32.totalorder %s54, 1
      %p348 = por %p346, %p347
      %p349 = scmp.ne.s32.totalorder %s340, %s341
      %p350 = scmp.eq.s32.totalorder %s54, 0
      %p351 = por %p349, %p350
      %p352 = scmp.ne.s32.totalorder %s340, %s341
      %p353 = scmp.eq.s32.totalorder %s55, 1
      %p354 = por %p352, %p353
      %p356 = scmp.ne.s32.totalorder %s341, %s355
      %p357 = scmp.eq.s32.totalorder %s55, 0
      %p358 = por %p356, %p357
      %s360 = sadd.s32 %s359, 1
      %p363 = scmp.eq.s32.totalorder %s49, 1
      %p364 = scmp.ne.s32.totalorder %s359, %s361
      %p365 = scmp.eq.s32.totalorder %s49, 0
      %p366 = por %p364, %p365
      %p367 = scmp.ne.s32.totalorder %s359, %s361
      %p368 = scmp.eq.s32.totalorder %s54, 1
      %p369 = por %p367, %p368
      %p370 = scmp.ne.s32.totalorder %s361, %s362
      %p371 = scmp.eq.s32.totalorder %s54, 0
      %p372 = por %p370, %p371
      %p373 = scmp.ne.s32.totalorder %s361, %s362
      %p374 = scmp.eq.s32.totalorder %s55, 1
      %p375 = por %p373, %p374
      %p377 = scmp.ne.s32.totalorder %s362, %s376
      %p378 = scmp.eq.s32.totalorder %s55, 0
      %p379 = por %p377, %p378
      %s381 = sadd.s32 %s380, 1
      %p384 = scmp.eq.s32.totalorder %s49, 1
      %p385 = scmp.ne.s32.totalorder %s380, %s382
      %p386 = scmp.eq.s32.totalorder %s49, 0
      %p387 = por %p385, %p386
      %p388 = scmp.ne.s32.totalorder %s380, %s382
      %p389 = scmp.eq.s32.totalorder %s54, 1
      %p390 = por %p388, %p389
      %p391 = scmp.ne.s32.totalorder %s382, %s383
      %p392 = scmp.eq.s32.totalorder %s54, 0
      %p393 = por %p391, %p392
      %p394 = scmp.ne.s32.totalorder %s382, %s383
      %p395 = scmp.eq.s32.totalorder %s55, 1
      %p396 = por %p394, %p395
      %p398 = scmp.ne.s32.totalorder %s383, %s397
      %p399 = scmp.eq.s32.totalorder %s55, 0
      %p400 = por %p398, %p399
      %s402 = sadd.s32 %s401, 1
      %p405 = scmp.eq.s32.totalorder %s49, 1
      %p406 = scmp.ne.s32.totalorder %s401, %s403
      %p407 = scmp.eq.s32.totalorder %s49, 0
      %p408 = por %p406, %p407
      %p409 = scmp.ne.s32.totalorder %s401, %s403
      %p410 = scmp.eq.s32.totalorder %s54, 1
      %p411 = por %p409, %p410
      %p412 = scmp.ne.s32.totalorder %s403, %s404
      %p413 = scmp.eq.s32.totalorder %s54, 0
      %p414 = por %p412, %p413
      %p415 = scmp.ne.s32.totalorder %s403, %s404
      %p416 = scmp.eq.s32.totalorder %s55, 1
      %p417 = por %p415, %p416
      %p419 = scmp.ne.s32.totalorder %s404, %s418
      %p420 = scmp.eq.s32.totalorder %s55, 0
      %p421 = por %p419, %p420
      %s423 = sadd.s32 %s422, 1
      %p426 = scmp.eq.s32.totalorder %s49, 1
      %p427 = scmp.ne.s32.totalorder %s422, %s424
      %p428 = scmp.eq.s32.totalorder %s49, 0
      %p429 = por %p427, %p428
      %p430 = scmp.ne.s32.totalorder %s422, %s424
      %p431 = scmp.eq.s32.totalorder %s54, 1
      %p432 = por %p430, %p431
      %p433 = scmp.ne.s32.totalorder %s424, %s425
      %p434 = scmp.eq.s32.totalorder %s54, 0
      %p435 = por %p433, %p434
      %p436 = scmp.ne.s32.totalorder %s424, %s425
      %p437 = scmp.eq.s32.totalorder %s55, 1
      %p438 = por %p436, %p437
      %p440 = scmp.ne.s32.totalorder %s425, %s439
      %p441 = scmp.eq.s32.totalorder %s55, 0
      %p442 = por %p440, %p441
      %s444 = sadd.s32 %s443, 1
      %p447 = scmp.eq.s32.totalorder %s49, 1
      %p448 = scmp.ne.s32.totalorder %s443, %s445
      %p449 = scmp.eq.s32.totalorder %s49, 0
      %p450 = por %p448, %p449
      %p451 = scmp.ne.s32.totalorder %s443, %s445
      %p452 = scmp.eq.s32.totalorder %s54, 1
      %p453 = por %p451, %p452
      %p454 = scmp.ne.s32.totalorder %s445, %s446
      %p455 = scmp.eq.s32.totalorder %s54, 0
      %p456 = por %p454, %p455
      %p457 = scmp.ne.s32.totalorder %s445, %s446
      %p458 = scmp.eq.s32.totalorder %s55, 1
      %p459 = por %p457, %p458
      %p461 = scmp.ne.s32.totalorder %s446, %s460
      %p462 = scmp.eq.s32.totalorder %s55, 0
      %p463 = por %p461, %p462
      %s465 = sadd.s32 %s464, 1
      %p468 = scmp.eq.s32.totalorder %s49, 1
      %p469 = scmp.ne.s32.totalorder %s464, %s466
      %p470 = scmp.eq.s32.totalorder %s49, 0
      %p471 = por %p469, %p470
      %p472 = scmp.ne.s32.totalorder %s464, %s466
      %p473 = scmp.eq.s32.totalorder %s54, 1
      %p474 = por %p472, %p473
      %p475 = scmp.ne.s32.totalorder %s466, %s467
      %p476 = scmp.eq.s32.totalorder %s54, 0
      %p477 = por %p475, %p476
      %p478 = scmp.ne.s32.totalorder %s466, %s467
      %p479 = scmp.eq.s32.totalorder %s55, 1
      %p480 = por %p478, %p479
      %p482 = scmp.ne.s32.totalorder %s467, %s481
      %p483 = scmp.eq.s32.totalorder %s55, 0
      %p484 = por %p482, %p483
      %s486 = sadd.s32 %s485, 1
      %p489 = scmp.eq.s32.totalorder %s49, 1
      %p490 = scmp.ne.s32.totalorder %s485, %s487
      %p491 = scmp.eq.s32.totalorder %s49, 0
      %p492 = por %p490, %p491
      %p493 = scmp.ne.s32.totalorder %s485, %s487
      %p494 = scmp.eq.s32.totalorder %s54, 1
      %p495 = por %p493, %p494
      %p496 = scmp.ne.s32.totalorder %s487, %s488
      %p497 = scmp.eq.s32.totalorder %s54, 0
      %p498 = por %p496, %p497
      %p499 = scmp.ne.s32.totalorder %s487, %s488
      %p500 = scmp.eq.s32.totalorder %s55, 1
      %p501 = por %p499, %p500
      %p503 = scmp.ne.s32.totalorder %s488, %s502
      %p504 = scmp.eq.s32.totalorder %s55, 0
      %p505 = por %p503, %p504
      %s507 = sadd.s32 %s506, 1
      %p510 = scmp.eq.s32.totalorder %s49, 1
      %p511 = scmp.ne.s32.totalorder %s506, %s508
      %p512 = scmp.eq.s32.totalorder %s49, 0
      %p513 = por %p511, %p512
      %p514 = scmp.ne.s32.totalorder %s506, %s508
      %p515 = scmp.eq.s32.totalorder %s54, 1
      %p516 = por %p514, %p515
      %p517 = scmp.ne.s32.totalorder %s508, %s509
      %p518 = scmp.eq.s32.totalorder %s54, 0
      %p519 = por %p517, %p518
      %p520 = scmp.ne.s32.totalorder %s508, %s509
      %p521 = scmp.eq.s32.totalorder %s55, 1
      %p522 = por %p520, %p521
      %p524 = scmp.ne.s32.totalorder %s509, %s523
      %p525 = scmp.eq.s32.totalorder %s55, 0
      %p526 = por %p524, %p525
      %s528 = sadd.s32 %s527, 1
      %p531 = scmp.eq.s32.totalorder %s49, 1
      %p532 = scmp.ne.s32.totalorder %s527, %s529
      %p533 = scmp.eq.s32.totalorder %s49, 0
      %p534 = por %p532, %p533
      %p535 = scmp.ne.s32.totalorder %s527, %s529
      %p536 = scmp.eq.s32.totalorder %s54, 1
      %p537 = por %p535, %p536
      %p538 = scmp.ne.s32.totalorder %s529, %s530
      %p539 = scmp.eq.s32.totalorder %s54, 0
      %p540 = por %p538, %p539
      %p541 = scmp.ne.s32.totalorder %s529, %s530
      %p542 = scmp.eq.s32.totalorder %s55, 1
      %p543 = por %p541, %p542
      %p545 = scmp.ne.s32.totalorder %s530, %s544
      %p546 = scmp.eq.s32.totalorder %s55, 0
      %p547 = por %p545, %p546
      %s549 = sadd.s32 %s548, 1
      %p552 = scmp.eq.s32.totalorder %s49, 1
      %p553 = scmp.ne.s32.totalorder %s548, %s550
      %p554 = scmp.eq.s32.totalorder %s49, 0
      %p555 = por %p553, %p554
      %p556 = scmp.ne.s32.totalorder %s548, %s550
      %p557 = scmp.eq.s32.totalorder %s54, 1
      %p558 = por %p556, %p557
      %p559 = scmp.ne.s32.totalorder %s550, %s551
      %p560 = scmp.eq.s32.totalorder %s54, 0
      %p561 = por %p559, %p560
      %p562 = scmp.ne.s32.totalorder %s550, %s551
      %p563 = scmp.eq.s32.totalorder %s55, 1
      %p564 = por %p562, %p563
      %p566 = scmp.ne.s32.totalorder %s551, %s565
      %p567 = scmp.eq.s32.totalorder %s55, 0
      %p568 = por %p566, %p567
      %s570 = sadd.s32 %s569, 1
      %p573 = scmp.eq.s32.totalorder %s49, 1
      %p574 = scmp.ne.s32.totalorder %s569, %s571
      %p575 = scmp.eq.s32.totalorder %s49, 0
      %p576 = por %p574, %p575
      %p577 = scmp.ne.s32.totalorder %s569, %s571
      %p578 = scmp.eq.s32.totalorder %s54, 1
      %p579 = por %p577, %p578
      %p580 = scmp.ne.s32.totalorder %s571, %s572
      %p581 = scmp.eq.s32.totalorder %s54, 0
      %p582 = por %p580, %p581
      %p583 = scmp.ne.s32.totalorder %s571, %s572
      %p584 = scmp.eq.s32.totalorder %s55, 1
      %p585 = por %p583, %p584
      %p587 = scmp.ne.s32.totalorder %s572, %s586
      %p588 = scmp.eq.s32.totalorder %s55, 0
      %p589 = por %p587, %p588
      %s591 = sadd.s32 %s590, 1
      %p594 = scmp.eq.s32.totalorder %s49, 1
      %p595 = scmp.ne.s32.totalorder %s590, %s592
      %p596 = scmp.eq.s32.totalorder %s49, 0
      %p597 = por %p595, %p596
      %p598 = scmp.ne.s32.totalorder %s590, %s592
      %p599 = scmp.eq.s32.totalorder %s54, 1
      %p600 = por %p598, %p599
      %p601 = scmp.ne.s32.totalorder %s592, %s593
      %p602 = scmp.eq.s32.totalorder %s54, 0
      %p603 = por %p601, %p602
      %p604 = scmp.ne.s32.totalorder %s592, %s593
      %p605 = scmp.eq.s32.totalorder %s55, 1
      %p606 = por %p604, %p605
      %p608 = scmp.ne.s32.totalorder %s593, %s607
      %p609 = scmp.eq.s32.totalorder %s55, 0
      %p610 = por %p608, %p609
      %s611 = ssub.s32 %s56, %s68
      %s612 = ssub.s32 %s57, %s64
      %s613 = sor.u32 %s611, %s612
      %p614 = scmp.eq.s32.totalorder %s613, 0
      %s616 = sadd.s32 %s615, 1
      %s617 = scalar_select %p614, %s615, %s616
      %p620 = pneg %p614
      %p621 = scmp.eq.s32.totalorder %s49, 1
      %p622 = por %p620, %p621
      %p623 = scmp.ne.s32.totalorder %s615, %s618
      %p624 = scmp.eq.s32.totalorder %s49, 0
      %p625 = por %p623, %p624
      %p626 = scmp.ne.s32.totalorder %s615, %s618
      %p627 = scmp.eq.s32.totalorder %s54, 1
      %p628 = por %p626, %p627
      %p629 = scmp.ne.s32.totalorder %s618, %s619
      %p630 = scmp.eq.s32.totalorder %s54, 0
      %p631 = por %p629, %p630
      %p632 = scmp.ne.s32.totalorder %s618, %s619
      %p633 = scmp.eq.s32.totalorder %s55, 1
      %p634 = por %p632, %p633
      %p636 = scmp.ne.s32.totalorder %s619, %s635
      %p637 = scmp.eq.s32.totalorder %s55, 0
      %p638 = por %p636, %p637
      %s639 = ssub.s32 %s56, %s68
      %s640 = ssub.s32 %s57, %s64
      %s641 = sor.u32 %s639, %s640
      %p642 = scmp.eq.s32.totalorder %s641, 0
      %s644 = sadd.s32 %s643, 1
      %s645 = scalar_select %p642, %s643, %s644
      %p648 = pneg %p642
      %p649 = scmp.eq.s32.totalorder %s49, 1
      %p650 = por %p648, %p649
      %p651 = scmp.ne.s32.totalorder %s643, %s646
      %p652 = scmp.eq.s32.totalorder %s49, 0
      %p653 = por %p651, %p652
      %p654 = scmp.ne.s32.totalorder %s643, %s646
      %p655 = scmp.eq.s32.totalorder %s54, 1
      %p656 = por %p654, %p655
      %p657 = scmp.ne.s32.totalorder %s646, %s647
      %p658 = scmp.eq.s32.totalorder %s54, 0
      %p659 = por %p657, %p658
      %p660 = scmp.ne.s32.totalorder %s646, %s647
      %p661 = scmp.eq.s32.totalorder %s55, 1
      %p662 = por %p660, %p661
      %p664 = scmp.ne.s32.totalorder %s647, %s663
      %p665 = scmp.eq.s32.totalorder %s55, 0
      %p666 = por %p664, %p665
      %s667 = ssub.s32 %s56, %s68
      %s668 = ssub.s32 %s57, %s64
      %s669 = sor.u32 %s667, %s668
      %p670 = scmp.eq.s32.totalorder %s669, 0
      %s672 = sadd.s32 %s671, 1
      %s673 = scalar_select %p670, %s671, %s672
      %p676 = pneg %p670
      %p677 = scmp.eq.s32.totalorder %s49, 1
      %p678 = por %p676, %p677
      %p679 = scmp.ne.s32.totalorder %s671, %s674
      %p680 = scmp.eq.s32.totalorder %s49, 0
      %p681 = por %p679, %p680
      %p682 = scmp.ne.s32.totalorder %s671, %s674
      %p683 = scmp.eq.s32.totalorder %s54, 1
      %p684 = por %p682, %p683
      %p685 = scmp.ne.s32.totalorder %s674, %s675
      %p686 = scmp.eq.s32.totalorder %s54, 0
      %p687 = por %p685, %p686
      %p688 = scmp.ne.s32.totalorder %s674, %s675
      %p689 = scmp.eq.s32.totalorder %s55, 1
      %p690 = por %p688, %p689
      %p692 = scmp.ne.s32.totalorder %s675, %s691
      %p693 = scmp.eq.s32.totalorder %s55, 0
      %p694 = por %p692, %p693
      %p695 = scmp.le.s32.totalorder 1, %s49
      %p696 = scmp.lt.s32.totalorder %s49, 3
      %p697 = pnand %p695, %p696
      %p698 = pneg %p697
      // Predicated region
      $region9: #{tpu_custom_call.1} parent=5 // pred_check
        _
      $region10: #{tpu_custom_call.1} parent=5 // pred_check_branch
        %700 = sbr.rel (%p697) target = $region12
      $region11: #{tpu_custom_call.1} parent=5 // pred_region
        %s701 = ssub.s32 %s49, 1
        // Predicated region
        $region13: #{tpu_custom_call.1} parent=11 // pred_check
          %p702 = pneg %p162
        $region14: #{tpu_custom_call.1} parent=11 // pred_check_branch
          %704 = sbr.rel (%p702) target = $region16
        $region15: #{tpu_custom_call.1} parent=11 // pred_region
          _
        $region16: #{tpu_custom_call.1} parent=11 // pred_fallthru
          _
        // Predicated region
        $region17: #{tpu_custom_call.1} parent=11 // pred_check
          %p705 = pneg %p183
        $region18: #{tpu_custom_call.1} parent=11 // pred_check_branch
          %707 = sbr.rel (%p705) target = $region20
        $region19: #{tpu_custom_call.1} parent=11 // pred_region
          _
        $region20: #{tpu_custom_call.1} parent=11 // pred_fallthru
          _
        // Predicated region
        $region21: #{tpu_custom_call.1} parent=11 // pred_check
          %p708 = pneg %p204
        $region22: #{tpu_custom_call.1} parent=11 // pred_check_branch
          %710 = sbr.rel (%p708) target = $region24
        $region23: #{tpu_custom_call.1} parent=11 // pred_region
          _
        $region24: #{tpu_custom_call.1} parent=11 // pred_fallthru
          _
        // Predicated region
        $region25: #{tpu_custom_call.1} parent=11 // pred_check
          %p711 = pneg %p225
        $region26: #{tpu_custom_call.1} parent=11 // pred_check_branch
          %713 = sbr.rel (%p711) target = $region28
        $region27: #{tpu_custom_call.1} parent=11 // pred_region
          %s715 = ssub.s32 16, 16
          %716 = vsyncadd [#allocation8], %s715
          %s718 = sshll.u32 [#allocation9], 4
          %s719 = int_to_ptr.vmem [resolvable:$true] %s718
          %721 = dma.hbm_to_vmem [thread:$0]  %s6, 16, %s719, [#allocation8]
        $region28: #{tpu_custom_call.1} parent=11 // pred_fallthru
          _
        // Predicated region
        $region29: #{tpu_custom_call.1} parent=11 // pred_check
          %p722 = pneg %p246
        $region30: #{tpu_custom_call.1} parent=11 // pred_check_branch
          %724 = sbr.rel (%p722) target = $region32
        $region31: #{tpu_custom_call.1} parent=11 // pred_region
          %s726 = ssub.s32 256, 256
          %727 = vsyncadd [#allocation11], %s726
          %s728 = sshll.u32 [#allocation10], 4
          %s729 = int_to_ptr.vmem [resolvable:$true] %s728
          %734 = dma.hbm_to_vmem [thread:$0]  %s7, 256, %s729, [#allocation11], 64, 64, 4
        $region32: #{tpu_custom_call.1} parent=11 // pred_fallthru
          _
        // Predicated region
        $region33: #{tpu_custom_call.1} parent=11 // pred_check
          %p735 = pneg %p267
        $region34: #{tpu_custom_call.1} parent=11 // pred_check_branch
          %737 = sbr.rel (%p735) target = $region36
        $region35: #{tpu_custom_call.1} parent=11 // pred_region
          %s739 = ssub.s32 16, 16
          %740 = vsyncadd [#allocation11], %s739
          %s742 = sshll.u32 [#allocation12], 4
          %s743 = int_to_ptr.vmem [resolvable:$true] %s742
          %745 = dma.hbm_to_vmem [thread:$0]  %s8, 16, %s743, [#allocation11]
        $region36: #{tpu_custom_call.1} parent=11 // pred_fallthru
          _
        // Predicated region
        $region37: #{tpu_custom_call.1} parent=11 // pred_check
          %p746 = pneg %p288
        $region38: #{tpu_custom_call.1} parent=11 // pred_check_branch
          %748 = sbr.rel (%p746) target = $region40
        $region39: #{tpu_custom_call.1} parent=11 // pred_region
          _
        $region40: #{tpu_custom_call.1} parent=11 // pred_fallthru
          _
        // Predicated region
        $region41: #{tpu_custom_call.1} parent=11 // pred_check
          %p749 = pneg %p309
        $region42: #{tpu_custom_call.1} parent=11 // pred_check_branch
          %751 = sbr.rel (%p749) target = $region44
        $region43: #{tpu_custom_call.1} parent=11 // pred_region
          %s753 = ssub.s32 16, 16
          %754 = vsyncadd [#allocation14], %s753
          %s756 = sshll.u32 [#allocation13], 4
          %s757 = int_to_ptr.vmem [resolvable:$true] %s756
          %759 = dma.hbm_to_vmem [thread:$0]  %s10, 16, %s757, [#allocation14]
        $region44: #{tpu_custom_call.1} parent=11 // pred_fallthru
          _
        // Predicated region
        $region45: #{tpu_custom_call.1} parent=11 // pred_check
          %p760 = pneg %p330
        $region46: #{tpu_custom_call.1} parent=11 // pred_check_branch
          %762 = sbr.rel (%p760) target = $region48
        $region47: #{tpu_custom_call.1} parent=11 // pred_region
          %s764 = ssub.s32 256, 256
          %765 = vsyncadd [#allocation14], %s764
          %s766 = sshll.u32 [#allocation15], 4
          %s767 = int_to_ptr.vmem [resolvable:$true] %s766
          %772 = dma.hbm_to_vmem [thread:$0]  %s11, 256, %s767, [#allocation14], 64, 64, 4
        $region48: #{tpu_custom_call.1} parent=11 // pred_fallthru
          _
        // Predicated region
        $region49: #{tpu_custom_call.1} parent=11 // pred_check
          %p773 = pneg %p351
        $region50: #{tpu_custom_call.1} parent=11 // pred_check_branch
          %775 = sbr.rel (%p773) target = $region52
        $region51: #{tpu_custom_call.1} parent=11 // pred_region
          %s777 = ssub.s32 16, 16
          %778 = vsyncadd [#allocation17], %s777
          %s780 = sshll.u32 [#allocation16], 4
          %s781 = int_to_ptr.vmem [resolvable:$true] %s780
          %783 = dma.hbm_to_vmem [thread:$0]  %s12, 16, %s781, [#allocation17]
        $region52: #{tpu_custom_call.1} parent=11 // pred_fallthru
          _
        // Predicated region
        $region53: #{tpu_custom_call.1} parent=11 // pred_check
          %p784 = pneg %p372
        $region54: #{tpu_custom_call.1} parent=11 // pred_check_branch
          %786 = sbr.rel (%p784) target = $region56
        $region55: #{tpu_custom_call.1} parent=11 // pred_region
          _
        $region56: #{tpu_custom_call.1} parent=11 // pred_fallthru
          _
        // Predicated region
        $region57: #{tpu_custom_call.1} parent=11 // pred_check
          %p787 = pneg %p393
        $region58: #{tpu_custom_call.1} parent=11 // pred_check_branch
          %789 = sbr.rel (%p787) target = $region60
        $region59: #{tpu_custom_call.1} parent=11 // pred_region
          _
        $region60: #{tpu_custom_call.1} parent=11 // pred_fallthru
          _
        // Predicated region
        $region61: #{tpu_custom_call.1} parent=11 // pred_check
          %p790 = pneg %p414
        $region62: #{tpu_custom_call.1} parent=11 // pred_check_branch
          %792 = sbr.rel (%p790) target = $region64
        $region63: #{tpu_custom_call.1} parent=11 // pred_region
          %s794 = ssub.s32 256, 256
          %795 = vsyncadd [#allocation17], %s794
          %s796 = sshll.u32 [#allocation18], 4
          %s797 = int_to_ptr.vmem [resolvable:$true] %s796
          %802 = dma.hbm_to_vmem [thread:$0]  %s15, 256, %s797, [#allocation17], 64, 64, 4
        $region64: #{tpu_custom_call.1} parent=11 // pred_fallthru
          _
        // Predicated region
        $region65: #{tpu_custom_call.1} parent=11 // pred_check
          %p803 = pneg %p435
        $region66: #{tpu_custom_call.1} parent=11 // pred_check_branch
          %805 = sbr.rel (%p803) target = $region68
        $region67: #{tpu_custom_call.1} parent=11 // pred_region
          _
        $region68: #{tpu_custom_call.1} parent=11 // pred_fallthru
          _
        // Predicated region
        $region69: #{tpu_custom_call.1} parent=11 // pred_check
          %p806 = pneg %p456
        $region70: #{tpu_custom_call.1} parent=11 // pred_check_branch
          %808 = sbr.rel (%p806) target = $region72
        $region71: #{tpu_custom_call.1} parent=11 // pred_region
          _
        $region72: #{tpu_custom_call.1} parent=11 // pred_fallthru
          _
        // Predicated region
        $region73: #{tpu_custom_call.1} parent=11 // pred_check
          %p809 = pneg %p477
        $region74: #{tpu_custom_call.1} parent=11 // pred_check_branch
          %811 = sbr.rel (%p809) target = $region76
        $region75: #{tpu_custom_call.1} parent=11 // pred_region
          _
        $region76: #{tpu_custom_call.1} parent=11 // pred_fallthru
          _
        // Predicated region
        $region77: #{tpu_custom_call.1} parent=11 // pred_check
          %p812 = pneg %p498
        $region78: #{tpu_custom_call.1} parent=11 // pred_check_branch
          %814 = sbr.rel (%p812) target = $region80
        $region79: #{tpu_custom_call.1} parent=11 // pred_region
          _
        $region80: #{tpu_custom_call.1} parent=11 // pred_fallthru
          _
        // Predicated region
        $region81: #{tpu_custom_call.1} parent=11 // pred_check
          %p815 = pneg %p519
        $region82: #{tpu_custom_call.1} parent=11 // pred_check_branch
          %817 = sbr.rel (%p815) target = $region84
        $region83: #{tpu_custom_call.1} parent=11 // pred_region
          _
        $region84: #{tpu_custom_call.1} parent=11 // pred_fallthru
          _
        // Predicated region
        $region85: #{tpu_custom_call.1} parent=11 // pred_check
          %p818 = pneg %p540
        $region86: #{tpu_custom_call.1} parent=11 // pred_check_branch
          %820 = sbr.rel (%p818) target = $region88
        $region87: #{tpu_custom_call.1} parent=11 // pred_region
          _
        $region88: #{tpu_custom_call.1} parent=11 // pred_fallthru
          _
        // Predicated region
        $region89: #{tpu_custom_call.1} parent=11 // pred_check
          %p821 = pneg %p561
        $region90: #{tpu_custom_call.1} parent=11 // pred_check_branch
          %823 = sbr.rel (%p821) target = $region92
        $region91: #{tpu_custom_call.1} parent=11 // pred_region
          _
        $region92: #{tpu_custom_call.1} parent=11 // pred_fallthru
          _
        // Predicated region
        $region93: #{tpu_custom_call.1} parent=11 // pred_check
          %p824 = pneg %p582
        $region94: #{tpu_custom_call.1} parent=11 // pred_check_branch
          %826 = sbr.rel (%p824) target = $region96
        $region95: #{tpu_custom_call.1} parent=11 // pred_region
          _
        $region96: #{tpu_custom_call.1} parent=11 // pred_fallthru
          _
        // Predicated region
        $region97: #{tpu_custom_call.1} parent=11 // pred_check
          %p827 = pneg %p603
        $region98: #{tpu_custom_call.1} parent=11 // pred_check_branch
          %829 = sbr.rel (%p827) target = $region100
        $region99: #{tpu_custom_call.1} parent=11 // pred_region
          _
        $region100: #{tpu_custom_call.1} parent=11 // pred_fallthru
          _
      $region12: #{tpu_custom_call.1} parent=5 // pred_fallthru
        _
      %p830 = scmp.lt.s32.totalorder %s49, 2
      // Predicated region
      $region101: #{tpu_custom_call.1} parent=5 // pred_check
        %p831 = pneg %p830
      $region102: #{tpu_custom_call.1} parent=5 // pred_check_branch
        %833 = sbr.rel (%p831) target = $region104
      $region103: #{tpu_custom_call.1} parent=5 // pred_region
        // Predicated region
        $region105: #{tpu_custom_call.1} parent=103 // pred_check
          %p834 = pneg %p83
        $region106: #{tpu_custom_call.1} parent=103 // pred_check_branch
          %836 = sbr.rel (%p834) target = $region108
        $region107: #{tpu_custom_call.1} parent=103 // pred_region
          %p837 = scmp.lt.s32.totalorder %s56, 1
          %s838 = scalar_select %p837, %s56, 1
          %p839 = scmp.lt.s32.totalorder %s57, 0
          %s840 = scalar_select %p839, %s57, 0
          %s841 = sadd.s32 %s840, %s838
          %s842 = smul.addr %s841, 8
          %s843 = scalar_lea.vmem %s0, %s842
        $region108: #{tpu_custom_call.1} parent=103 // pred_fallthru
          _
        // Predicated region
        $region109: #{tpu_custom_call.1} parent=103 // pred_check
          %p844 = pneg %p109
        $region110: #{tpu_custom_call.1} parent=103 // pred_check_branch
          %846 = sbr.rel (%p844) target = $region112
        $region111: #{tpu_custom_call.1} parent=103 // pred_region
          %s847 = sand.u32 %s99, 1
          %s848 = scalar_lea.sflag [#allocation5], %s847
          %s849 = sand.u32 %s99, 1
          %s850 = smul.addr %s849, 4
          %s851 = scalar_lea.vmem [#allocation4], %s850
          %s853 = ssub.s32 64, 64
          %854 = vsyncadd %s848, %s853
          %s855 = smul.addr %s56, 64
          %s856 = scalar_lea.hbm %s1, %s855
          %s858 = sshll.u32 %s851, 4
          %s859 = int_to_ptr.vmem [resolvable:$true] %s858
          %861 = dma.hbm_to_vmem [thread:$0]  %s856, 64, %s859, %s848
        $region112: #{tpu_custom_call.1} parent=103 // pred_fallthru
          _
        // Predicated region
        $region113: #{tpu_custom_call.1} parent=103 // pred_check
          %p862 = pneg %p135
        $region114: #{tpu_custom_call.1} parent=103 // pred_check_branch
          %864 = sbr.rel (%p862) target = $region116
        $region115: #{tpu_custom_call.1} parent=103 // pred_region
          %s865 = sand.u32 %s49, 1
          %s866 = scalar_lea.sflag [#allocation8], %s865
          %s867 = sand.u32 %s125, 1
          %s868 = smul.addr %s867, 4
          %s869 = scalar_lea.vmem [#allocation7], %s868
          %s871 = ssub.s32 64, 64
          %872 = vsyncadd %s866, %s871
          %s873 = smul.addr %s56, 64
          %s874 = scalar_lea.hbm %s2, %s873
          %s876 = sshll.u32 %s869, 4
          %s877 = int_to_ptr.vmem [resolvable:$true] %s876
          %879 = dma.hbm_to_vmem [thread:$0]  %s874, 64, %s877, %s866
        $region116: #{tpu_custom_call.1} parent=103 // pred_fallthru
          _
      $region104: #{tpu_custom_call.1} parent=5 // pred_fallthru
        _
      %p880 = scmp.le.s32.totalorder 1, %s49
      %p881 = scmp.lt.s32.totalorder %s49, 3
      %p882 = pnand %p880, %p881
      %p883 = pneg %p882
      // Predicated region
      $region117: #{tpu_custom_call.1} parent=5 // pred_check
        _
      $region118: #{tpu_custom_call.1} parent=5 // pred_check_branch
        %885 = sbr.rel (%p882) target = $region120
      $region119: #{tpu_custom_call.1} parent=5 // pred_region
        %s886 = ssub.s32 %s49, 1
        %s887 = sand.u32 %s102, 1
        %s888 = scalar_lea.sflag [#allocation5], %s887
        %s889 = sand.u32 %s102, 1
        %s890 = smul.addr %s889, 4
        %s891 = scalar_lea.vmem [#allocation4], %s890
        // Predicated region
        $region121: #{tpu_custom_call.1} parent=119 // pred_check
          %p892 = pneg %p115
        $region122: #{tpu_custom_call.1} parent=119 // pred_check_branch
          %894 = sbr.rel (%p892) target = $region124
        $region123: #{tpu_custom_call.1} parent=119 // pred_region
          %895 = dma.done %s888, 64
        $region124: #{tpu_custom_call.1} parent=119 // pred_fallthru
          _
        %s896 = sand.u32 %s54, 1
        %s897 = scalar_lea.sflag [#allocation8], %s896
        %s898 = sand.u32 %s128, 1
        %s899 = smul.addr %s898, 4
        %s900 = scalar_lea.vmem [#allocation7], %s899
        // Predicated region
        $region125: #{tpu_custom_call.1} parent=119 // pred_check
          %p901 = pneg %p141
        $region126: #{tpu_custom_call.1} parent=119 // pred_check_branch
          %903 = sbr.rel (%p901) target = $region128
        $region127: #{tpu_custom_call.1} parent=119 // pred_region
          %904 = dma.done %s897, 64
        $region128: #{tpu_custom_call.1} parent=119 // pred_fallthru
          _
        // Predicated region
        $region129: #{tpu_custom_call.1} parent=119 // pred_check
          %p905 = pneg %p225
        $region130: #{tpu_custom_call.1} parent=119 // pred_check_branch
          %907 = sbr.rel (%p905) target = $region132
        $region131: #{tpu_custom_call.1} parent=119 // pred_region
          %908 = dma.done [#allocation8], 16
        $region132: #{tpu_custom_call.1} parent=119 // pred_fallthru
          _
        // Predicated region
        $region133: #{tpu_custom_call.1} parent=119 // pred_check
          %p909 = pneg %p246
        $region134: #{tpu_custom_call.1} parent=119 // pred_check_branch
          %911 = sbr.rel (%p909) target = $region136
        $region135: #{tpu_custom_call.1} parent=119 // pred_region
          %912 = dma.done [#allocation11], 256
        $region136: #{tpu_custom_call.1} parent=119 // pred_fallthru
          _
        // Predicated region
        $region137: #{tpu_custom_call.1} parent=119 // pred_check
          %p913 = pneg %p267
        $region138: #{tpu_custom_call.1} parent=119 // pred_check_branch
          %915 = sbr.rel (%p913) target = $region140
        $region139: #{tpu_custom_call.1} parent=119 // pred_region
          %916 = dma.done [#allocation11], 16
        $region140: #{tpu_custom_call.1} parent=119 // pred_fallthru
          _
        // Predicated region
        $region141: #{tpu_custom_call.1} parent=119 // pred_check
          %p917 = pneg %p309
        $region142: #{tpu_custom_call.1} parent=119 // pred_check_branch
          %919 = sbr.rel (%p917) target = $region144
        $region143: #{tpu_custom_call.1} parent=119 // pred_region
          %920 = dma.done [#allocation14], 16
        $region144: #{tpu_custom_call.1} parent=119 // pred_fallthru
          _
        // Predicated region
        $region145: #{tpu_custom_call.1} parent=119 // pred_check
          %p921 = pneg %p330
        $region146: #{tpu_custom_call.1} parent=119 // pred_check_branch
          %923 = sbr.rel (%p921) target = $region148
        $region147: #{tpu_custom_call.1} parent=119 // pred_region
          %924 = dma.done [#allocation14], 256
        $region148: #{tpu_custom_call.1} parent=119 // pred_fallthru
          _
        // Predicated region
        $region149: #{tpu_custom_call.1} parent=119 // pred_check
          %p925 = pneg %p351
        $region150: #{tpu_custom_call.1} parent=119 // pred_check_branch
          %927 = sbr.rel (%p925) target = $region152
        $region151: #{tpu_custom_call.1} parent=119 // pred_region
          %928 = dma.done [#allocation17], 16
        $region152: #{tpu_custom_call.1} parent=119 // pred_fallthru
          _
        // Predicated region
        $region153: #{tpu_custom_call.1} parent=119 // pred_check
          %p929 = pneg %p414
        $region154: #{tpu_custom_call.1} parent=119 // pred_check_branch
          %931 = sbr.rel (%p929) target = $region156
        $region155: #{tpu_custom_call.1} parent=119 // pred_region
          %932 = dma.done [#allocation17], 256
        $region156: #{tpu_custom_call.1} parent=119 // pred_fallthru
          _
        %p933 = scmp.lt.s32.totalorder %s58, 1
        %s934 = scalar_select %p933, %s58, 1
        %p935 = scmp.lt.s32.totalorder %s59, 0
        %s936 = scalar_select %p935, %s59, 0
        %s937 = sadd.s32 %s936, %s934
        %s938 = smul.addr %s937, 8
        %s939 = scalar_lea.vmem %s0, %s938
        %p940 = pneg %p89
        %p941 = pneg %p86
        %s942 = sand.u32 %s102, 1
        %s943 = scalar_lea.sflag [#allocation5], %s942
        %s944 = sand.u32 %s102, 1
        %s945 = smul.addr %s944, 4
        %s946 = scalar_lea.vmem [#allocation4], %s945
        %p947 = pneg %p115
        %p948 = pneg %p112
        %s949 = sand.u32 %s54, 1
        %s950 = scalar_lea.sflag [#allocation8], %s949
        %s951 = sand.u32 %s128, 1
        %s952 = smul.addr %s951, 4
        %s953 = scalar_lea.vmem [#allocation7], %s952
        %p954 = pneg %p141
        %p955 = pneg %p138
        %p956 = pneg %p162
        %p957 = pneg %p159
        %p958 = pneg %p183
        %p959 = pneg %p180
        %p960 = pneg %p204
        %p961 = pneg %p201
        %p962 = pneg %p225
        %p963 = pneg %p222
        %p964 = pneg %p246
        %p965 = pneg %p243
        %p966 = pneg %p267
        %p967 = pneg %p264
        %p968 = pneg %p288
        %p969 = pneg %p285
        %p970 = pneg %p309
        %p971 = pneg %p306
        %p972 = pneg %p330
        %p973 = pneg %p327
        %p974 = pneg %p351
        %p975 = pneg %p348
        %p976 = pneg %p372
        %p977 = pneg %p369
        %p978 = pneg %p393
        %p979 = pneg %p390
        %p980 = pneg %p414
        %p981 = pneg %p411
        %p982 = pneg %p435
        %p983 = pneg %p432
        %p984 = pneg %p456
        %p985 = pneg %p453
        %p986 = pneg %p477
        %p987 = pneg %p474
        %p988 = pneg %p498
        %p989 = pneg %p495
        %p990 = pneg %p519
        %p991 = pneg %p516
        %p992 = pneg %p540
        %p993 = pneg %p537
        %p994 = pneg %p561
        %p995 = pneg %p558
        %p996 = pneg %p582
        %p997 = pneg %p579
        %p998 = pneg %p603
        %p999 = pneg %p600
        %p1000 = pneg %p631
        %p1001 = pneg %p628
        %s1002 = sand.u32 %s618, 1
        %s1003 = scalar_lea.sflag [#allocation6], %s1002
        %s1004 = sand.u32 %s618, 1
        %s1005 = smul.addr %s1004, 8
        %s1006 = scalar_lea.vmem [#allocation19], %s1005
        %p1007 = pneg %p659
        %p1008 = pneg %p656
        %s1009 = sand.u32 %s54, 1
        %s1010 = scalar_lea.sflag [#allocation21], %s1009
        %s1011 = sand.u32 %s646, 1
        %s1012 = smul.addr %s1011, 16
        %s1013 = scalar_lea.vmem [#allocation20], %s1012
        %p1014 = pneg %p687
        %p1015 = pneg %p684
        %s1016 = sand.u32 %s54, 1
        %s1017 = scalar_lea.sflag [#allocation21], %s1016
        %s1018 = sand.u32 %s674, 1
        %s1019 = smul.addr %s1018, 16
        %s1020 = scalar_lea.vmem [#allocation22], %s1019
        %p1021 = scmp.lt.s32.totalorder %s58, 1
        %s1022 = scalar_select %p1021, %s58, 1
        %p1023 = scmp.lt.s32.totalorder %s59, 0
        %s1024 = scalar_select %p1023, %s59, 0
        %s1025 = sadd.s32 %s1024, %s1022
        %s1026 = smul.addr %s1025, 8
        %s1027 = scalar_lea.vmem %s0, %s1026
        %p1029 = scmp.eq.s32.totalorder %s59, 0
        // Predicated region
        $region157: #{tpu_custom_call.1} parent=119 // pred_check
          %p1030 = pneg %p1029
        $region158: #{tpu_custom_call.1} parent=119 // pred_check_branch
          %1032 = sbr.rel (%p1030) target = $region160
        $region159: #{tpu_custom_call.1} parent=119 // pred_region
          %v1033 = vld [vmem:[%s891] sm:$0xf]
          %v1034 = vld [vmem:[%s5] sm:$0xf]
          %v1035 = vld [vmem:[%s5 + $0x4] sm:$0xf]
          %v1036 = vld [vmem:[%s5 + $0x8] sm:$0xf]
          %v1037 = vld [vmem:[%s5 + $0xc] sm:$0xf]
          %v1038 = vld [vmem:[#allocation9] sm:$0x1]
          %v1040 = vlaneseq
          %v1041 = vshrl.u32 %v1040, 7
          %v1042 = vsub.s32 0, %v1041
          %v1043 = vrot.slane %v1038, %v1042
          %v1049 = vunpack.c.l.b16 %v1034
          %v1050 = vunpack.c.l.b16 %v1035
          %v1051 = vunpack.c.l.b16 %v1036
          %v1052 = vunpack.c.l.b16 %v1037
          %v1053 = vpack.c.b16 %v1050, %v1049
          %v1054 = vpack.c.b16 %v1052, %v1051
          %vm1057 = vcmask 261120
          %v1059 = vsel %vm1057, %v1033, 0
          %1061 = vmatprep.subr.bf16.mxu0 0
          %1062 = vmatpush1.bf16.msra.mxu0 %v1053
          %1063 = vmatprep.subr.bf16.mxu0 0
          %1064 = vmatpush1.bf16.msra.mxu0 %v1054
          %1065 = vmatprep.subr.bf16.mxu0 0
          %1066 = vmatpush1.bf16.msra.mxu0 0
          %1067 = vmatprep.subr.bf16.mxu0 0
          %1068 = vmatpush1.bf16.msra.mxu0 0
          %1069 = vmatprep.subr.bf16.mxu0 0
          %1070 = vmatpush1.bf16.msra.mxu0 0
          %1071 = vmatprep.subr.bf16.mxu0 0
          %1072 = vmatpush1.bf16.msra.mxu0 0
          %1073 = vmatprep.subr.bf16.mxu0 0
          %1074 = vmatpush1.bf16.msra.mxu0 0
          %1075 = vmatprep.subr.bf16.mxu0 0
          %1076 = vmatpush1.bf16.msra.mxu0 0
          %1077 = vmatprep.subr.bf16.mxu0 0
          %1078 = vmatpush1.bf16.msra.mxu0 0
          %1079 = vmatprep.subr.bf16.mxu0 0
          %1080 = vmatpush1.bf16.msra.mxu0 0
          %1081 = vmatprep.subr.bf16.mxu0 0
          %1082 = vmatpush1.bf16.msra.mxu0 0
          %1083 = vmatprep.subr.bf16.mxu0 0
          %1084 = vmatpush1.bf16.msra.mxu0 0
          %1085 = vmatprep.subr.bf16.mxu0 0
          %1086 = vmatpush1.bf16.msra.mxu0 0
          %1087 = vmatprep.subr.bf16.mxu0 0
          %1088 = vmatpush1.bf16.msra.mxu0 0
          %1089 = vmatprep.subr.bf16.mxu0 0
          %1090 = vmatpush1.bf16.msra.mxu0 0
          %1091 = vmatprep.subr.bf16.mxu0 0
          %1092 = vmatpush1.bf16.msra.mxu0 0
          %1093 = vmatprep.mubr.bf16.mxu0 0
          %1094 = vmatmul.mubr.bf16.gmra.mrb[0].mxu0 %v1059
          %v1095 = vpop.f32.mrb[0].mxu0
          %v1096 = vadd.f32 %v1043, %v1095
          %v1097 = vpop.f32.mrb[0].mxu0
          %v1098 = vpop.f32.mrb[0].mxu0
          %v1099 = vpop.f32.mrb[0].mxu0
          %1100 = vdwg.mxu0
          %v1101 = vpack.c.bf16 %v1096, %v1096
          %vm1102 = vcmask 519168
          %1103 = vst.msk [vmem:[#allocation2] sm:$0xf] %vm1102, %v1101
          %v1104 = vld [vmem:[%s900] sm:$0xf]
          %v1105 = vld [vmem:[#allocation15] sm:$0xf]
          %v1106 = vld [vmem:[#allocation15 + $0x4] sm:$0xf]
          %v1107 = vld [vmem:[#allocation15 + $0x8] sm:$0xf]
          %v1108 = vld [vmem:[#allocation15 + $0xc] sm:$0xf]
          %v1109 = vld [vmem:[#allocation16] sm:$0x1]
          %v1111 = vlaneseq
          %v1112 = vshrl.u32 %v1111, 7
          %v1113 = vsub.s32 0, %v1112
          %v1114 = vrot.slane %v1109, %v1113
          %v1120 = vunpack.c.l.b16 %v1105
          %v1121 = vunpack.c.l.b16 %v1106
          %v1122 = vunpack.c.l.b16 %v1107
          %v1123 = vunpack.c.l.b16 %v1108
          %v1124 = vpack.c.b16 %v1121, %v1120
          %v1125 = vpack.c.b16 %v1123, %v1122
          %v1129 = vsel %vm1057, %v1104, 0
          %1131 = vmatprep.subr.bf16.mxu0 0
          %1132 = vmatpush1.bf16.msra.mxu0 %v1124
          %1133 = vmatprep.subr.bf16.mxu0 0
          %1134 = vmatpush1.bf16.msra.mxu0 %v1125
          %1135 = vmatprep.subr.bf16.mxu0 0
          %1136 = vmatpush1.bf16.msra.mxu0 0
          %1137 = vmatprep.subr.bf16.mxu0 0
          %1138 = vmatpush1.bf16.msra.mxu0 0
          %1139 = vmatprep.subr.bf16.mxu0 0
          %1140 = vmatpush1.bf16.msra.mxu0 0
          %1141 = vmatprep.subr.bf16.mxu0 0
          %1142 = vmatpush1.bf16.msra.mxu0 0
          %1143 = vmatprep.subr.bf16.mxu0 0
          %1144 = vmatpush1.bf16.msra.mxu0 0
          %1145 = vmatprep.subr.bf16.mxu0 0
          %1146 = vmatpush1.bf16.msra.mxu0 0
          %1147 = vmatprep.subr.bf16.mxu0 0
          %1148 = vmatpush1.bf16.msra.mxu0 0
          %1149 = vmatprep.subr.bf16.mxu0 0
          %1150 = vmatpush1.bf16.msra.mxu0 0
          %1151 = vmatprep.subr.bf16.mxu0 0
          %1152 = vmatpush1.bf16.msra.mxu0 0
          %1153 = vmatprep.subr.bf16.mxu0 0
          %1154 = vmatpush1.bf16.msra.mxu0 0
          %1155 = vmatprep.subr.bf16.mxu0 0
          %1156 = vmatpush1.bf16.msra.mxu0 0
          %1157 = vmatprep.subr.bf16.mxu0 0
          %1158 = vmatpush1.bf16.msra.mxu0 0
          %1159 = vmatprep.subr.bf16.mxu0 0
          %1160 = vmatpush1.bf16.msra.mxu0 0
          %1161 = vmatprep.subr.bf16.mxu0 0
          %1162 = vmatpush1.bf16.msra.mxu0 0
          %1163 = vmatprep.mubr.bf16.mxu0 0
          %1164 = vmatmul.mubr.bf16.gmra.mrb[0].mxu0 %v1129
          %v1165 = vpop.f32.mrb[0].mxu0
          %v1166 = vadd.f32 %v1114, %v1165
          %v1167 = vpop.f32.mrb[0].mxu0
          %v1168 = vpop.f32.mrb[0].mxu0
          %v1169 = vpop.f32.mrb[0].mxu0
          %1170 = vdwg.mxu0
          %v1171 = vpack.c.bf16 %v1166, %v1166
          %1172 = vst.msk [vmem:[#allocation3] sm:$0xf] %vm1102, %v1171
        $region160: #{tpu_custom_call.1} parent=119 // pred_fallthru
          _
        %v1173 = vld [vmem:[%s1027] sm:$0xff]
        %v1174 = vpack.c.bf16 %v1173, %v1173
        %v1175 = vld [vmem:[%s3] sm:$0xf]
        %v1176 = vld [vmem:[%s3 + $0x4] sm:$0xf]
        %v1177 = vld [vmem:[%s3 + $0x8] sm:$0xf]
        %v1178 = vld [vmem:[%s3 + $0xc] sm:$0xf]
        %v1179 = vld [vmem:[%s4] sm:$0x1]
        %v1181 = vlaneseq
        %v1182 = vshrl.u32 %v1181, 7
        %v1183 = vsub.s32 0, %v1182
        %v1184 = vrot.slane %v1179, %v1183
        %v1190 = vunpack.c.l.b16 %v1175
        %v1191 = vunpack.c.l.b16 %v1176
        %v1192 = vunpack.c.l.b16 %v1177
        %v1193 = vunpack.c.l.b16 %v1178
        %v1194 = vpack.c.b16 %v1191, %v1190
        %v1195 = vpack.c.b16 %v1193, %v1192
        %vm1198 = vcmask 261120
        %v1200 = vsel %vm1198, %v1174, 0
        %1202 = vmatprep.subr.bf16.mxu0 0
        %1203 = vmatpush1.bf16.msra.mxu0 %v1194
        %1204 = vmatprep.subr.bf16.mxu0 0
        %1205 = vmatpush1.bf16.msra.mxu0 %v1195
        %1206 = vmatprep.subr.bf16.mxu0 0
        %1207 = vmatpush1.bf16.msra.mxu0 0
        %1208 = vmatprep.subr.bf16.mxu0 0
        %1209 = vmatpush1.bf16.msra.mxu0 0
        %1210 = vmatprep.subr.bf16.mxu0 0
        %1211 = vmatpush1.bf16.msra.mxu0 0
        %1212 = vmatprep.subr.bf16.mxu0 0
        %1213 = vmatpush1.bf16.msra.mxu0 0
        %1214 = vmatprep.subr.bf16.mxu0 0
        %1215 = vmatpush1.bf16.msra.mxu0 0
        %1216 = vmatprep.subr.bf16.mxu0 0
        %1217 = vmatpush1.bf16.msra.mxu0 0
        %1218 = vmatprep.subr.bf16.mxu0 0
        %1219 = vmatpush1.bf16.msra.mxu0 0
        %1220 = vmatprep.subr.bf16.mxu0 0
        %1221 = vmatpush1.bf16.msra.mxu0 0
        %1222 = vmatprep.subr.bf16.mxu0 0
        %1223 = vmatpush1.bf16.msra.mxu0 0
        %1224 = vmatprep.subr.bf16.mxu0 0
        %1225 = vmatpush1.bf16.msra.mxu0 0
        %1226 = vmatprep.subr.bf16.mxu0 0
        %1227 = vmatpush1.bf16.msra.mxu0 0
        %1228 = vmatprep.subr.bf16.mxu0 0
        %1229 = vmatpush1.bf16.msra.mxu0 0
        %1230 = vmatprep.subr.bf16.mxu0 0
        %1231 = vmatpush1.bf16.msra.mxu0 0
        %1232 = vmatprep.subr.bf16.mxu0 0
        %1233 = vmatpush1.bf16.msra.mxu0 0
        %1234 = vmatprep.mubr.bf16.mxu0 0
        %1235 = vmatmul.mubr.bf16.gmra.mrb[0].mxu0 %v1200
        %v1236 = vpop.f32.mrb[0].mxu0
        %v1237 = vadd.f32 %v1184, %v1236
        %v1238 = vpop.f32.mrb[0].mxu0
        %v1239 = vpop.f32.mrb[0].mxu0
        %v1240 = vpop.f32.mrb[0].mxu0
        %1241 = vdwg.mxu0
        %v1242 = vpack.c.bf16 %v1237, %v1237
        %v1243 = vld [vmem:[#allocation2] sm:$0xf]
        %vm1244 = vcmask 64512
        %v1246 = vsel %vm1244, %v1242, 0
        %v1249 = vsel %vm1244, %v1243, 0
        %1251 = vmatprep.subr.bf16.mxu0 0
        %1252 = vmatpush1.bf16.xpose.msra.mxu0 %v1249
        %1253 = vmatprep.subr.bf16.mxu0 0
        %1254 = vmatpush1.bf16.xpose.msra.mxu0 0
        %1255 = vmatprep.subr.bf16.mxu0 0
        %1256 = vmatpush1.bf16.xpose.msra.mxu0 0
        %1257 = vmatprep.subr.bf16.mxu0 0
        %1258 = vmatpush1.bf16.xpose.msra.mxu0 0
        %1259 = vmatprep.subr.bf16.mxu0 0
        %1260 = vmatpush1.bf16.xpose.msra.mxu0 0
        %1261 = vmatprep.subr.bf16.mxu0 0
        %1262 = vmatpush1.bf16.xpose.msra.mxu0 0
        %1263 = vmatprep.subr.bf16.mxu0 0
        %1264 = vmatpush1.bf16.xpose.msra.mxu0 0
        %1265 = vmatprep.subr.bf16.mxu0 0
        %1266 = vmatpush1.bf16.xpose.msra.mxu0 0
        %1267 = vmatprep.subr.bf16.mxu0 0
        %1268 = vmatpush1.bf16.xpose.msra.mxu0 0
        %1269 = vmatprep.subr.bf16.mxu0 0
        %1270 = vmatpush1.bf16.xpose.msra.mxu0 0
        %1271 = vmatprep.subr.bf16.mxu0 0
        %1272 = vmatpush1.bf16.xpose.msra.mxu0 0
        %1273 = vmatprep.subr.bf16.mxu0 0
        %1274 = vmatpush1.bf16.xpose.msra.mxu0 0
        %1275 = vmatprep.subr.bf16.mxu0 0
        %1276 = vmatpush1.bf16.xpose.msra.mxu0 0
        %1277 = vmatprep.subr.bf16.mxu0 0
        %1278 = vmatpush1.bf16.xpose.msra.mxu0 0
        %1279 = vmatprep.subr.bf16.mxu0 0
        %1280 = vmatpush1.bf16.xpose.msra.mxu0 0
        %1281 = vmatprep.subr.bf16.mxu0 0
        %1282 = vmatpush1.bf16.xpose.msra.mxu0 0
        %1283 = vmatprep.mubr.bf16.mxu0 0
        %1284 = vmatmul.mubr.bf16.gmra.mrb[0].mxu0 %v1246
        %v1285 = vpop.f32.mrb[0].mxu0
        %v1286 = vadd.f32 0.0, %v1285
        %v1287 = vpop.f32.mrb[0].mxu0
        %v1288 = vpop.f32.mrb[0].mxu0
        %v1289 = vpop.f32.mrb[0].mxu0
        %1290 = vdwg.mxu0
        %1292 = vrot.lane.b32.xlu0 %v1242, 120
        %v1293 = vpop.permute.xlu0 %1292
        %v1295 = vunpack.c.l.b16 %v1243
        %v1296 = vpack.c.b16 %v1295, %v1295
        %1297 = vrot.lane.b32.xlu0 %v1296, 120
        %v1298 = vpop.permute.xlu0 %1297
        %v1300 = vsel %vm1244, %v1293, 0
        %v1303 = vsel %vm1244, %v1298, 0
        %1305 = vmatprep.subr.bf16.mxu0 0
        %1306 = vmatpush1.bf16.xpose.msra.mxu0 %v1303
        %1307 = vmatprep.subr.bf16.mxu0 0
        %1308 = vmatpush1.bf16.xpose.msra.mxu0 0
        %1309 = vmatprep.subr.bf16.mxu0 0
        %1310 = vmatpush1.bf16.xpose.msra.mxu0 0
        %1311 = vmatprep.subr.bf16.mxu0 0
        %1312 = vmatpush1.bf16.xpose.msra.mxu0 0
        %1313 = vmatprep.subr.bf16.mxu0 0
        %1314 = vmatpush1.bf16.xpose.msra.mxu0 0
        %1315 = vmatprep.subr.bf16.mxu0 0
        %1316 = vmatpush1.bf16.xpose.msra.mxu0 0
        %1317 = vmatprep.subr.bf16.mxu0 0
        %1318 = vmatpush1.bf16.xpose.msra.mxu0 0
        %1319 = vmatprep.subr.bf16.mxu0 0
        %1320 = vmatpush1.bf16.xpose.msra.mxu0 0
        %1321 = vmatprep.subr.bf16.mxu0 0
        %1322 = vmatpush1.bf16.xpose.msra.mxu0 0
        %1323 = vmatprep.subr.bf16.mxu0 0
        %1324 = vmatpush1.bf16.xpose.msra.mxu0 0
        %1325 = vmatprep.subr.bf16.mxu0 0
        %1326 = vmatpush1.bf16.xpose.msra.mxu0 0
        %1327 = vmatprep.subr.bf16.mxu0 0
        %1328 = vmatpush1.bf16.xpose.msra.mxu0 0
        %1329 = vmatprep.subr.bf16.mxu0 0
        %1330 = vmatpush1.bf16.xpose.msra.mxu0 0
        %1331 = vmatprep.subr.bf16.mxu0 0
        %1332 = vmatpush1.bf16.xpose.msra.mxu0 0
        %1333 = vmatprep.subr.bf16.mxu0 0
        %1334 = vmatpush1.bf16.xpose.msra.mxu0 0
        %1335 = vmatprep.subr.bf16.mxu0 0
        %1336 = vmatpush1.bf16.xpose.msra.mxu0 0
        %1337 = vmatprep.mubr.bf16.mxu0 0
        %1338 = vmatmul.mubr.bf16.gmra.mrb[0].mxu0 %v1300
        %v1339 = vpop.f32.mrb[0].mxu0
        %v1340 = vadd.f32 0.0, %v1339
        %v1341 = vpop.f32.mrb[0].mxu0
        %v1342 = vpop.f32.mrb[0].mxu0
        %v1343 = vpop.f32.mrb[0].mxu0
        %1344 = vdwg.mxu0
        %1345 = vrot.lane.b32.xlu0 %v1242, 112
        %v1346 = vpop.permute.xlu0 %1345
        %1347 = vrot.lane.b32.xlu0 %v1296, 112
        %v1348 = vpop.permute.xlu0 %1347
        %v1350 = vsel %vm1244, %v1346, 0
        %v1353 = vsel %vm1244, %v1348, 0
        %1355 = vmatprep.subr.bf16.mxu0 0
        %1356 = vmatpush1.bf16.xpose.msra.mxu0 %v1353
        %1357 = vmatprep.subr.bf16.mxu0 0
        %1358 = vmatpush1.bf16.xpose.msra.mxu0 0
        %1359 = vmatprep.subr.bf16.mxu0 0
        %1360 = vmatpush1.bf16.xpose.msra.mxu0 0
        %1361 = vmatprep.subr.bf16.mxu0 0
        %1362 = vmatpush1.bf16.xpose.msra.mxu0 0
        %1363 = vmatprep.subr.bf16.mxu0 0
        %1364 = vmatpush1.bf16.xpose.msra.mxu0 0
        %1365 = vmatprep.subr.bf16.mxu0 0
        %1366 = vmatpush1.bf16.xpose.msra.mxu0 0
        %1367 = vmatprep.subr.bf16.mxu0 0
        %1368 = vmatpush1.bf16.xpose.msra.mxu0 0
        %1369 = vmatprep.subr.bf16.mxu0 0
        %1370 = vmatpush1.bf16.xpose.msra.mxu0 0
        %1371 = vmatprep.subr.bf16.mxu0 0
        %1372 = vmatpush1.bf16.xpose.msra.mxu0 0
        %1373 = vmatprep.subr.bf16.mxu0 0
        %1374 = vmatpush1.bf16.xpose.msra.mxu0 0
        %1375 = vmatprep.subr.bf16.mxu0 0
        %1376 = vmatpush1.bf16.xpose.msra.mxu0 0
        %1377 = vmatprep.subr.bf16.mxu0 0
        %1378 = vmatpush1.bf16.xpose.msra.mxu0 0
        %1379 = vmatprep.subr.bf16.mxu0 0
        %1380 = vmatpush1.bf16.xpose.msra.mxu0 0
        %1381 = vmatprep.subr.bf16.mxu0 0
        %1382 = vmatpush1.bf16.xpose.msra.mxu0 0
        %1383 = vmatprep.subr.bf16.mxu0 0
        %1384 = vmatpush1.bf16.xpose.msra.mxu0 0
        %1385 = vmatprep.subr.bf16.mxu0 0
        %1386 = vmatpush1.bf16.xpose.msra.mxu0 0
        %1387 = vmatprep.mubr.bf16.mxu0 0
        %1388 = vmatmul.mubr.bf16.gmra.mrb[0].mxu0 %v1350
        %v1389 = vpop.f32.mrb[0].mxu0
        %v1390 = vadd.f32 0.0, %v1389
        %v1391 = vpop.f32.mrb[0].mxu0
        %v1392 = vpop.f32.mrb[0].mxu0
        %v1393 = vpop.f32.mrb[0].mxu0
        %1394 = vdwg.mxu0
        %1395 = vrot.lane.b32.xlu0 %v1242, 104
        %v1396 = vpop.permute.xlu0 %1395
        %1397 = vrot.lane.b32.xlu0 %v1296, 104
        %v1398 = vpop.permute.xlu0 %1397
        %v1400 = vsel %vm1244, %v1396, 0
        %v1403 = vsel %vm1244, %v1398, 0
        %1405 = vmatprep.subr.bf16.mxu0 0
        %1406 = vmatpush1.bf16.xpose.msra.mxu0 %v1403
        %1407 = vmatprep.subr.bf16.mxu0 0
        %1408 = vmatpush1.bf16.xpose.msra.mxu0 0
        %1409 = vmatprep.subr.bf16.mxu0 0
        %1410 = vmatpush1.bf16.xpose.msra.mxu0 0
        %1411 = vmatprep.subr.bf16.mxu0 0
        %1412 = vmatpush1.bf16.xpose.msra.mxu0 0
        %1413 = vmatprep.subr.bf16.mxu0 0
        %1414 = vmatpush1.bf16.xpose.msra.mxu0 0
        %1415 = vmatprep.subr.bf16.mxu0 0
        %1416 = vmatpush1.bf16.xpose.msra.mxu0 0
        %1417 = vmatprep.subr.bf16.mxu0 0
        %1418 = vmatpush1.bf16.xpose.msra.mxu0 0
        %1419 = vmatprep.subr.bf16.mxu0 0
        %1420 = vmatpush1.bf16.xpose.msra.mxu0 0
        %1421 = vmatprep.subr.bf16.mxu0 0
        %1422 = vmatpush1.bf16.xpose.msra.mxu0 0
        %1423 = vmatprep.subr.bf16.mxu0 0
        %1424 = vmatpush1.bf16.xpose.msra.mxu0 0
        %1425 = vmatprep.subr.bf16.mxu0 0
        %1426 = vmatpush1.bf16.xpose.msra.mxu0 0
        %1427 = vmatprep.subr.bf16.mxu0 0
        %1428 = vmatpush1.bf16.xpose.msra.mxu0 0
        %1429 = vmatprep.subr.bf16.mxu0 0
        %1430 = vmatpush1.bf16.xpose.msra.mxu0 0
        %1431 = vmatprep.subr.bf16.mxu0 0
        %1432 = vmatpush1.bf16.xpose.msra.mxu0 0
        %1433 = vmatprep.subr.bf16.mxu0 0
        %1434 = vmatpush1.bf16.xpose.msra.mxu0 0
        %1435 = vmatprep.subr.bf16.mxu0 0
        %1436 = vmatpush1.bf16.xpose.msra.mxu0 0
        %1437 = vmatprep.mubr.bf16.mxu0 0
        %1438 = vmatmul.mubr.bf16.gmra.mrb[0].mxu0 %v1400
        %v1439 = vpop.f32.mrb[0].mxu0
        %v1440 = vadd.f32 0.0, %v1439
        %v1441 = vpop.f32.mrb[0].mxu0
        %v1442 = vpop.f32.mrb[0].mxu0
        %v1443 = vpop.f32.mrb[0].mxu0
        %1444 = vdwg.mxu0
        %v1445 = vsel %vm1244, %v1286, -inf
        %1446 = vmax.xlane.f32.xlu0 %v1445
        %v1447 = vpop.xlane.xlu0 %1446
        %v1448 = vsel %vm1244, %v1340, -inf
        %1449 = vmax.xlane.f32.xlu0 %v1448
        %v1450 = vpop.xlane.xlu0 %1449
        %v1451 = vsel %vm1244, %v1390, -inf
        %1452 = vmax.xlane.f32.xlu0 %v1451
        %v1453 = vpop.xlane.xlu0 %1452
        %v1454 = vsel %vm1244, %v1440, -inf
        %1455 = vmax.xlane.f32.xlu0 %v1454
        %v1456 = vpop.xlane.xlu0 %1455
        %v1457 = vsub.f32 %v1286, %v1447
        %v1458 = vsub.f32 %v1340, %v1450
        %v1459 = vsub.f32 %v1390, %v1453
        %v1460 = vsub.f32 %v1440, %v1456
        %v1461 = vmul.f32 %v1457, 1.442695
        %v1462 = vpow.pop %v1461
        %v1463 = vmul.f32 %v1458, 1.442695
        %v1464 = vpow.pop %v1463
        %v1465 = vmul.f32 %v1459, 1.442695
        %v1466 = vpow.pop %v1465
        %v1467 = vmul.f32 %v1460, 1.442695
        %v1468 = vpow.pop %v1467
        %v1469 = vsel %vm1244, %v1462, 0.0
        %1470 = vadd.xlane.f32.xlu0 %v1469
        %v1471 = vpop.xlane.xlu0 %1470
        %v1472 = vsel %vm1244, %v1464, 0.0
        %1473 = vadd.xlane.f32.xlu0 %v1472
        %v1474 = vpop.xlane.xlu0 %1473
        %v1475 = vsel %vm1244, %v1466, 0.0
        %1476 = vadd.xlane.f32.xlu0 %v1475
        %v1477 = vpop.xlane.xlu0 %1476
        %v1478 = vsel %vm1244, %v1468, 0.0
        %1479 = vadd.xlane.f32.xlu0 %v1478
        %v1480 = vpop.xlane.xlu0 %1479
        %v1481 = vrcp.pop %v1471
        %v1482 = vrcp.pop %v1474
        %v1483 = vrcp.pop %v1477
        %v1484 = vrcp.pop %v1480
        %v1485 = vmul.f32 %v1462, %v1481
        %v1486 = vmul.f32 %v1464, %v1482
        %v1487 = vmul.f32 %v1466, %v1483
        %v1488 = vmul.f32 %v1468, %v1484
        %v1489 = vpack.c.bf16 %v1485, %v1485
        %v1490 = vpack.c.bf16 %v1486, %v1486
        %v1491 = vpack.c.bf16 %v1487, %v1487
        %v1492 = vpack.c.bf16 %v1488, %v1488
        %vm1493 = vcmask 60416
        %1494 = vst.msk [vmem:[%s1013] sm:$0xf] %vm1493, %v1489
        %1495 = vst.msk [vmem:[%s1013 + $0x4] sm:$0xf] %vm1493, %v1490
        %1496 = vst.msk [vmem:[%s1013 + $0x8] sm:$0xf] %vm1493, %v1491
        %1497 = vst.msk [vmem:[%s1013 + $0xc] sm:$0xf] %vm1493, %v1492
        %v1498 = vld [vmem:[#allocation12] sm:$0x1]
        %1499 = vrot.lane.b32.xlu0 %v1296, 96
        %v1500 = vpop.permute.xlu0 %1499
        %v1502 = vsel %vm1244, %v1489, 0
        %vm1504 = vcmask 1043456
        %v1506 = vsel %vm1504, %v1500, 0
        %1508 = vmatprep.subr.bf16.mxu0 0
        %1509 = vmatpush1.bf16.msra.mxu0 %v1506
        %1510 = vmatprep.subr.bf16.mxu0 0
        %1511 = vmatpush1.bf16.msra.mxu0 0
        %1512 = vmatprep.subr.bf16.mxu0 0
        %1513 = vmatpush1.bf16.msra.mxu0 0
        %1514 = vmatprep.subr.bf16.mxu0 0
        %1515 = vmatpush1.bf16.msra.mxu0 0
        %1516 = vmatprep.subr.bf16.mxu0 0
        %1517 = vmatpush1.bf16.msra.mxu0 0
        %1518 = vmatprep.subr.bf16.mxu0 0
        %1519 = vmatpush1.bf16.msra.mxu0 0
        %1520 = vmatprep.subr.bf16.mxu0 0
        %1521 = vmatpush1.bf16.msra.mxu0 0
        %1522 = vmatprep.subr.bf16.mxu0 0
        %1523 = vmatpush1.bf16.msra.mxu0 0
        %1524 = vmatprep.subr.bf16.mxu0 0
        %1525 = vmatpush1.bf16.msra.mxu0 0
        %1526 = vmatprep.subr.bf16.mxu0 0
        %1527 = vmatpush1.bf16.msra.mxu0 0
        %1528 = vmatprep.subr.bf16.mxu0 0
        %1529 = vmatpush1.bf16.msra.mxu0 0
        %1530 = vmatprep.subr.bf16.mxu0 0
        %1531 = vmatpush1.bf16.msra.mxu0 0
        %1532 = vmatprep.subr.bf16.mxu0 0
        %1533 = vmatpush1.bf16.msra.mxu0 0
        %1534 = vmatprep.subr.bf16.mxu0 0
        %1535 = vmatpush1.bf16.msra.mxu0 0
        %1536 = vmatprep.subr.bf16.mxu0 0
        %1537 = vmatpush1.bf16.msra.mxu0 0
        %1538 = vmatprep.subr.bf16.mxu0 0
        %1539 = vmatpush1.bf16.msra.mxu0 0
        %1540 = vmatprep.mubr.bf16.mxu0 0
        %1541 = vmatmul.mubr.bf16.gmra.mrb[0].mxu0 %v1502
        %v1542 = vpop.f32.mrb[0].mxu0
        %v1543 = vadd.f32 0.0, %v1542
        %v1544 = vpop.f32.mrb[0].mxu0
        %v1545 = vpop.f32.mrb[0].mxu0
        %v1546 = vpop.f32.mrb[0].mxu0
        %1547 = vdwg.mxu0
        %v1548 = vpack.c.bf16 %v1543, %v1543
        %v1549 = vld [vmem:[#allocation10] sm:$0xf]
        %v1551 = vsel %vm1244, %v1548, 0
        %v1554 = vsel %vm1504, %v1549, 0
        %1556 = vmatprep.subr.bf16.mxu0 0
        %1557 = vmatpush1.bf16.msra.mxu0 %v1554
        %1558 = vmatprep.subr.bf16.mxu0 0
        %1559 = vmatpush1.bf16.msra.mxu0 0
        %1560 = vmatprep.subr.bf16.mxu0 0
        %1561 = vmatpush1.bf16.msra.mxu0 0
        %1562 = vmatprep.subr.bf16.mxu0 0
        %1563 = vmatpush1.bf16.msra.mxu0 0
        %1564 = vmatprep.subr.bf16.mxu0 0
        %1565 = vmatpush1.bf16.msra.mxu0 0
        %1566 = vmatprep.subr.bf16.mxu0 0
        %1567 = vmatpush1.bf16.msra.mxu0 0
        %1568 = vmatprep.subr.bf16.mxu0 0
        %1569 = vmatpush1.bf16.msra.mxu0 0
        %1570 = vmatprep.subr.bf16.mxu0 0
        %1571 = vmatpush1.bf16.msra.mxu0 0
        %1572 = vmatprep.subr.bf16.mxu0 0
        %1573 = vmatpush1.bf16.msra.mxu0 0
        %1574 = vmatprep.subr.bf16.mxu0 0
        %1575 = vmatpush1.bf16.msra.mxu0 0
        %1576 = vmatprep.subr.bf16.mxu0 0
        %1577 = vmatpush1.bf16.msra.mxu0 0
        %1578 = vmatprep.subr.bf16.mxu0 0
        %1579 = vmatpush1.bf16.msra.mxu0 0
        %1580 = vmatprep.subr.bf16.mxu0 0
        %1581 = vmatpush1.bf16.msra.mxu0 0
        %1582 = vmatprep.subr.bf16.mxu0 0
        %1583 = vmatpush1.bf16.msra.mxu0 0
        %1584 = vmatprep.subr.bf16.mxu0 0
        %1585 = vmatpush1.bf16.msra.mxu0 0
        %1586 = vmatprep.subr.bf16.mxu0 0
        %1587 = vmatpush1.bf16.msra.mxu0 0
        %1588 = vmatprep.mubr.bf16.mxu0 0
        %1589 = vmatmul.mubr.bf16.gmra.mrb[0].mxu0 %v1551
        %v1590 = vpop.f32.mrb[0].mxu0
        %v1591 = vadd.f32 0.0, %v1590
        %v1592 = vpop.f32.mrb[0].mxu0
        %v1593 = vpop.f32.mrb[0].mxu0
        %v1594 = vpop.f32.mrb[0].mxu0
        %1595 = vdwg.mxu0
        %v1597 = vlaneseq
        %v1598 = vshrl.u32 %v1597, 7
        %v1599 = vsub.s32 0, %v1598
        %v1600 = vrot.slane %v1498, %v1599
        %v1602 = vadd.f32 %v1600, %v1591
        %1603 = vrot.lane.b32.xlu0 %v1296, 88
        %v1604 = vpop.permute.xlu0 %1603
        %v1606 = vsel %vm1244, %v1490, 0
        %v1609 = vsel %vm1504, %v1604, 0
        %1611 = vmatprep.subr.bf16.mxu0 0
        %1612 = vmatpush1.bf16.msra.mxu0 %v1609
        %1613 = vmatprep.subr.bf16.mxu0 0
        %1614 = vmatpush1.bf16.msra.mxu0 0
        %1615 = vmatprep.subr.bf16.mxu0 0
        %1616 = vmatpush1.bf16.msra.mxu0 0
        %1617 = vmatprep.subr.bf16.mxu0 0
        %1618 = vmatpush1.bf16.msra.mxu0 0
        %1619 = vmatprep.subr.bf16.mxu0 0
        %1620 = vmatpush1.bf16.msra.mxu0 0
        %1621 = vmatprep.subr.bf16.mxu0 0
        %1622 = vmatpush1.bf16.msra.mxu0 0
        %1623 = vmatprep.subr.bf16.mxu0 0
        %1624 = vmatpush1.bf16.msra.mxu0 0
        %1625 = vmatprep.subr.bf16.mxu0 0
        %1626 = vmatpush1.bf16.msra.mxu0 0
        %1627 = vmatprep.subr.bf16.mxu0 0
        %1628 = vmatpush1.bf16.msra.mxu0 0
        %1629 = vmatprep.subr.bf16.mxu0 0
        %1630 = vmatpush1.bf16.msra.mxu0 0
        %1631 = vmatprep.subr.bf16.mxu0 0
        %1632 = vmatpush1.bf16.msra.mxu0 0
        %1633 = vmatprep.subr.bf16.mxu0 0
        %1634 = vmatpush1.bf16.msra.mxu0 0
        %1635 = vmatprep.subr.bf16.mxu0 0
        %1636 = vmatpush1.bf16.msra.mxu0 0
        %1637 = vmatprep.subr.bf16.mxu0 0
        %1638 = vmatpush1.bf16.msra.mxu0 0
        %1639 = vmatprep.subr.bf16.mxu0 0
        %1640 = vmatpush1.bf16.msra.mxu0 0
        %1641 = vmatprep.subr.bf16.mxu0 0
        %1642 = vmatpush1.bf16.msra.mxu0 0
        %1643 = vmatprep.mubr.bf16.mxu0 0
        %1644 = vmatmul.mubr.bf16.gmra.mrb[0].mxu0 %v1606
        %v1645 = vpop.f32.mrb[0].mxu0
        %v1646 = vadd.f32 0.0, %v1645
        %v1647 = vpop.f32.mrb[0].mxu0
        %v1648 = vpop.f32.mrb[0].mxu0
        %v1649 = vpop.f32.mrb[0].mxu0
        %1650 = vdwg.mxu0
        %v1651 = vpack.c.bf16 %v1646, %v1646
        %s1652 = scalar_lea.vmem [#allocation10], 4
        %v1653 = vld [vmem:[%s1652] sm:$0xf]
        %v1655 = vsel %vm1244, %v1651, 0
        %v1658 = vsel %vm1504, %v1653, 0
        %1660 = vmatprep.subr.bf16.mxu0 0
        %1661 = vmatpush1.bf16.msra.mxu0 %v1658
        %1662 = vmatprep.subr.bf16.mxu0 0
        %1663 = vmatpush1.bf16.msra.mxu0 0
        %1664 = vmatprep.subr.bf16.mxu0 0
        %1665 = vmatpush1.bf16.msra.mxu0 0
        %1666 = vmatprep.subr.bf16.mxu0 0
        %1667 = vmatpush1.bf16.msra.mxu0 0
        %1668 = vmatprep.subr.bf16.mxu0 0
        %1669 = vmatpush1.bf16.msra.mxu0 0
        %1670 = vmatprep.subr.bf16.mxu0 0
        %1671 = vmatpush1.bf16.msra.mxu0 0
        %1672 = vmatprep.subr.bf16.mxu0 0
        %1673 = vmatpush1.bf16.msra.mxu0 0
        %1674 = vmatprep.subr.bf16.mxu0 0
        %1675 = vmatpush1.bf16.msra.mxu0 0
        %1676 = vmatprep.subr.bf16.mxu0 0
        %1677 = vmatpush1.bf16.msra.mxu0 0
        %1678 = vmatprep.subr.bf16.mxu0 0
        %1679 = vmatpush1.bf16.msra.mxu0 0
        %1680 = vmatprep.subr.bf16.mxu0 0
        %1681 = vmatpush1.bf16.msra.mxu0 0
        %1682 = vmatprep.subr.bf16.mxu0 0
        %1683 = vmatpush1.bf16.msra.mxu0 0
        %1684 = vmatprep.subr.bf16.mxu0 0
        %1685 = vmatpush1.bf16.msra.mxu0 0
        %1686 = vmatprep.subr.bf16.mxu0 0
        %1687 = vmatpush1.bf16.msra.mxu0 0
        %1688 = vmatprep.subr.bf16.mxu0 0
        %1689 = vmatpush1.bf16.msra.mxu0 0
        %1690 = vmatprep.subr.bf16.mxu0 0
        %1691 = vmatpush1.bf16.msra.mxu0 0
        %1692 = vmatprep.mubr.bf16.mxu0 0
        %1693 = vmatmul.mubr.bf16.gmra.mrb[0].mxu0 %v1655
        %v1694 = vpop.f32.mrb[0].mxu0
        %v1695 = vadd.f32 0.0, %v1694
        %v1696 = vpop.f32.mrb[0].mxu0
        %v1697 = vpop.f32.mrb[0].mxu0
        %v1698 = vpop.f32.mrb[0].mxu0
        %1699 = vdwg.mxu0
        %v1700 = vadd.f32 %v1602, %v1695
        %1701 = vrot.lane.b32.xlu0 %v1296, 80
        %v1702 = vpop.permute.xlu0 %1701
        %v1704 = vsel %vm1244, %v1491, 0
        %v1707 = vsel %vm1504, %v1702, 0
        %1709 = vmatprep.subr.bf16.mxu0 0
        %1710 = vmatpush1.bf16.msra.mxu0 %v1707
        %1711 = vmatprep.subr.bf16.mxu0 0
        %1712 = vmatpush1.bf16.msra.mxu0 0
        %1713 = vmatprep.subr.bf16.mxu0 0
        %1714 = vmatpush1.bf16.msra.mxu0 0
        %1715 = vmatprep.subr.bf16.mxu0 0
        %1716 = vmatpush1.bf16.msra.mxu0 0
        %1717 = vmatprep.subr.bf16.mxu0 0
        %1718 = vmatpush1.bf16.msra.mxu0 0
        %1719 = vmatprep.subr.bf16.mxu0 0
        %1720 = vmatpush1.bf16.msra.mxu0 0
        %1721 = vmatprep.subr.bf16.mxu0 0
        %1722 = vmatpush1.bf16.msra.mxu0 0
        %1723 = vmatprep.subr.bf16.mxu0 0
        %1724 = vmatpush1.bf16.msra.mxu0 0
        %1725 = vmatprep.subr.bf16.mxu0 0
        %1726 = vmatpush1.bf16.msra.mxu0 0
        %1727 = vmatprep.subr.bf16.mxu0 0
        %1728 = vmatpush1.bf16.msra.mxu0 0
        %1729 = vmatprep.subr.bf16.mxu0 0
        %1730 = vmatpush1.bf16.msra.mxu0 0
        %1731 = vmatprep.subr.bf16.mxu0 0
        %1732 = vmatpush1.bf16.msra.mxu0 0
        %1733 = vmatprep.subr.bf16.mxu0 0
        %1734 = vmatpush1.bf16.msra.mxu0 0
        %1735 = vmatprep.subr.bf16.mxu0 0
        %1736 = vmatpush1.bf16.msra.mxu0 0
        %1737 = vmatprep.subr.bf16.mxu0 0
        %1738 = vmatpush1.bf16.msra.mxu0 0
        %1739 = vmatprep.subr.bf16.mxu0 0
        %1740 = vmatpush1.bf16.msra.mxu0 0
        %1741 = vmatprep.mubr.bf16.mxu0 0
        %1742 = vmatmul.mubr.bf16.gmra.mrb[0].mxu0 %v1704
        %v1743 = vpop.f32.mrb[0].mxu0
        %v1744 = vadd.f32 0.0, %v1743
        %v1745 = vpop.f32.mrb[0].mxu0
        %v1746 = vpop.f32.mrb[0].mxu0
        %v1747 = vpop.f32.mrb[0].mxu0
        %1748 = vdwg.mxu0
        %v1749 = vpack.c.bf16 %v1744, %v1744
        %s1750 = scalar_lea.vmem [#allocation10], 8
        %v1751 = vld [vmem:[%s1750] sm:$0xf]
        %v1753 = vsel %vm1244, %v1749, 0
        %v1756 = vsel %vm1504, %v1751, 0
        %1758 = vmatprep.subr.bf16.mxu0 0
        %1759 = vmatpush1.bf16.msra.mxu0 %v1756
        %1760 = vmatprep.subr.bf16.mxu0 0
        %1761 = vmatpush1.bf16.msra.mxu0 0
        %1762 = vmatprep.subr.bf16.mxu0 0
        %1763 = vmatpush1.bf16.msra.mxu0 0
        %1764 = vmatprep.subr.bf16.mxu0 0
        %1765 = vmatpush1.bf16.msra.mxu0 0
        %1766 = vmatprep.subr.bf16.mxu0 0
        %1767 = vmatpush1.bf16.msra.mxu0 0
        %1768 = vmatprep.subr.bf16.mxu0 0
        %1769 = vmatpush1.bf16.msra.mxu0 0
        %1770 = vmatprep.subr.bf16.mxu0 0
        %1771 = vmatpush1.bf16.msra.mxu0 0
        %1772 = vmatprep.subr.bf16.mxu0 0
        %1773 = vmatpush1.bf16.msra.mxu0 0
        %1774 = vmatprep.subr.bf16.mxu0 0
        %1775 = vmatpush1.bf16.msra.mxu0 0
        %1776 = vmatprep.subr.bf16.mxu0 0
        %1777 = vmatpush1.bf16.msra.mxu0 0
        %1778 = vmatprep.subr.bf16.mxu0 0
        %1779 = vmatpush1.bf16.msra.mxu0 0
        %1780 = vmatprep.subr.bf16.mxu0 0
        %1781 = vmatpush1.bf16.msra.mxu0 0
        %1782 = vmatprep.subr.bf16.mxu0 0
        %1783 = vmatpush1.bf16.msra.mxu0 0
        %1784 = vmatprep.subr.bf16.mxu0 0
        %1785 = vmatpush1.bf16.msra.mxu0 0
        %1786 = vmatprep.subr.bf16.mxu0 0
        %1787 = vmatpush1.bf16.msra.mxu0 0
        %1788 = vmatprep.subr.bf16.mxu0 0
        %1789 = vmatpush1.bf16.msra.mxu0 0
        %1790 = vmatprep.mubr.bf16.mxu0 0
        %1791 = vmatmul.mubr.bf16.gmra.mrb[0].mxu0 %v1753
        %v1792 = vpop.f32.mrb[0].mxu0
        %v1793 = vadd.f32 0.0, %v1792
        %v1794 = vpop.f32.mrb[0].mxu0
        %v1795 = vpop.f32.mrb[0].mxu0
        %v1796 = vpop.f32.mrb[0].mxu0
        %1797 = vdwg.mxu0
        %v1798 = vadd.f32 %v1700, %v1793
        %1799 = vrot.lane.b32.xlu0 %v1296, 72
        %v1800 = vpop.permute.xlu0 %1799
        %v1802 = vsel %vm1244, %v1492, 0
        %v1805 = vsel %vm1504, %v1800, 0
        %1807 = vmatprep.subr.bf16.mxu0 0
        %1808 = vmatpush1.bf16.msra.mxu0 %v1805
        %1809 = vmatprep.subr.bf16.mxu0 0
        %1810 = vmatpush1.bf16.msra.mxu0 0
        %1811 = vmatprep.subr.bf16.mxu0 0
        %1812 = vmatpush1.bf16.msra.mxu0 0
        %1813 = vmatprep.subr.bf16.mxu0 0
        %1814 = vmatpush1.bf16.msra.mxu0 0
        %1815 = vmatprep.subr.bf16.mxu0 0
        %1816 = vmatpush1.bf16.msra.mxu0 0
        %1817 = vmatprep.subr.bf16.mxu0 0
        %1818 = vmatpush1.bf16.msra.mxu0 0
        %1819 = vmatprep.subr.bf16.mxu0 0
        %1820 = vmatpush1.bf16.msra.mxu0 0
        %1821 = vmatprep.subr.bf16.mxu0 0
        %1822 = vmatpush1.bf16.msra.mxu0 0
        %1823 = vmatprep.subr.bf16.mxu0 0
        %1824 = vmatpush1.bf16.msra.mxu0 0
        %1825 = vmatprep.subr.bf16.mxu0 0
        %1826 = vmatpush1.bf16.msra.mxu0 0
        %1827 = vmatprep.subr.bf16.mxu0 0
        %1828 = vmatpush1.bf16.msra.mxu0 0
        %1829 = vmatprep.subr.bf16.mxu0 0
        %1830 = vmatpush1.bf16.msra.mxu0 0
        %1831 = vmatprep.subr.bf16.mxu0 0
        %1832 = vmatpush1.bf16.msra.mxu0 0
        %1833 = vmatprep.subr.bf16.mxu0 0
        %1834 = vmatpush1.bf16.msra.mxu0 0
        %1835 = vmatprep.subr.bf16.mxu0 0
        %1836 = vmatpush1.bf16.msra.mxu0 0
        %1837 = vmatprep.subr.bf16.mxu0 0
        %1838 = vmatpush1.bf16.msra.mxu0 0
        %1839 = vmatprep.mubr.bf16.mxu0 0
        %1840 = vmatmul.mubr.bf16.gmra.mrb[0].mxu0 %v1802
        %v1841 = vpop.f32.mrb[0].mxu0
        %v1842 = vadd.f32 0.0, %v1841
        %v1843 = vpop.f32.mrb[0].mxu0
        %v1844 = vpop.f32.mrb[0].mxu0
        %v1845 = vpop.f32.mrb[0].mxu0
        %1846 = vdwg.mxu0
        %v1847 = vpack.c.bf16 %v1842, %v1842
        %s1848 = scalar_lea.vmem [#allocation10], 12
        %v1849 = vld [vmem:[%s1848] sm:$0xf]
        %v1851 = vsel %vm1244, %v1847, 0
        %v1854 = vsel %vm1504, %v1849, 0
        %1856 = vmatprep.subr.bf16.mxu0 0
        %1857 = vmatpush1.bf16.msra.mxu0 %v1854
        %1858 = vmatprep.subr.bf16.mxu0 0
        %1859 = vmatpush1.bf16.msra.mxu0 0
        %1860 = vmatprep.subr.bf16.mxu0 0
        %1861 = vmatpush1.bf16.msra.mxu0 0
        %1862 = vmatprep.subr.bf16.mxu0 0
        %1863 = vmatpush1.bf16.msra.mxu0 0
        %1864 = vmatprep.subr.bf16.mxu0 0
        %1865 = vmatpush1.bf16.msra.mxu0 0
        %1866 = vmatprep.subr.bf16.mxu0 0
        %1867 = vmatpush1.bf16.msra.mxu0 0
        %1868 = vmatprep.subr.bf16.mxu0 0
        %1869 = vmatpush1.bf16.msra.mxu0 0
        %1870 = vmatprep.subr.bf16.mxu0 0
        %1871 = vmatpush1.bf16.msra.mxu0 0
        %1872 = vmatprep.subr.bf16.mxu0 0
        %1873 = vmatpush1.bf16.msra.mxu0 0
        %1874 = vmatprep.subr.bf16.mxu0 0
        %1875 = vmatpush1.bf16.msra.mxu0 0
        %1876 = vmatprep.subr.bf16.mxu0 0
        %1877 = vmatpush1.bf16.msra.mxu0 0
        %1878 = vmatprep.subr.bf16.mxu0 0
        %1879 = vmatpush1.bf16.msra.mxu0 0
        %1880 = vmatprep.subr.bf16.mxu0 0
        %1881 = vmatpush1.bf16.msra.mxu0 0
        %1882 = vmatprep.subr.bf16.mxu0 0
        %1883 = vmatpush1.bf16.msra.mxu0 0
        %1884 = vmatprep.subr.bf16.mxu0 0
        %1885 = vmatpush1.bf16.msra.mxu0 0
        %1886 = vmatprep.subr.bf16.mxu0 0
        %1887 = vmatpush1.bf16.msra.mxu0 0
        %1888 = vmatprep.mubr.bf16.mxu0 0
        %1889 = vmatmul.mubr.bf16.gmra.mrb[0].mxu0 %v1851
        %v1890 = vpop.f32.mrb[0].mxu0
        %v1891 = vadd.f32 0.0, %v1890
        %v1892 = vpop.f32.mrb[0].mxu0
        %v1893 = vpop.f32.mrb[0].mxu0
        %v1894 = vpop.f32.mrb[0].mxu0
        %1895 = vdwg.mxu0
        %v1896 = vadd.f32 %v1798, %v1891
        %v1897 = vadd.f32 %v1173, %v1896
        %v1898 = vsel %vm1198, %v1897, 0.0
        %1899 = vadd.xlane.f32.xlu0 %v1898
        %v1900 = vpop.xlane.xlu0 %1899
        %v1901 = vrcp.pop 32.0
        %v1902 = vmul.f32 %v1900, %v1901
        %v1903 = vsub.f32 %v1897, %v1902
        %v1904 = vmul.f32 %v1903, %v1903
        %v1905 = vsel %vm1198, %v1904, 0.0
        %1906 = vadd.xlane.f32.xlu0 %v1905
        %v1907 = vpop.xlane.xlu0 %1906
        %v1908 = vmul.f32 %v1907, %v1901
        %v1909 = vadd.f32 %v1908, 1e-05
        %v1910 = vrsqrt.pop %v1909
        %v1911 = vmul.f32 %v1903, %v1910
        %v1912 = vld [vmem:[%s19] sm:$0x1]
        %v1914 = vlaneseq
        %v1915 = vshrl.u32 %v1914, 7
        %v1916 = vsub.s32 0, %v1915
        %v1917 = vrot.slane %v1912, %v1916
        %v1919 = vmul.f32 %v1911, %v1917
        %v1920 = vld [vmem:[%s20] sm:$0x1]
        %v1922 = vlaneseq
        %v1923 = vshrl.u32 %v1922, 7
        %v1924 = vsub.s32 0, %v1923
        %v1925 = vrot.slane %v1920, %v1924
        %v1927 = vadd.f32 %v1919, %v1925
        %v1928 = vpack.c.bf16 %v1927, %v1927
        %v1929 = vld [vmem:[%s9] sm:$0xf]
        %v1930 = vld [vmem:[%s9 + $0x4] sm:$0xf]
        %v1931 = vld [vmem:[%s9 + $0x8] sm:$0xf]
        %v1932 = vld [vmem:[%s9 + $0xc] sm:$0xf]
        %v1933 = vld [vmem:[#allocation13] sm:$0x1]
        %v1935 = vlaneseq
        %v1936 = vshrl.u32 %v1935, 7
        %v1937 = vsub.s32 0, %v1936
        %v1938 = vrot.slane %v1933, %v1937
        %v1944 = vunpack.c.l.b16 %v1929
        %v1945 = vunpack.c.l.b16 %v1930
        %v1946 = vunpack.c.l.b16 %v1931
        %v1947 = vunpack.c.l.b16 %v1932
        %v1948 = vpack.c.b16 %v1945, %v1944
        %v1949 = vpack.c.b16 %v1947, %v1946
        %v1953 = vsel %vm1198, %v1928, 0
        %1955 = vmatprep.subr.bf16.mxu0 0
        %1956 = vmatpush1.bf16.msra.mxu0 %v1948
        %1957 = vmatprep.subr.bf16.mxu0 0
        %1958 = vmatpush1.bf16.msra.mxu0 %v1949
        %1959 = vmatprep.subr.bf16.mxu0 0
        %1960 = vmatpush1.bf16.msra.mxu0 0
        %1961 = vmatprep.subr.bf16.mxu0 0
        %1962 = vmatpush1.bf16.msra.mxu0 0
        %1963 = vmatprep.subr.bf16.mxu0 0
        %1964 = vmatpush1.bf16.msra.mxu0 0
        %1965 = vmatprep.subr.bf16.mxu0 0
        %1966 = vmatpush1.bf16.msra.mxu0 0
        %1967 = vmatprep.subr.bf16.mxu0 0
        %1968 = vmatpush1.bf16.msra.mxu0 0
        %1969 = vmatprep.subr.bf16.mxu0 0
        %1970 = vmatpush1.bf16.msra.mxu0 0
        %1971 = vmatprep.subr.bf16.mxu0 0
        %1972 = vmatpush1.bf16.msra.mxu0 0
        %1973 = vmatprep.subr.bf16.mxu0 0
        %1974 = vmatpush1.bf16.msra.mxu0 0
        %1975 = vmatprep.subr.bf16.mxu0 0
        %1976 = vmatpush1.bf16.msra.mxu0 0
        %1977 = vmatprep.subr.bf16.mxu0 0
        %1978 = vmatpush1.bf16.msra.mxu0 0
        %1979 = vmatprep.subr.bf16.mxu0 0
        %1980 = vmatpush1.bf16.msra.mxu0 0
        %1981 = vmatprep.subr.bf16.mxu0 0
        %1982 = vmatpush1.bf16.msra.mxu0 0
        %1983 = vmatprep.subr.bf16.mxu0 0
        %1984 = vmatpush1.bf16.msra.mxu0 0
        %1985 = vmatprep.subr.bf16.mxu0 0
        %1986 = vmatpush1.bf16.msra.mxu0 0
        %1987 = vmatprep.mubr.bf16.mxu0 0
        %1988 = vmatmul.mubr.bf16.gmra.mrb[0].mxu0 %v1953
        %v1989 = vpop.f32.mrb[0].mxu0
        %v1990 = vadd.f32 %v1938, %v1989
        %v1991 = vpop.f32.mrb[0].mxu0
        %v1992 = vpop.f32.mrb[0].mxu0
        %v1993 = vpop.f32.mrb[0].mxu0
        %1994 = vdwg.mxu0
        %v1995 = vpack.c.bf16 %v1990, %v1990
        %v1996 = vld [vmem:[#allocation3] sm:$0xf]
        %v1998 = vsel %vm1244, %v1995, 0
        %v2001 = vsel %vm1244, %v1996, 0
        %2003 = vmatprep.subr.bf16.mxu0 0
        %2004 = vmatpush1.bf16.xpose.msra.mxu0 %v2001
        %2005 = vmatprep.subr.bf16.mxu0 0
        %2006 = vmatpush1.bf16.xpose.msra.mxu0 0
        %2007 = vmatprep.subr.bf16.mxu0 0
        %2008 = vmatpush1.bf16.xpose.msra.mxu0 0
        %2009 = vmatprep.subr.bf16.mxu0 0
        %2010 = vmatpush1.bf16.xpose.msra.mxu0 0
        %2011 = vmatprep.subr.bf16.mxu0 0
        %2012 = vmatpush1.bf16.xpose.msra.mxu0 0
        %2013 = vmatprep.subr.bf16.mxu0 0
        %2014 = vmatpush1.bf16.xpose.msra.mxu0 0
        %2015 = vmatprep.subr.bf16.mxu0 0
        %2016 = vmatpush1.bf16.xpose.msra.mxu0 0
        %2017 = vmatprep.subr.bf16.mxu0 0
        %2018 = vmatpush1.bf16.xpose.msra.mxu0 0
        %2019 = vmatprep.subr.bf16.mxu0 0
        %2020 = vmatpush1.bf16.xpose.msra.mxu0 0
        %2021 = vmatprep.subr.bf16.mxu0 0
        %2022 = vmatpush1.bf16.xpose.msra.mxu0 0
        %2023 = vmatprep.subr.bf16.mxu0 0
        %2024 = vmatpush1.bf16.xpose.msra.mxu0 0
        %2025 = vmatprep.subr.bf16.mxu0 0
        %2026 = vmatpush1.bf16.xpose.msra.mxu0 0
        %2027 = vmatprep.subr.bf16.mxu0 0
        %2028 = vmatpush1.bf16.xpose.msra.mxu0 0
        %2029 = vmatprep.subr.bf16.mxu0 0
        %2030 = vmatpush1.bf16.xpose.msra.mxu0 0
        %2031 = vmatprep.subr.bf16.mxu0 0
        %2032 = vmatpush1.bf16.xpose.msra.mxu0 0
        %2033 = vmatprep.subr.bf16.mxu0 0
        %2034 = vmatpush1.bf16.xpose.msra.mxu0 0
        %2035 = vmatprep.mubr.bf16.mxu0 0
        %2036 = vmatmul.mubr.bf16.gmra.mrb[0].mxu0 %v1998
        %v2037 = vpop.f32.mrb[0].mxu0
        %v2038 = vadd.f32 0.0, %v2037
        %v2039 = vpop.f32.mrb[0].mxu0
        %v2040 = vpop.f32.mrb[0].mxu0
        %v2041 = vpop.f32.mrb[0].mxu0
        %2042 = vdwg.mxu0
        %2044 = vrot.lane.b32.xlu0 %v1995, 120
        %v2045 = vpop.permute.xlu0 %2044
        %v2047 = vunpack.c.l.b16 %v1996
        %v2048 = vpack.c.b16 %v2047, %v2047
        %2049 = vrot.lane.b32.xlu0 %v2048, 120
        %v2050 = vpop.permute.xlu0 %2049
        %v2052 = vsel %vm1244, %v2045, 0
        %v2055 = vsel %vm1244, %v2050, 0
        %2057 = vmatprep.subr.bf16.mxu0 0
        %2058 = vmatpush1.bf16.xpose.msra.mxu0 %v2055
        %2059 = vmatprep.subr.bf16.mxu0 0
        %2060 = vmatpush1.bf16.xpose.msra.mxu0 0
        %2061 = vmatprep.subr.bf16.mxu0 0
        %2062 = vmatpush1.bf16.xpose.msra.mxu0 0
        %2063 = vmatprep.subr.bf16.mxu0 0
        %2064 = vmatpush1.bf16.xpose.msra.mxu0 0
        %2065 = vmatprep.subr.bf16.mxu0 0
        %2066 = vmatpush1.bf16.xpose.msra.mxu0 0
        %2067 = vmatprep.subr.bf16.mxu0 0
        %2068 = vmatpush1.bf16.xpose.msra.mxu0 0
        %2069 = vmatprep.subr.bf16.mxu0 0
        %2070 = vmatpush1.bf16.xpose.msra.mxu0 0
        %2071 = vmatprep.subr.bf16.mxu0 0
        %2072 = vmatpush1.bf16.xpose.msra.mxu0 0
        %2073 = vmatprep.subr.bf16.mxu0 0
        %2074 = vmatpush1.bf16.xpose.msra.mxu0 0
        %2075 = vmatprep.subr.bf16.mxu0 0
        %2076 = vmatpush1.bf16.xpose.msra.mxu0 0
        %2077 = vmatprep.subr.bf16.mxu0 0
        %2078 = vmatpush1.bf16.xpose.msra.mxu0 0
        %2079 = vmatprep.subr.bf16.mxu0 0
        %2080 = vmatpush1.bf16.xpose.msra.mxu0 0
        %2081 = vmatprep.subr.bf16.mxu0 0
        %2082 = vmatpush1.bf16.xpose.msra.mxu0 0
        %2083 = vmatprep.subr.bf16.mxu0 0
        %2084 = vmatpush1.bf16.xpose.msra.mxu0 0
        %2085 = vmatprep.subr.bf16.mxu0 0
        %2086 = vmatpush1.bf16.xpose.msra.mxu0 0
        %2087 = vmatprep.subr.bf16.mxu0 0
        %2088 = vmatpush1.bf16.xpose.msra.mxu0 0
        %2089 = vmatprep.mubr.bf16.mxu0 0
        %2090 = vmatmul.mubr.bf16.gmra.mrb[0].mxu0 %v2052
        %v2091 = vpop.f32.mrb[0].mxu0
        %v2092 = vadd.f32 0.0, %v2091
        %v2093 = vpop.f32.mrb[0].mxu0
        %v2094 = vpop.f32.mrb[0].mxu0
        %v2095 = vpop.f32.mrb[0].mxu0
        %2096 = vdwg.mxu0
        %2097 = vrot.lane.b32.xlu0 %v1995, 112
        %v2098 = vpop.permute.xlu0 %2097
        %2099 = vrot.lane.b32.xlu0 %v2048, 112
        %v2100 = vpop.permute.xlu0 %2099
        %v2102 = vsel %vm1244, %v2098, 0
        %v2105 = vsel %vm1244, %v2100, 0
        %2107 = vmatprep.subr.bf16.mxu0 0
        %2108 = vmatpush1.bf16.xpose.msra.mxu0 %v2105
        %2109 = vmatprep.subr.bf16.mxu0 0
        %2110 = vmatpush1.bf16.xpose.msra.mxu0 0
        %2111 = vmatprep.subr.bf16.mxu0 0
        %2112 = vmatpush1.bf16.xpose.msra.mxu0 0
        %2113 = vmatprep.subr.bf16.mxu0 0
        %2114 = vmatpush1.bf16.xpose.msra.mxu0 0
        %2115 = vmatprep.subr.bf16.mxu0 0
        %2116 = vmatpush1.bf16.xpose.msra.mxu0 0
        %2117 = vmatprep.subr.bf16.mxu0 0
        %2118 = vmatpush1.bf16.xpose.msra.mxu0 0
        %2119 = vmatprep.subr.bf16.mxu0 0
        %2120 = vmatpush1.bf16.xpose.msra.mxu0 0
        %2121 = vmatprep.subr.bf16.mxu0 0
        %2122 = vmatpush1.bf16.xpose.msra.mxu0 0
        %2123 = vmatprep.subr.bf16.mxu0 0
        %2124 = vmatpush1.bf16.xpose.msra.mxu0 0
        %2125 = vmatprep.subr.bf16.mxu0 0
        %2126 = vmatpush1.bf16.xpose.msra.mxu0 0
        %2127 = vmatprep.subr.bf16.mxu0 0
        %2128 = vmatpush1.bf16.xpose.msra.mxu0 0
        %2129 = vmatprep.subr.bf16.mxu0 0
        %2130 = vmatpush1.bf16.xpose.msra.mxu0 0
        %2131 = vmatprep.subr.bf16.mxu0 0
        %2132 = vmatpush1.bf16.xpose.msra.mxu0 0
        %2133 = vmatprep.subr.bf16.mxu0 0
        %2134 = vmatpush1.bf16.xpose.msra.mxu0 0
        %2135 = vmatprep.subr.bf16.mxu0 0
        %2136 = vmatpush1.bf16.xpose.msra.mxu0 0
        %2137 = vmatprep.subr.bf16.mxu0 0
        %2138 = vmatpush1.bf16.xpose.msra.mxu0 0
        %2139 = vmatprep.mubr.bf16.mxu0 0
        %2140 = vmatmul.mubr.bf16.gmra.mrb[0].mxu0 %v2102
        %v2141 = vpop.f32.mrb[0].mxu0
        %v2142 = vadd.f32 0.0, %v2141
        %v2143 = vpop.f32.mrb[0].mxu0
        %v2144 = vpop.f32.mrb[0].mxu0
        %v2145 = vpop.f32.mrb[0].mxu0
        %2146 = vdwg.mxu0
        %2147 = vrot.lane.b32.xlu0 %v1995, 104
        %v2148 = vpop.permute.xlu0 %2147
        %2149 = vrot.lane.b32.xlu0 %v2048, 104
        %v2150 = vpop.permute.xlu0 %2149
        %v2152 = vsel %vm1244, %v2148, 0
        %v2155 = vsel %vm1244, %v2150, 0
        %2157 = vmatprep.subr.bf16.mxu0 0
        %2158 = vmatpush1.bf16.xpose.msra.mxu0 %v2155
        %2159 = vmatprep.subr.bf16.mxu0 0
        %2160 = vmatpush1.bf16.xpose.msra.mxu0 0
        %2161 = vmatprep.subr.bf16.mxu0 0
        %2162 = vmatpush1.bf16.xpose.msra.mxu0 0
        %2163 = vmatprep.subr.bf16.mxu0 0
        %2164 = vmatpush1.bf16.xpose.msra.mxu0 0
        %2165 = vmatprep.subr.bf16.mxu0 0
        %2166 = vmatpush1.bf16.xpose.msra.mxu0 0
        %2167 = vmatprep.subr.bf16.mxu0 0
        %2168 = vmatpush1.bf16.xpose.msra.mxu0 0
        %2169 = vmatprep.subr.bf16.mxu0 0
        %2170 = vmatpush1.bf16.xpose.msra.mxu0 0
        %2171 = vmatprep.subr.bf16.mxu0 0
        %2172 = vmatpush1.bf16.xpose.msra.mxu0 0
        %2173 = vmatprep.subr.bf16.mxu0 0
        %2174 = vmatpush1.bf16.xpose.msra.mxu0 0
        %2175 = vmatprep.subr.bf16.mxu0 0
        %2176 = vmatpush1.bf16.xpose.msra.mxu0 0
        %2177 = vmatprep.subr.bf16.mxu0 0
        %2178 = vmatpush1.bf16.xpose.msra.mxu0 0
        %2179 = vmatprep.subr.bf16.mxu0 0
        %2180 = vmatpush1.bf16.xpose.msra.mxu0 0
        %2181 = vmatprep.subr.bf16.mxu0 0
        %2182 = vmatpush1.bf16.xpose.msra.mxu0 0
        %2183 = vmatprep.subr.bf16.mxu0 0
        %2184 = vmatpush1.bf16.xpose.msra.mxu0 0
        %2185 = vmatprep.subr.bf16.mxu0 0
        %2186 = vmatpush1.bf16.xpose.msra.mxu0 0
        %2187 = vmatprep.subr.bf16.mxu0 0
        %2188 = vmatpush1.bf16.xpose.msra.mxu0 0
        %2189 = vmatprep.mubr.bf16.mxu0 0
        %2190 = vmatmul.mubr.bf16.gmra.mrb[0].mxu0 %v2152
        %v2191 = vpop.f32.mrb[0].mxu0
        %v2192 = vadd.f32 0.0, %v2191
        %v2193 = vpop.f32.mrb[0].mxu0
        %v2194 = vpop.f32.mrb[0].mxu0
        %v2195 = vpop.f32.mrb[0].mxu0
        %2196 = vdwg.mxu0
        %v2197 = vsel %vm1244, %v2038, -inf
        %2198 = vmax.xlane.f32.xlu0 %v2197
        %v2199 = vpop.xlane.xlu0 %2198
        %v2200 = vsel %vm1244, %v2092, -inf
        %2201 = vmax.xlane.f32.xlu0 %v2200
        %v2202 = vpop.xlane.xlu0 %2201
        %v2203 = vsel %vm1244, %v2142, -inf
        %2204 = vmax.xlane.f32.xlu0 %v2203
        %v2205 = vpop.xlane.xlu0 %2204
        %v2206 = vsel %vm1244, %v2192, -inf
        %2207 = vmax.xlane.f32.xlu0 %v2206
        %v2208 = vpop.xlane.xlu0 %2207
        %v2209 = vsub.f32 %v2038, %v2199
        %v2210 = vsub.f32 %v2092, %v2202
        %v2211 = vsub.f32 %v2142, %v2205
        %v2212 = vsub.f32 %v2192, %v2208
        %v2213 = vmul.f32 %v2209, 1.442695
        %v2214 = vpow.pop %v2213
        %v2215 = vmul.f32 %v2210, 1.442695
        %v2216 = vpow.pop %v2215
        %v2217 = vmul.f32 %v2211, 1.442695
        %v2218 = vpow.pop %v2217
        %v2219 = vmul.f32 %v2212, 1.442695
        %v2220 = vpow.pop %v2219
        %v2221 = vsel %vm1244, %v2214, 0.0
        %2222 = vadd.xlane.f32.xlu0 %v2221
        %v2223 = vpop.xlane.xlu0 %2222
        %v2224 = vsel %vm1244, %v2216, 0.0
        %2225 = vadd.xlane.f32.xlu0 %v2224
        %v2226 = vpop.xlane.xlu0 %2225
        %v2227 = vsel %vm1244, %v2218, 0.0
        %2228 = vadd.xlane.f32.xlu0 %v2227
        %v2229 = vpop.xlane.xlu0 %2228
        %v2230 = vsel %vm1244, %v2220, 0.0
        %2231 = vadd.xlane.f32.xlu0 %v2230
        %v2232 = vpop.xlane.xlu0 %2231
        %v2233 = vrcp.pop %v2223
        %v2234 = vrcp.pop %v2226
        %v2235 = vrcp.pop %v2229
        %v2236 = vrcp.pop %v2232
        %v2237 = vmul.f32 %v2214, %v2233
        %v2238 = vmul.f32 %v2216, %v2234
        %v2239 = vmul.f32 %v2218, %v2235
        %v2240 = vmul.f32 %v2220, %v2236
        %v2241 = vpack.c.bf16 %v2237, %v2237
        %v2242 = vpack.c.bf16 %v2238, %v2238
        %v2243 = vpack.c.bf16 %v2239, %v2239
        %v2244 = vpack.c.bf16 %v2240, %v2240
        %2245 = vst.msk [vmem:[%s1020] sm:$0xf] %vm1493, %v2241
        %2246 = vst.msk [vmem:[%s1020 + $0x4] sm:$0xf] %vm1493, %v2242
        %2247 = vst.msk [vmem:[%s1020 + $0x8] sm:$0xf] %vm1493, %v2243
        %2248 = vst.msk [vmem:[%s1020 + $0xc] sm:$0xf] %vm1493, %v2244
        %v2249 = vld [vmem:[%s14] sm:$0x1]
        %2250 = vrot.lane.b32.xlu0 %v2048, 96
        %v2251 = vpop.permute.xlu0 %2250
        %v2253 = vsel %vm1244, %v2241, 0
        %v2256 = vsel %vm1504, %v2251, 0
        %2258 = vmatprep.subr.bf16.mxu0 0
        %2259 = vmatpush1.bf16.msra.mxu0 %v2256
        %2260 = vmatprep.subr.bf16.mxu0 0
        %2261 = vmatpush1.bf16.msra.mxu0 0
        %2262 = vmatprep.subr.bf16.mxu0 0
        %2263 = vmatpush1.bf16.msra.mxu0 0
        %2264 = vmatprep.subr.bf16.mxu0 0
        %2265 = vmatpush1.bf16.msra.mxu0 0
        %2266 = vmatprep.subr.bf16.mxu0 0
        %2267 = vmatpush1.bf16.msra.mxu0 0
        %2268 = vmatprep.subr.bf16.mxu0 0
        %2269 = vmatpush1.bf16.msra.mxu0 0
        %2270 = vmatprep.subr.bf16.mxu0 0
        %2271 = vmatpush1.bf16.msra.mxu0 0
        %2272 = vmatprep.subr.bf16.mxu0 0
        %2273 = vmatpush1.bf16.msra.mxu0 0
        %2274 = vmatprep.subr.bf16.mxu0 0
        %2275 = vmatpush1.bf16.msra.mxu0 0
        %2276 = vmatprep.subr.bf16.mxu0 0
        %2277 = vmatpush1.bf16.msra.mxu0 0
        %2278 = vmatprep.subr.bf16.mxu0 0
        %2279 = vmatpush1.bf16.msra.mxu0 0
        %2280 = vmatprep.subr.bf16.mxu0 0
        %2281 = vmatpush1.bf16.msra.mxu0 0
        %2282 = vmatprep.subr.bf16.mxu0 0
        %2283 = vmatpush1.bf16.msra.mxu0 0
        %2284 = vmatprep.subr.bf16.mxu0 0
        %2285 = vmatpush1.bf16.msra.mxu0 0
        %2286 = vmatprep.subr.bf16.mxu0 0
        %2287 = vmatpush1.bf16.msra.mxu0 0
        %2288 = vmatprep.subr.bf16.mxu0 0
        %2289 = vmatpush1.bf16.msra.mxu0 0
        %2290 = vmatprep.mubr.bf16.mxu0 0
        %2291 = vmatmul.mubr.bf16.gmra.mrb[0].mxu0 %v2253
        %v2292 = vpop.f32.mrb[0].mxu0
        %v2293 = vadd.f32 0.0, %v2292
        %v2294 = vpop.f32.mrb[0].mxu0
        %v2295 = vpop.f32.mrb[0].mxu0
        %v2296 = vpop.f32.mrb[0].mxu0
        %2297 = vdwg.mxu0
        %v2298 = vpack.c.bf16 %v2293, %v2293
        %v2299 = vld [vmem:[%s13] sm:$0xf]
        %v2301 = vsel %vm1244, %v2298, 0
        %v2304 = vsel %vm1504, %v2299, 0
        %2306 = vmatprep.subr.bf16.mxu0 0
        %2307 = vmatpush1.bf16.msra.mxu0 %v2304
        %2308 = vmatprep.subr.bf16.mxu0 0
        %2309 = vmatpush1.bf16.msra.mxu0 0
        %2310 = vmatprep.subr.bf16.mxu0 0
        %2311 = vmatpush1.bf16.msra.mxu0 0
        %2312 = vmatprep.subr.bf16.mxu0 0
        %2313 = vmatpush1.bf16.msra.mxu0 0
        %2314 = vmatprep.subr.bf16.mxu0 0
        %2315 = vmatpush1.bf16.msra.mxu0 0
        %2316 = vmatprep.subr.bf16.mxu0 0
        %2317 = vmatpush1.bf16.msra.mxu0 0
        %2318 = vmatprep.subr.bf16.mxu0 0
        %2319 = vmatpush1.bf16.msra.mxu0 0
        %2320 = vmatprep.subr.bf16.mxu0 0
        %2321 = vmatpush1.bf16.msra.mxu0 0
        %2322 = vmatprep.subr.bf16.mxu0 0
        %2323 = vmatpush1.bf16.msra.mxu0 0
        %2324 = vmatprep.subr.bf16.mxu0 0
        %2325 = vmatpush1.bf16.msra.mxu0 0
        %2326 = vmatprep.subr.bf16.mxu0 0
        %2327 = vmatpush1.bf16.msra.mxu0 0
        %2328 = vmatprep.subr.bf16.mxu0 0
        %2329 = vmatpush1.bf16.msra.mxu0 0
        %2330 = vmatprep.subr.bf16.mxu0 0
        %2331 = vmatpush1.bf16.msra.mxu0 0
        %2332 = vmatprep.subr.bf16.mxu0 0
        %2333 = vmatpush1.bf16.msra.mxu0 0
        %2334 = vmatprep.subr.bf16.mxu0 0
        %2335 = vmatpush1.bf16.msra.mxu0 0
        %2336 = vmatprep.subr.bf16.mxu0 0
        %2337 = vmatpush1.bf16.msra.mxu0 0
        %2338 = vmatprep.mubr.bf16.mxu0 0
        %2339 = vmatmul.mubr.bf16.gmra.mrb[0].mxu0 %v2301
        %v2340 = vpop.f32.mrb[0].mxu0
        %v2341 = vadd.f32 0.0, %v2340
        %v2342 = vpop.f32.mrb[0].mxu0
        %v2343 = vpop.f32.mrb[0].mxu0
        %v2344 = vpop.f32.mrb[0].mxu0
        %2345 = vdwg.mxu0
        %v2347 = vlaneseq
        %v2348 = vshrl.u32 %v2347, 7
        %v2349 = vsub.s32 0, %v2348
        %v2350 = vrot.slane %v2249, %v2349
        %v2352 = vadd.f32 %v2350, %v2341
        %2353 = vrot.lane.b32.xlu0 %v2048, 88
        %v2354 = vpop.permute.xlu0 %2353
        %v2356 = vsel %vm1244, %v2242, 0
        %v2359 = vsel %vm1504, %v2354, 0
        %2361 = vmatprep.subr.bf16.mxu0 0
        %2362 = vmatpush1.bf16.msra.mxu0 %v2359
        %2363 = vmatprep.subr.bf16.mxu0 0
        %2364 = vmatpush1.bf16.msra.mxu0 0
        %2365 = vmatprep.subr.bf16.mxu0 0
        %2366 = vmatpush1.bf16.msra.mxu0 0
        %2367 = vmatprep.subr.bf16.mxu0 0
        %2368 = vmatpush1.bf16.msra.mxu0 0
        %2369 = vmatprep.subr.bf16.mxu0 0
        %2370 = vmatpush1.bf16.msra.mxu0 0
        %2371 = vmatprep.subr.bf16.mxu0 0
        %2372 = vmatpush1.bf16.msra.mxu0 0
        %2373 = vmatprep.subr.bf16.mxu0 0
        %2374 = vmatpush1.bf16.msra.mxu0 0
        %2375 = vmatprep.subr.bf16.mxu0 0
        %2376 = vmatpush1.bf16.msra.mxu0 0
        %2377 = vmatprep.subr.bf16.mxu0 0
        %2378 = vmatpush1.bf16.msra.mxu0 0
        %2379 = vmatprep.subr.bf16.mxu0 0
        %2380 = vmatpush1.bf16.msra.mxu0 0
        %2381 = vmatprep.subr.bf16.mxu0 0
        %2382 = vmatpush1.bf16.msra.mxu0 0
        %2383 = vmatprep.subr.bf16.mxu0 0
        %2384 = vmatpush1.bf16.msra.mxu0 0
        %2385 = vmatprep.subr.bf16.mxu0 0
        %2386 = vmatpush1.bf16.msra.mxu0 0
        %2387 = vmatprep.subr.bf16.mxu0 0
        %2388 = vmatpush1.bf16.msra.mxu0 0
        %2389 = vmatprep.subr.bf16.mxu0 0
        %2390 = vmatpush1.bf16.msra.mxu0 0
        %2391 = vmatprep.subr.bf16.mxu0 0
        %2392 = vmatpush1.bf16.msra.mxu0 0
        %2393 = vmatprep.mubr.bf16.mxu0 0
        %2394 = vmatmul.mubr.bf16.gmra.mrb[0].mxu0 %v2356
        %v2395 = vpop.f32.mrb[0].mxu0
        %v2396 = vadd.f32 0.0, %v2395
        %v2397 = vpop.f32.mrb[0].mxu0
        %v2398 = vpop.f32.mrb[0].mxu0
        %v2399 = vpop.f32.mrb[0].mxu0
        %2400 = vdwg.mxu0
        %v2401 = vpack.c.bf16 %v2396, %v2396
        %s2402 = scalar_lea.vmem %s13, 4
        %v2403 = vld [vmem:[%s2402] sm:$0xf]
        %v2405 = vsel %vm1244, %v2401, 0
        %v2408 = vsel %vm1504, %v2403, 0
        %2410 = vmatprep.subr.bf16.mxu0 0
        %2411 = vmatpush1.bf16.msra.mxu0 %v2408
        %2412 = vmatprep.subr.bf16.mxu0 0
        %2413 = vmatpush1.bf16.msra.mxu0 0
        %2414 = vmatprep.subr.bf16.mxu0 0
        %2415 = vmatpush1.bf16.msra.mxu0 0
        %2416 = vmatprep.subr.bf16.mxu0 0
        %2417 = vmatpush1.bf16.msra.mxu0 0
        %2418 = vmatprep.subr.bf16.mxu0 0
        %2419 = vmatpush1.bf16.msra.mxu0 0
        %2420 = vmatprep.subr.bf16.mxu0 0
        %2421 = vmatpush1.bf16.msra.mxu0 0
        %2422 = vmatprep.subr.bf16.mxu0 0
        %2423 = vmatpush1.bf16.msra.mxu0 0
        %2424 = vmatprep.subr.bf16.mxu0 0
        %2425 = vmatpush1.bf16.msra.mxu0 0
        %2426 = vmatprep.subr.bf16.mxu0 0
        %2427 = vmatpush1.bf16.msra.mxu0 0
        %2428 = vmatprep.subr.bf16.mxu0 0
        %2429 = vmatpush1.bf16.msra.mxu0 0
        %2430 = vmatprep.subr.bf16.mxu0 0
        %2431 = vmatpush1.bf16.msra.mxu0 0
        %2432 = vmatprep.subr.bf16.mxu0 0
        %2433 = vmatpush1.bf16.msra.mxu0 0
        %2434 = vmatprep.subr.bf16.mxu0 0
        %2435 = vmatpush1.bf16.msra.mxu0 0
        %2436 = vmatprep.subr.bf16.mxu0 0
        %2437 = vmatpush1.bf16.msra.mxu0 0
        %2438 = vmatprep.subr.bf16.mxu0 0
        %2439 = vmatpush1.bf16.msra.mxu0 0
        %2440 = vmatprep.subr.bf16.mxu0 0
        %2441 = vmatpush1.bf16.msra.mxu0 0
        %2442 = vmatprep.mubr.bf16.mxu0 0
        %2443 = vmatmul.mubr.bf16.gmra.mrb[0].mxu0 %v2405
        %v2444 = vpop.f32.mrb[0].mxu0
        %v2445 = vadd.f32 0.0, %v2444
        %v2446 = vpop.f32.mrb[0].mxu0
        %v2447 = vpop.f32.mrb[0].mxu0
        %v2448 = vpop.f32.mrb[0].mxu0
        %2449 = vdwg.mxu0
        %v2450 = vadd.f32 %v2352, %v2445
        %2451 = vrot.lane.b32.xlu0 %v2048, 80
        %v2452 = vpop.permute.xlu0 %2451
        %v2454 = vsel %vm1244, %v2243, 0
        %v2457 = vsel %vm1504, %v2452, 0
        %2459 = vmatprep.subr.bf16.mxu0 0
        %2460 = vmatpush1.bf16.msra.mxu0 %v2457
        %2461 = vmatprep.subr.bf16.mxu0 0
        %2462 = vmatpush1.bf16.msra.mxu0 0
        %2463 = vmatprep.subr.bf16.mxu0 0
        %2464 = vmatpush1.bf16.msra.mxu0 0
        %2465 = vmatprep.subr.bf16.mxu0 0
        %2466 = vmatpush1.bf16.msra.mxu0 0
        %2467 = vmatprep.subr.bf16.mxu0 0
        %2468 = vmatpush1.bf16.msra.mxu0 0
        %2469 = vmatprep.subr.bf16.mxu0 0
        %2470 = vmatpush1.bf16.msra.mxu0 0
        %2471 = vmatprep.subr.bf16.mxu0 0
        %2472 = vmatpush1.bf16.msra.mxu0 0
        %2473 = vmatprep.subr.bf16.mxu0 0
        %2474 = vmatpush1.bf16.msra.mxu0 0
        %2475 = vmatprep.subr.bf16.mxu0 0
        %2476 = vmatpush1.bf16.msra.mxu0 0
        %2477 = vmatprep.subr.bf16.mxu0 0
        %2478 = vmatpush1.bf16.msra.mxu0 0
        %2479 = vmatprep.subr.bf16.mxu0 0
        %2480 = vmatpush1.bf16.msra.mxu0 0
        %2481 = vmatprep.subr.bf16.mxu0 0
        %2482 = vmatpush1.bf16.msra.mxu0 0
        %2483 = vmatprep.subr.bf16.mxu0 0
        %2484 = vmatpush1.bf16.msra.mxu0 0
        %2485 = vmatprep.subr.bf16.mxu0 0
        %2486 = vmatpush1.bf16.msra.mxu0 0
        %2487 = vmatprep.subr.bf16.mxu0 0
        %2488 = vmatpush1.bf16.msra.mxu0 0
        %2489 = vmatprep.subr.bf16.mxu0 0
        %2490 = vmatpush1.bf16.msra.mxu0 0
        %2491 = vmatprep.mubr.bf16.mxu0 0
        %2492 = vmatmul.mubr.bf16.gmra.mrb[0].mxu0 %v2454
        %v2493 = vpop.f32.mrb[0].mxu0
        %v2494 = vadd.f32 0.0, %v2493
        %v2495 = vpop.f32.mrb[0].mxu0
        %v2496 = vpop.f32.mrb[0].mxu0
        %v2497 = vpop.f32.mrb[0].mxu0
        %2498 = vdwg.mxu0
        %v2499 = vpack.c.bf16 %v2494, %v2494
        %s2500 = scalar_lea.vmem %s13, 8
        %v2501 = vld [vmem:[%s2500] sm:$0xf]
        %v2503 = vsel %vm1244, %v2499, 0
        %v2506 = vsel %vm1504, %v2501, 0
        %2508 = vmatprep.subr.bf16.mxu0 0
        %2509 = vmatpush1.bf16.msra.mxu0 %v2506
        %2510 = vmatprep.subr.bf16.mxu0 0
        %2511 = vmatpush1.bf16.msra.mxu0 0
        %2512 = vmatprep.subr.bf16.mxu0 0
        %2513 = vmatpush1.bf16.msra.mxu0 0
        %2514 = vmatprep.subr.bf16.mxu0 0
        %2515 = vmatpush1.bf16.msra.mxu0 0
        %2516 = vmatprep.subr.bf16.mxu0 0
        %2517 = vmatpush1.bf16.msra.mxu0 0
        %2518 = vmatprep.subr.bf16.mxu0 0
        %2519 = vmatpush1.bf16.msra.mxu0 0
        %2520 = vmatprep.subr.bf16.mxu0 0
        %2521 = vmatpush1.bf16.msra.mxu0 0
        %2522 = vmatprep.subr.bf16.mxu0 0
        %2523 = vmatpush1.bf16.msra.mxu0 0
        %2524 = vmatprep.subr.bf16.mxu0 0
        %2525 = vmatpush1.bf16.msra.mxu0 0
        %2526 = vmatprep.subr.bf16.mxu0 0
        %2527 = vmatpush1.bf16.msra.mxu0 0
        %2528 = vmatprep.subr.bf16.mxu0 0
        %2529 = vmatpush1.bf16.msra.mxu0 0
        %2530 = vmatprep.subr.bf16.mxu0 0
        %2531 = vmatpush1.bf16.msra.mxu0 0
        %2532 = vmatprep.subr.bf16.mxu0 0
        %2533 = vmatpush1.bf16.msra.mxu0 0
        %2534 = vmatprep.subr.bf16.mxu0 0
        %2535 = vmatpush1.bf16.msra.mxu0 0
        %2536 = vmatprep.subr.bf16.mxu0 0
        %2537 = vmatpush1.bf16.msra.mxu0 0
        %2538 = vmatprep.subr.bf16.mxu0 0
        %2539 = vmatpush1.bf16.msra.mxu0 0
        %2540 = vmatprep.mubr.bf16.mxu0 0
        %2541 = vmatmul.mubr.bf16.gmra.mrb[0].mxu0 %v2503
        %v2542 = vpop.f32.mrb[0].mxu0
        %v2543 = vadd.f32 0.0, %v2542
        %v2544 = vpop.f32.mrb[0].mxu0
        %v2545 = vpop.f32.mrb[0].mxu0
        %v2546 = vpop.f32.mrb[0].mxu0
        %2547 = vdwg.mxu0
        %v2548 = vadd.f32 %v2450, %v2543
        %2549 = vrot.lane.b32.xlu0 %v2048, 72
        %v2550 = vpop.permute.xlu0 %2549
        %v2552 = vsel %vm1244, %v2244, 0
        %v2555 = vsel %vm1504, %v2550, 0
        %2557 = vmatprep.subr.bf16.mxu0 0
        %2558 = vmatpush1.bf16.msra.mxu0 %v2555
        %2559 = vmatprep.subr.bf16.mxu0 0
        %2560 = vmatpush1.bf16.msra.mxu0 0
        %2561 = vmatprep.subr.bf16.mxu0 0
        %2562 = vmatpush1.bf16.msra.mxu0 0
        %2563 = vmatprep.subr.bf16.mxu0 0
        %2564 = vmatpush1.bf16.msra.mxu0 0
        %2565 = vmatprep.subr.bf16.mxu0 0
        %2566 = vmatpush1.bf16.msra.mxu0 0
        %2567 = vmatprep.subr.bf16.mxu0 0
        %2568 = vmatpush1.bf16.msra.mxu0 0
        %2569 = vmatprep.subr.bf16.mxu0 0
        %2570 = vmatpush1.bf16.msra.mxu0 0
        %2571 = vmatprep.subr.bf16.mxu0 0
        %2572 = vmatpush1.bf16.msra.mxu0 0
        %2573 = vmatprep.subr.bf16.mxu0 0
        %2574 = vmatpush1.bf16.msra.mxu0 0
        %2575 = vmatprep.subr.bf16.mxu0 0
        %2576 = vmatpush1.bf16.msra.mxu0 0
        %2577 = vmatprep.subr.bf16.mxu0 0
        %2578 = vmatpush1.bf16.msra.mxu0 0
        %2579 = vmatprep.subr.bf16.mxu0 0
        %2580 = vmatpush1.bf16.msra.mxu0 0
        %2581 = vmatprep.subr.bf16.mxu0 0
        %2582 = vmatpush1.bf16.msra.mxu0 0
        %2583 = vmatprep.subr.bf16.mxu0 0
        %2584 = vmatpush1.bf16.msra.mxu0 0
        %2585 = vmatprep.subr.bf16.mxu0 0
        %2586 = vmatpush1.bf16.msra.mxu0 0
        %2587 = vmatprep.subr.bf16.mxu0 0
        %2588 = vmatpush1.bf16.msra.mxu0 0
        %2589 = vmatprep.mubr.bf16.mxu0 0
        %2590 = vmatmul.mubr.bf16.gmra.mrb[0].mxu0 %v2552
        %v2591 = vpop.f32.mrb[0].mxu0
        %v2592 = vadd.f32 0.0, %v2591
        %v2593 = vpop.f32.mrb[0].mxu0
        %v2594 = vpop.f32.mrb[0].mxu0
        %v2595 = vpop.f32.mrb[0].mxu0
        %2596 = vdwg.mxu0
        %v2597 = vpack.c.bf16 %v2592, %v2592
        %s2598 = scalar_lea.vmem %s13, 12
        %v2599 = vld [vmem:[%s2598] sm:$0xf]
        %v2601 = vsel %vm1244, %v2597, 0
        %v2604 = vsel %vm1504, %v2599, 0
        %2606 = vmatprep.subr.bf16.mxu0 0
        %2607 = vmatpush1.bf16.msra.mxu0 %v2604
        %2608 = vmatprep.subr.bf16.mxu0 0
        %2609 = vmatpush1.bf16.msra.mxu0 0
        %2610 = vmatprep.subr.bf16.mxu0 0
        %2611 = vmatpush1.bf16.msra.mxu0 0
        %2612 = vmatprep.subr.bf16.mxu0 0
        %2613 = vmatpush1.bf16.msra.mxu0 0
        %2614 = vmatprep.subr.bf16.mxu0 0
        %2615 = vmatpush1.bf16.msra.mxu0 0
        %2616 = vmatprep.subr.bf16.mxu0 0
        %2617 = vmatpush1.bf16.msra.mxu0 0
        %2618 = vmatprep.subr.bf16.mxu0 0
        %2619 = vmatpush1.bf16.msra.mxu0 0
        %2620 = vmatprep.subr.bf16.mxu0 0
        %2621 = vmatpush1.bf16.msra.mxu0 0
        %2622 = vmatprep.subr.bf16.mxu0 0
        %2623 = vmatpush1.bf16.msra.mxu0 0
        %2624 = vmatprep.subr.bf16.mxu0 0
        %2625 = vmatpush1.bf16.msra.mxu0 0
        %2626 = vmatprep.subr.bf16.mxu0 0
        %2627 = vmatpush1.bf16.msra.mxu0 0
        %2628 = vmatprep.subr.bf16.mxu0 0
        %2629 = vmatpush1.bf16.msra.mxu0 0
        %2630 = vmatprep.subr.bf16.mxu0 0
        %2631 = vmatpush1.bf16.msra.mxu0 0
        %2632 = vmatprep.subr.bf16.mxu0 0
        %2633 = vmatpush1.bf16.msra.mxu0 0
        %2634 = vmatprep.subr.bf16.mxu0 0
        %2635 = vmatpush1.bf16.msra.mxu0 0
        %2636 = vmatprep.subr.bf16.mxu0 0
        %2637 = vmatpush1.bf16.msra.mxu0 0
        %2638 = vmatprep.mubr.bf16.mxu0 0
        %2639 = vmatmul.mubr.bf16.gmra.mrb[0].mxu0 %v2601
        %v2640 = vpop.f32.mrb[0].mxu0
        %v2641 = vadd.f32 0.0, %v2640
        %v2642 = vpop.f32.mrb[0].mxu0
        %v2643 = vpop.f32.mrb[0].mxu0
        %v2644 = vpop.f32.mrb[0].mxu0
        %2645 = vdwg.mxu0
        %v2646 = vadd.f32 %v2548, %v2641
        %v2647 = vadd.f32 %v1927, %v2646
        %v2648 = vsel %vm1198, %v2647, 0.0
        %2649 = vadd.xlane.f32.xlu0 %v2648
        %v2650 = vpop.xlane.xlu0 %2649
        %v2651 = vmul.f32 %v2650, %v1901
        %v2652 = vsub.f32 %v2647, %v2651
        %v2653 = vmul.f32 %v2652, %v2652
        %v2654 = vsel %vm1198, %v2653, 0.0
        %2655 = vadd.xlane.f32.xlu0 %v2654
        %v2656 = vpop.xlane.xlu0 %2655
        %v2657 = vmul.f32 %v2656, %v1901
        %v2658 = vadd.f32 %v2657, 1e-05
        %v2659 = vrsqrt.pop %v2658
        %v2660 = vmul.f32 %v2652, %v2659
        %v2661 = vld [vmem:[%s21] sm:$0x1]
        %v2663 = vlaneseq
        %v2664 = vshrl.u32 %v2663, 7
        %v2665 = vsub.s32 0, %v2664
        %v2666 = vrot.slane %v2661, %v2665
        %v2668 = vmul.f32 %v2660, %v2666
        %v2669 = vld [vmem:[%s22] sm:$0x1]
        %v2671 = vlaneseq
        %v2672 = vshrl.u32 %v2671, 7
        %v2673 = vsub.s32 0, %v2672
        %v2674 = vrot.slane %v2669, %v2673
        %v2676 = vadd.f32 %v2668, %v2674
        %v2677 = vpack.c.bf16 %v2676, %v2676
        %v2678 = vld [vmem:[#allocation18] sm:$0xf]
        %v2679 = vld [vmem:[#allocation18 + $0x4] sm:$0xf]
        %v2680 = vld [vmem:[#allocation18 + $0x8] sm:$0xf]
        %v2681 = vld [vmem:[#allocation18 + $0xc] sm:$0xf]
        %v2682 = vld [vmem:[%s16] sm:$0x1]
        %v2684 = vlaneseq
        %v2685 = vshrl.u32 %v2684, 7
        %v2686 = vsub.s32 0, %v2685
        %v2687 = vrot.slane %v2682, %v2686
        %v2693 = vunpack.c.l.b16 %v2678
        %v2694 = vunpack.c.l.b16 %v2679
        %v2695 = vunpack.c.l.b16 %v2680
        %v2696 = vunpack.c.l.b16 %v2681
        %v2697 = vpack.c.b16 %v2694, %v2693
        %v2698 = vpack.c.b16 %v2696, %v2695
        %v2702 = vsel %vm1198, %v2677, 0
        %2704 = vmatprep.subr.bf16.mxu0 0
        %2705 = vmatpush1.bf16.msra.mxu0 %v2697
        %2706 = vmatprep.subr.bf16.mxu0 0
        %2707 = vmatpush1.bf16.msra.mxu0 %v2698
        %2708 = vmatprep.subr.bf16.mxu0 0
        %2709 = vmatpush1.bf16.msra.mxu0 0
        %2710 = vmatprep.subr.bf16.mxu0 0
        %2711 = vmatpush1.bf16.msra.mxu0 0
        %2712 = vmatprep.subr.bf16.mxu0 0
        %2713 = vmatpush1.bf16.msra.mxu0 0
        %2714 = vmatprep.subr.bf16.mxu0 0
        %2715 = vmatpush1.bf16.msra.mxu0 0
        %2716 = vmatprep.subr.bf16.mxu0 0
        %2717 = vmatpush1.bf16.msra.mxu0 0
        %2718 = vmatprep.subr.bf16.mxu0 0
        %2719 = vmatpush1.bf16.msra.mxu0 0
        %2720 = vmatprep.subr.bf16.mxu0 0
        %2721 = vmatpush1.bf16.msra.mxu0 0
        %2722 = vmatprep.subr.bf16.mxu0 0
        %2723 = vmatpush1.bf16.msra.mxu0 0
        %2724 = vmatprep.subr.bf16.mxu0 0
        %2725 = vmatpush1.bf16.msra.mxu0 0
        %2726 = vmatprep.subr.bf16.mxu0 0
        %2727 = vmatpush1.bf16.msra.mxu0 0
        %2728 = vmatprep.subr.bf16.mxu0 0
        %2729 = vmatpush1.bf16.msra.mxu0 0
        %2730 = vmatprep.subr.bf16.mxu0 0
        %2731 = vmatpush1.bf16.msra.mxu0 0
        %2732 = vmatprep.subr.bf16.mxu0 0
        %2733 = vmatpush1.bf16.msra.mxu0 0
        %2734 = vmatprep.subr.bf16.mxu0 0
        %2735 = vmatpush1.bf16.msra.mxu0 0
        %2736 = vmatprep.mubr.bf16.mxu0 0
        %2737 = vmatmul.mubr.bf16.gmra.mrb[0].mxu0 %v2702
        %v2738 = vpop.f32.mrb[0].mxu0
        %v2739 = vadd.f32 %v2687, %v2738
        %v2740 = vpop.f32.mrb[0].mxu0
        %v2741 = vpop.f32.mrb[0].mxu0
        %v2742 = vpop.f32.mrb[0].mxu0
        %2743 = vdwg.mxu0
        %v2744 = vmax.f32 %v2739, 0.0
        %v2745 = vpack.c.bf16 %v2744, %v2744
        %v2746 = vld [vmem:[%s17] sm:$0xf]
        %v2747 = vld [vmem:[%s17 + $0x4] sm:$0xf]
        %v2748 = vld [vmem:[%s17 + $0x8] sm:$0xf]
        %v2749 = vld [vmem:[%s17 + $0xc] sm:$0xf]
        %v2750 = vld [vmem:[%s17 + $0x10] sm:$0xf]
        %v2751 = vld [vmem:[%s17 + $0x14] sm:$0xf]
        %v2752 = vld [vmem:[%s17 + $0x18] sm:$0xf]
        %v2753 = vld [vmem:[%s17 + $0x1c] sm:$0xf]
        %v2754 = vld [vmem:[%s18] sm:$0x1]
        %v2756 = vlaneseq
        %v2757 = vshrl.u32 %v2756, 7
        %v2758 = vsub.s32 0, %v2757
        %v2759 = vrot.slane %v2754, %v2758
        %v2769 = vunpack.c.l.b16 %v2746
        %v2770 = vunpack.c.l.b16 %v2747
        %v2771 = vunpack.c.l.b16 %v2748
        %v2772 = vunpack.c.l.b16 %v2749
        %v2773 = vunpack.c.l.b16 %v2750
        %v2774 = vunpack.c.l.b16 %v2751
        %v2775 = vunpack.c.l.b16 %v2752
        %v2776 = vunpack.c.l.b16 %v2753
        %v2777 = vpack.c.b16 %v2770, %v2769
        %v2778 = vpack.c.b16 %v2772, %v2771
        %v2779 = vpack.c.b16 %v2774, %v2773
        %v2780 = vpack.c.b16 %v2776, %v2775
        %vm2785 = vcmask 523264
        %v2787 = vsel %vm2785, %v2745, 0
        %2789 = vmatprep.subr.bf16.mxu0 0
        %2790 = vmatpush1.bf16.msra.mxu0 %v2777
        %2791 = vmatprep.subr.bf16.mxu0 0
        %2792 = vmatpush1.bf16.msra.mxu0 %v2778
        %2793 = vmatprep.subr.bf16.mxu0 0
        %2794 = vmatpush1.bf16.msra.mxu0 %v2779
        %2795 = vmatprep.subr.bf16.mxu0 0
        %2796 = vmatpush1.bf16.msra.mxu0 %v2780
        %2797 = vmatprep.subr.bf16.mxu0 0
        %2798 = vmatpush1.bf16.msra.mxu0 0
        %2799 = vmatprep.subr.bf16.mxu0 0
        %2800 = vmatpush1.bf16.msra.mxu0 0
        %2801 = vmatprep.subr.bf16.mxu0 0
        %2802 = vmatpush1.bf16.msra.mxu0 0
        %2803 = vmatprep.subr.bf16.mxu0 0
        %2804 = vmatpush1.bf16.msra.mxu0 0
        %2805 = vmatprep.subr.bf16.mxu0 0
        %2806 = vmatpush1.bf16.msra.mxu0 0
        %2807 = vmatprep.subr.bf16.mxu0 0
        %2808 = vmatpush1.bf16.msra.mxu0 0
        %2809 = vmatprep.subr.bf16.mxu0 0
        %2810 = vmatpush1.bf16.msra.mxu0 0
        %2811 = vmatprep.subr.bf16.mxu0 0
        %2812 = vmatpush1.bf16.msra.mxu0 0
        %2813 = vmatprep.subr.bf16.mxu0 0
        %2814 = vmatpush1.bf16.msra.mxu0 0
        %2815 = vmatprep.subr.bf16.mxu0 0
        %2816 = vmatpush1.bf16.msra.mxu0 0
        %2817 = vmatprep.subr.bf16.mxu0 0
        %2818 = vmatpush1.bf16.msra.mxu0 0
        %2819 = vmatprep.subr.bf16.mxu0 0
        %2820 = vmatpush1.bf16.msra.mxu0 0
        %2821 = vmatprep.mubr.bf16.mxu0 0
        %2822 = vmatmul.mubr.bf16.gmra.mrb[0].mxu0 %v2787
        %v2823 = vpop.f32.mrb[0].mxu0
        %v2824 = vadd.f32 %v2759, %v2823
        %v2825 = vpop.f32.mrb[0].mxu0
        %v2826 = vpop.f32.mrb[0].mxu0
        %v2827 = vpop.f32.mrb[0].mxu0
        %2828 = vdwg.mxu0
        %v2829 = vadd.f32 %v2676, %v2824
        %v2830 = vsel %vm1198, %v2829, 0.0
        %2831 = vadd.xlane.f32.xlu0 %v2830
        %v2832 = vpop.xlane.xlu0 %2831
        %v2833 = vmul.f32 %v2832, %v1901
        %v2834 = vsub.f32 %v2829, %v2833
        %v2835 = vmul.f32 %v2834, %v2834
        %v2836 = vsel %vm1198, %v2835, 0.0
        %2837 = vadd.xlane.f32.xlu0 %v2836
        %v2838 = vpop.xlane.xlu0 %2837
        %v2839 = vmul.f32 %v2838, %v1901
        %v2840 = vadd.f32 %v2839, 1e-05
        %v2841 = vrsqrt.pop %v2840
        %v2842 = vmul.f32 %v2834, %v2841
        %v2843 = vld [vmem:[%s23] sm:$0x1]
        %v2845 = vlaneseq
        %v2846 = vshrl.u32 %v2845, 7
        %v2847 = vsub.s32 0, %v2846
        %v2848 = vrot.slane %v2843, %v2847
        %v2850 = vmul.f32 %v2842, %v2848
        %v2851 = vld [vmem:[%s24] sm:$0x1]
        %v2853 = vlaneseq
        %v2854 = vshrl.u32 %v2853, 7
        %v2855 = vsub.s32 0, %v2854
        %v2856 = vrot.slane %v2851, %v2855
        %v2858 = vadd.f32 %v2850, %v2856
        %2859 = vst.msk [vmem:[%s1006] sm:$0xff] %vm1198, %v2858
        %s2860 = sand.u32 %s618, 1
        %s2861 = scalar_lea.sflag [#allocation6], %s2860
        %s2862 = sand.u32 %s618, 1
        %s2863 = smul.addr %s2862, 8
        %s2864 = scalar_lea.vmem [#allocation19], %s2863
        %s2865 = sand.u32 %s54, 1
        %s2866 = scalar_lea.sflag [#allocation21], %s2865
        %s2867 = sand.u32 %s646, 1
        %s2868 = smul.addr %s2867, 16
        %s2869 = scalar_lea.vmem [#allocation20], %s2868
        %s2870 = sand.u32 %s54, 1
        %s2871 = scalar_lea.sflag [#allocation21], %s2870
        %s2872 = sand.u32 %s674, 1
        %s2873 = smul.addr %s2872, 16
        %s2874 = scalar_lea.vmem [#allocation22], %s2873
        // Predicated region
        $region161: #{tpu_custom_call.1} parent=119 // pred_check
          %p2875 = pneg %p628
        $region162: #{tpu_custom_call.1} parent=119 // pred_check_branch
          %2877 = sbr.rel (%p2875) target = $region164
        $region163: #{tpu_custom_call.1} parent=119 // pred_region
          %s2879 = ssub.s32 128, 128
          %2880 = vsyncadd %s2861, %s2879
          %s2881 = sadd.s32 %s59, %s58
          %s2882 = smul.addr %s2881, 128
          %s2883 = scalar_lea.hbm %s25, %s2882
          %s2885 = sshll.u32 %s2864, 4
          %s2886 = int_to_ptr.vmem [resolvable:$true] %s2885
          %2888 = dma.vmem_to_hbm [thread:$0]  %s2886, 128, %s2883, %s2861
        $region164: #{tpu_custom_call.1} parent=119 // pred_fallthru
          _
        // Predicated region
        $region165: #{tpu_custom_call.1} parent=119 // pred_check
          %p2889 = pneg %p656
        $region166: #{tpu_custom_call.1} parent=119 // pred_check_branch
          %2891 = sbr.rel (%p2889) target = $region168
        $region167: #{tpu_custom_call.1} parent=119 // pred_region
          %s2893 = ssub.s32 256, 256
          %2894 = vsyncadd %s2866, %s2893
          %s2895 = smul.addr %s58, 4
          %s2896 = sadd.s32 %s59, %s2895
          %s2897 = smul.addr %s2896, 64
          %s2898 = scalar_lea.hbm %s26, %s2897
          %s2899 = sshll.u32 %s2869, 4
          %s2900 = int_to_ptr.vmem [resolvable:$true] %s2899
          %2905 = dma.vmem_to_hbm [thread:$0]  %s2900, 256, %s2898, %s2866, 64, 64, 4
        $region168: #{tpu_custom_call.1} parent=119 // pred_fallthru
          _
        // Predicated region
        $region169: #{tpu_custom_call.1} parent=119 // pred_check
          %p2906 = pneg %p684
        $region170: #{tpu_custom_call.1} parent=119 // pred_check_branch
          %2908 = sbr.rel (%p2906) target = $region172
        $region171: #{tpu_custom_call.1} parent=119 // pred_region
          %s2910 = ssub.s32 256, 256
          %2911 = vsyncadd %s2871, %s2910
          %s2912 = smul.addr %s58, 4
          %s2913 = sadd.s32 %s59, %s2912
          %s2914 = smul.addr %s2913, 64
          %s2915 = scalar_lea.hbm %s27, %s2914
          %s2916 = sshll.u32 %s2874, 4
          %s2917 = int_to_ptr.vmem [resolvable:$true] %s2916
          %2922 = dma.vmem_to_hbm [thread:$0]  %s2917, 256, %s2915, %s2871, 64, 64, 4
        $region172: #{tpu_custom_call.1} parent=119 // pred_fallthru
          _
      $region120: #{tpu_custom_call.1} parent=5 // pred_fallthru
        _
      %p2923 = scmp.le.s32.totalorder 2, %s49
      // Predicated region
      $region173: #{tpu_custom_call.1} parent=5 // pred_check
        %p2924 = pneg %p2923
      $region174: #{tpu_custom_call.1} parent=5 // pred_check_branch
        %2926 = sbr.rel (%p2924) target = $region176
      $region175: #{tpu_custom_call.1} parent=5 // pred_region
        %s2927 = ssub.s32 %s49, 2
        // Predicated region
        $region177: #{tpu_custom_call.1} parent=175 // pred_check
          %p2928 = pneg %p634
        $region178: #{tpu_custom_call.1} parent=175 // pred_check_branch
          %2930 = sbr.rel (%p2928) target = $region180
        $region179: #{tpu_custom_call.1} parent=175 // pred_region
          %s2931 = sand.u32 %s619, 1
          %s2932 = scalar_lea.sflag [#allocation6], %s2931
          %s2933 = sand.u32 %s619, 1
          %s2934 = smul.addr %s2933, 8
          %s2935 = scalar_lea.vmem [#allocation19], %s2934
          %2936 = dma.done %s2932, 128
        $region180: #{tpu_custom_call.1} parent=175 // pred_fallthru
          _
        // Predicated region
        $region181: #{tpu_custom_call.1} parent=175 // pred_check
          %p2937 = pneg %p662
        $region182: #{tpu_custom_call.1} parent=175 // pred_check_branch
          %2939 = sbr.rel (%p2937) target = $region184
        $region183: #{tpu_custom_call.1} parent=175 // pred_region
          %s2940 = sand.u32 %s55, 1
          %s2941 = scalar_lea.sflag [#allocation21], %s2940
          %s2942 = sand.u32 %s647, 1
          %s2943 = smul.addr %s2942, 16
          %s2944 = scalar_lea.vmem [#allocation20], %s2943
          %2945 = dma.done %s2941, 256
        $region184: #{tpu_custom_call.1} parent=175 // pred_fallthru
          _
        // Predicated region
        $region185: #{tpu_custom_call.1} parent=175 // pred_check
          %p2946 = pneg %p690
        $region186: #{tpu_custom_call.1} parent=175 // pred_check_branch
          %2948 = sbr.rel (%p2946) target = $region188
        $region187: #{tpu_custom_call.1} parent=175 // pred_region
          %s2949 = sand.u32 %s55, 1
          %s2950 = scalar_lea.sflag [#allocation21], %s2949
          %s2951 = sand.u32 %s675, 1
          %s2952 = smul.addr %s2951, 16
          %s2953 = scalar_lea.vmem [#allocation22], %s2952
          %2954 = dma.done %s2950, 256
        $region188: #{tpu_custom_call.1} parent=175 // pred_fallthru
          _
      $region176: #{tpu_custom_call.1} parent=5 // pred_fallthru
        _
    $region6: #{tpu_custom_call.1} parent=1 // loop_footer
      %s53 = sadd.s32 1, %s49
    $region7: #{tpu_custom_call.1} parent=1 // loop_footer_branch
      %48 = sbr.rel target = $region3
    $region8: #{tpu_custom_call.1} parent=1 // loop_exit
      _
    %2955 = vsyncpa [#allocation5], 1
    %s2956 = scalar_lea.sflag [#allocation5], 1
    %2957 = vsyncpa %s2956, 1
    %2958 = vsyncpa [#allocation8], 1
    %s2959 = scalar_lea.sflag [#allocation8], 1
    %2960 = vsyncpa %s2959, 1
    %2961 = vsyncpa [#allocation11], 1
    %2962 = vsyncpa [#allocation14], 1
    %2963 = vsyncpa [#allocation17], 1
    %2964 = vsyncpa [#allocation6], 1
    %s2965 = scalar_lea.sflag [#allocation6], 1
    %2966 = vsyncpa %s2965, 1
    %2967 = vsyncpa [#allocation21], 1
    %s2968 = scalar_lea.sflag [#allocation21], 1
    %2969 = vsyncpa %s2968, 1

</llo_original>
